<compile_context>
chip_gen: v7x
topology: tpu7x:2x2x1
jax: 0.10.0
libtpu: 0.0.40
codegen_flags: <defaults>
</compile_context>

<pallas_src>
import functools

import jax
import jax.numpy as jnp
from jax.experimental import pallas as pl
from jax.experimental.pallas import tpu as pltpu

QINT8_MIN, QINT8_MAX = -128.0, 127.0      # weight / output dtype (torch.qint8)
QUINT8_MIN, QUINT8_MAX = 0.0, 255.0       # activation dtype (torch.quint8)
_EPS = 1e-8                               # guard for constant tensors (scale=0)


# --------------------------- Pallas kernel ----------------------------------

def _qconv_kernel(q_ref, x_ref, w_ref, o_ref, xc_ref, panel_ref, *,
                  kh, kw, sh, sw, ho, wo, cin, tn):
    """One (image, Cout-tile) grid step of the quantized conv.

    q_ref     : SMEM (3,) f32  [inv_act_scale, act_zero_point, weight_scale]
    x_ref     : VMEM (1, Hp, Wp, Cin) f32   zero-padded NHWC activations
    w_ref     : VMEM (KH*KW*Cin, Coutp) bf16 centered weights (whole slab, resident)
    o_ref     : VMEM (1, Ho*Wo, TN) int8    flat lane-dense qint8 output tile
    xc_ref    : VMEM (Hp, Wp, Cin) bf16     centered quantized acts   (scratch)
    panel_ref : VMEM (Ho*Wo, KH*KW*Cin) bf16 folded-tap matmul panel  (scratch)
    """
    c = pl.program_id(1)

    # ---- once per image (c == 0 is the first Cout tile of each image) ----
    # Fused quantize + center of the activations, then fold the KH*KW taps into
    # a single (Ho*Wo, KH*KW*Cin) LHS panel resident in VMEM.
    @pl.when(c == 0)
    def _build_panel():
        inv_s = q_ref[0]
        zp = q_ref[1]
        xq = jnp.clip(jnp.round(x_ref[0] * inv_s + zp), QUINT8_MIN, QUINT8_MAX)
        xc_ref[...] = (xq - zp).astype(jnp.bfloat16)   # exact ints in [-255, 255]

        parts = []
        for i in range(kh):
            for j in range(kw):
                if sh == 1 and sw == 1:
                    win = xc_ref[i:i + ho, j:j + wo, :]
                else:
                    # TODO(synk): phase-deinterleave W for stride > 1 instead of
                    # strided sublane reads.
                    win = xc_ref[pl.ds(i, ho, sh), pl.ds(j, wo, sw), :]
                parts.append(win.reshape(ho * wo, cin))
        panel_ref[...] = jnp.concatenate(parts, axis=-1)

    # ---- one MXU matmul per (image, Cout tile): K = KH*KW*Cin ----
    # The f32 result is value-carried (no VMEM accumulator round trips).
    col0 = pl.multiple_of(c * tn, 128)                 # lane-aligned Cout tile
    w_tile = w_ref[:, pl.ds(col0, tn)]
    acc = jnp.dot(panel_ref[...], w_tile, preferred_element_type=jnp.float32)

    # Real conv value = act_scale * w_scale * acc.  Requantizing with
    # (scale=act_scale, zero_point=act_offset) cancels act_scale:
    #   q_out = clip(round(w_scale * acc + zp), -128, 127)
    q = jnp.clip(jnp.round(acc * q_ref[2] + q_ref[1]), QINT8_MIN, QINT8_MAX)
    o_ref[0] = q.astype(jnp.int8)


# ----------------------------- wrappers --------------------------------------

def quantize_weight_centered(w):
    """get_tensor_assym_scale_offset + torch.quantize_per_tensor on the weight.
    Returns the centered integer representation (wq - w_offset) as exact small
    integers stored in bf16, plus the per-tensor weight scale."""
    d_min, d_max = jnp.min(w), jnp.max(w)
    scale = jnp.maximum((d_max - d_min) / (QINT8_MAX - QINT8_MIN), _EPS)
    offset = jnp.clip(jnp.round(QINT8_MIN - d_min / scale), QINT8_MIN, QINT8_MAX)
    wq = jnp.clip(jnp.round(w / scale + offset), QINT8_MIN, QINT8_MAX)
    return (wq - offset).astype(jnp.bfloat16), scale.astype(jnp.float32)


def qconv2d_forward(x, w_centered, w_scale, stride=(1, 1), padding=(1, 1), tn=256):
    """Forward of QConv2d.

    x          : (N, C_in, H, W)  float32 activations (NCHW, like PyTorch)
    w_centered : (C_out, C_in, KH, KW) bf16 centered qint8 weights (wq - w_off)
    w_scale    : () f32 per-tensor weight scale
    Returns (out_q_int8 NCHW, act_scale, act_zero_point) — the qint8 integer
    representation of the quantized output, as qF.conv2d would produce.
    """
    n, cin, h, w = x.shape
    cout, cin_w, kh, kw = w_centered.shape
    assert cin == cin_w
    sh, sw = stride
    ph, pw = padding
    ho = (h + 2 * ph - kh) // sh + 1
    wo = (w + 2 * pw - kw) // sw + 1
    hp, wp = h + 2 * ph, w + 2 * pw
    kdim = kh * kw * cin

    # Cout tile: lane-dense; 256 fills the v6e/v7x 256-wide MXU, capped to the
    # 128-rounded Cout so tiny layers don't double the padding waste.
    coutp128 = max(pl.cdiv(cout, 128), 1) * 128
    tn = min(tn, coutp128)
    coutp = max(pl.cdiv(cout, tn), 1) * tn

    # ---- activation observer on this batch (XLA reduction) ----
    d_min, d_max = jnp.min(x), jnp.max(x)
    act_scale = jnp.maximum((d_max - d_min) / (QUINT8_MAX - QUINT8_MIN), _EPS)
    act_offset = jnp.clip(jnp.round(QUINT8_MIN - d_min / act_scale),
                          QUINT8_MIN, QUINT8_MAX)      # integer zero point
    inv_act_scale = 1.0 / act_scale

    # NHWC + spatial zero pad only; quantize/center is fused into the kernel
    # prologue.  Real 0.0 quantizes exactly to the zero point -> centered 0, so
    # padding before quantization is equivalent to padding the centered tensor.
    x_pad = jnp.pad(jnp.transpose(x, (0, 2, 3, 1)).astype(jnp.float32),
                    ((0, 0), (ph, ph), (pw, pw), (0, 0)))

    # Weights: OIHW -> (KH*KW*Cin, Coutp), centered, Cout zero-padded lane-dense.
    # Row order (i*kw + j)*cin + ci matches the kernel's panel column order.
    wk = jnp.transpose(w_centered, (2, 3, 1, 0)).reshape(kdim, cout)
    wk = jnp.pad(wk, ((0, 0), (0, coutp - cout))).astype(jnp.bfloat16)

    qparams = jnp.stack([inv_act_scale, act_offset, w_scale]).astype(jnp.float32)

    kernel = functools.partial(_qconv_kernel, kh=kh, kw=kw, sh=sh, sw=sw,
                               ho=ho, wo=wo, cin=cin, tn=tn)

    # TODO(synk): torch's qF.conv2d consumes an already-quantized quint8 tensor
    # and a packed qint8 weight; here calibration + quantization are folded into
    # this forward and the quantized arithmetic is simulated with exact
    # integer-centered bf16 values.
    out = pl.pallas_call(
        kernel,
        out_shape=jax.ShapeDtypeStruct((n, ho * wo, coutp), jnp.int8),
        grid=(n, coutp // tn),
        in_specs=[
            pl.BlockSpec(memory_space=pltpu.MemorySpace.SMEM),            # scalars
            pl.BlockSpec((1, hp, wp, cin), lambda b, c: (b, 0, 0, 0)),    # image
            pl.BlockSpec((kdim, coutp), lambda b, c: (0, 0)),             # weights
        ],
        out_specs=pl.BlockSpec((1, ho * wo, tn), lambda b, c: (b, 0, c)),
        scratch_shapes=[pltpu.VMEM((hp, wp, cin), jnp.bfloat16),          # xc
                        pltpu.VMEM((ho * wo, kdim), jnp.bfloat16)],       # panel
        compiler_params=pltpu.CompilerParams(
            # c must be "arbitrary": the panel is built at c == 0 per image.
            dimension_semantics=("parallel", "arbitrary"),
            # 40 MiB leaves headroom on v7x's 64 MiB VMEM; ample for these tiles
            # on v5e/v6e's 128 MiB.
            vmem_limit_bytes=40 * 1024 * 1024),
    )(qparams, x_pad, wk)

    out = out[:, :, :cout].reshape(n, ho, wo, cout)
    return jnp.transpose(out, (0, 3, 1, 2)), act_scale, act_offset   # NCHW int8


def _reference_forward(x, w_centered, w_scale, stride, padding):
    """Pure-JAX reference with identical integer-centered quantized semantics."""
    d_min, d_max = jnp.min(x), jnp.max(x)
    act_scale = jnp.maximum((d_max - d_min) / (QUINT8_MAX - QUINT8_MIN), _EPS)
    act_offset = jnp.clip(jnp.round(QUINT8_MIN - d_min / act_scale),
                          QUINT8_MIN, QUINT8_MAX)
    inv_s = 1.0 / act_scale
    x_nhwc = jnp.transpose(x, (0, 2, 3, 1)).astype(jnp.float32)
    xc = jnp.clip(jnp.round(x_nhwc * inv_s + act_offset),
                  QUINT8_MIN, QUINT8_MAX) - act_offset
    w_hwio = jnp.transpose(w_centered.astype(jnp.float32), (2, 3, 1, 0))
    acc = jax.lax.conv_general_dilated(
        xc, w_hwio, window_strides=stride,
        padding=((padding[0], padding[0]), (padding[1], padding[1])),
        dimension_numbers=("NHWC", "HWIO", "NHWC"))
    q = jnp.clip(jnp.round(acc * w_scale + act_offset), QINT8_MIN, QINT8_MAX)
    return jnp.transpose(q, (0, 3, 1, 2)).astype(jnp.int8)


if __name__ == "__main__":
    key = jax.random.PRNGKey(0)
    kx, kw_ = jax.random.split(key)

    # small shapes consistent with the module's forward
    N, C_IN, H, W = 2, 4, 16, 16
    C_OUT, KH, KW = 8, 3, 3
    stride, padding = (1, 1), (1, 1)

    x = jax.random.normal(kx, (N, C_IN, H, W), jnp.float32)
    conv_weight = jax.random.normal(kw_, (C_OUT, C_IN, KH, KW), jnp.float32) * 0.1

    # __init__: quantize the Conv2d weight per-tensor (asymmetric, qint8)
    w_c, w_scale = quantize_weight_centered(conv_weight)

    fwd = jax.jit(qconv2d_forward, static_argnames=("stride", "padding", "tn"))
    out_q, act_scale, act_zp = fwd(x, w_c, w_scale, stride=stride, padding=padding)
    jax.block_until_ready(out_q)

    assert out_q.shape == (N, C_OUT, H, W) and out_q.dtype == jnp.int8

    ref = _reference_forward(x, w_c, w_scale, stride, padding)
    max_err = int(jnp.max(jnp.abs(out_q.astype(jnp.int32) - ref.astype(jnp.int32))))
    assert max_err <= 1, f"mismatch vs reference: max |diff| = {max_err}"

    print("KERNEL_OK")
</pallas_src>

<mosaic_0001>
module attributes {stable_mosaic.version = 11 : i64} {
  func.func @_qconv_kernel(%arg0: i32, %arg1: i32, %arg2: memref<3xf32, #tpu.memory_space<smem>>, %arg3: memref<1x18x18x4xf32, #tpu.memory_space<vmem>>, %arg4: memref<36x128xbf16, #tpu.memory_space<vmem>>, %arg5: memref<1x256x128xi8, #tpu.memory_space<vmem>>, %arg6: memref<18x18x4xbf16, #tpu.memory_space<vmem>>, %arg7: memref<256x36xbf16, #tpu.memory_space<vmem>>) attributes {dimension_semantics = [#tpu.dimension_semantics<parallel>, #tpu.dimension_semantics<arbitrary>], iteration_bounds = array<i64: 2, 1>, scalar_prefetch = 0 : i64, scratch_operands = 2 : i64, tpu.core_type = #tpu.core_type<tc>, window_params = [{transform_indices = @transform_0, window_bounds = array<i64: 3>}, {transform_indices = @transform_1, window_bounds = array<i64: 1, 18, 18, 4>}, {pipeline_mode = #tpu.pipeline_mode<synchronous>, transform_indices = @transform_2, window_bounds = array<i64: 36, 128>}, {transform_indices = @transform_3, window_bounds = array<i64: 1, 256, 128>}]} {
    %c0_i32 = arith.constant 0 : i32
    %0 = arith.cmpi eq, %arg1, %c0_i32 : i32
    %1 = arith.extui %0 : i1 to i32
    %c0_i32_0 = arith.constant 0 : i32
    %2 = arith.cmpi ne, %1, %c0_i32_0 : i32
    scf.if %2 {
      %c0_8 = arith.constant 0 : index
      %24 = memref.load %arg2[%c0_8] : memref<3xf32, #tpu.memory_space<smem>>
      %c1_9 = arith.constant 1 : index
      %25 = memref.load %arg2[%c1_9] : memref<3xf32, #tpu.memory_space<smem>>
      %c0_10 = arith.constant 0 : index
      %c0_11 = arith.constant 0 : index
      %c0_12 = arith.constant 0 : index
      %c0_13 = arith.constant 0 : index
      %26 = vector.load %arg3[%c0_10, %c0_11, %c0_12, %c0_13] : memref<1x18x18x4xf32, #tpu.memory_space<vmem>>, vector<1x18x18x4xf32>
      %27 = vector.shape_cast %26 : vector<1x18x18x4xf32> to vector<18x18x4xf32>
      %28 = vector.broadcast %24 : f32 to vector<18x18x4xf32>
      %29 = arith.mulf %27, %28 : vector<18x18x4xf32>
      %30 = vector.broadcast %25 : f32 to vector<18x18x4xf32>
      %31 = arith.addf %29, %30 : vector<18x18x4xf32>
      %32 = math.roundeven %31 : vector<18x18x4xf32>
      %cst_14 = arith.constant 0.000000e+00 : f32
      %cst_15 = arith.constant 2.550000e+02 : f32
      %33 = vector.broadcast %cst_14 : f32 to vector<18x18x4xf32>
      %34 = arith.maximumf %33, %32 : vector<18x18x4xf32>
      %35 = vector.broadcast %cst_15 : f32 to vector<18x18x4xf32>
      %36 = arith.minimumf %35, %34 : vector<18x18x4xf32>
      %37 = vector.broadcast %25 : f32 to vector<18x18x4xf32>
      %38 = arith.subf %36, %37 : vector<18x18x4xf32>
      %39 = arith.truncf %38 : vector<18x18x4xf32> to vector<18x18x4xbf16>
      %c0_16 = arith.constant 0 : index
      %c0_17 = arith.constant 0 : index
      %c0_18 = arith.constant 0 : index
      %40 = vector.load %arg6[%c0_16, %c0_17, %c0_18] : memref<18x18x4xbf16, #tpu.memory_space<vmem>>, vector<18x18x4xbf16>
      tpu.vector_store %arg6[%c0_16, %c0_17, %c0_18], %39 {strides = array<i32>} : memref<18x18x4xbf16, #tpu.memory_space<vmem>>, vector<18x18x4xbf16>,
      %c0_19 = arith.constant 0 : index
      %c0_20 = arith.constant 0 : index
      %c0_21 = arith.constant 0 : index
      %41 = vector.load %arg6[%c0_19, %c0_20, %c0_21] : memref<18x18x4xbf16, #tpu.memory_space<vmem>>, vector<16x16x4xbf16>
      %42 = vector.shape_cast %41 : vector<16x16x4xbf16> to vector<256x4xbf16>
      %c0_22 = arith.constant 0 : index
      %c1_23 = arith.constant 1 : index
      %c0_24 = arith.constant 0 : index
      %43 = vector.load %arg6[%c0_22, %c1_23, %c0_24] : memref<18x18x4xbf16, #tpu.memory_space<vmem>>, vector<16x16x4xbf16>
      %44 = vector.shape_cast %43 : vector<16x16x4xbf16> to vector<256x4xbf16>
      %c0_25 = arith.constant 0 : index
      %c2_26 = arith.constant 2 : index
      %c0_27 = arith.constant 0 : index
      %45 = vector.load %arg6[%c0_25, %c2_26, %c0_27] : memref<18x18x4xbf16, #tpu.memory_space<vmem>>, vector<16x16x4xbf16>
      %46 = vector.shape_cast %45 : vector<16x16x4xbf16> to vector<256x4xbf16>
      %c1_28 = arith.constant 1 : index
      %c0_29 = arith.constant 0 : index
      %c0_30 = arith.constant 0 : index
      %47 = vector.load %arg6[%c1_28, %c0_29, %c0_30] : memref<18x18x4xbf16, #tpu.memory_space<vmem>>, vector<16x16x4xbf16>
      %48 = vector.shape_cast %47 : vector<16x16x4xbf16> to vector<256x4xbf16>
      %c1_31 = arith.constant 1 : index
      %c1_32 = arith.constant 1 : index
      %c0_33 = arith.constant 0 : index
      %49 = vector.load %arg6[%c1_31, %c1_32, %c0_33] : memref<18x18x4xbf16, #tpu.memory_space<vmem>>, vector<16x16x4xbf16>
      %50 = vector.shape_cast %49 : vector<16x16x4xbf16> to vector<256x4xbf16>
      %c1_34 = arith.constant 1 : index
      %c2_35 = arith.constant 2 : index
      %c0_36 = arith.constant 0 : index
      %51 = vector.load %arg6[%c1_34, %c2_35, %c0_36] : memref<18x18x4xbf16, #tpu.memory_space<vmem>>, vector<16x16x4xbf16>
      %52 = vector.shape_cast %51 : vector<16x16x4xbf16> to vector<256x4xbf16>
      %c2_37 = arith.constant 2 : index
      %c0_38 = arith.constant 0 : index
      %c0_39 = arith.constant 0 : index
      %53 = vector.load %arg6[%c2_37, %c0_38, %c0_39] : memref<18x18x4xbf16, #tpu.memory_space<vmem>>, vector<16x16x4xbf16>
      %54 = vector.shape_cast %53 : vector<16x16x4xbf16> to vector<256x4xbf16>
      %c2_40 = arith.constant 2 : index
      %c1_41 = arith.constant 1 : index
      %c0_42 = arith.constant 0 : index
      %55 = vector.load %arg6[%c2_40, %c1_41, %c0_42] : memref<18x18x4xbf16, #tpu.memory_space<vmem>>, vector<16x16x4xbf16>
      %56 = vector.shape_cast %55 : vector<16x16x4xbf16> to vector<256x4xbf16>
      %c2_43 = arith.constant 2 : index
      %c2_44 = arith.constant 2 : index
      %c0_45 = arith.constant 0 : index
      %57 = vector.load %arg6[%c2_43, %c2_44, %c0_45] : memref<18x18x4xbf16, #tpu.memory_space<vmem>>, vector<16x16x4xbf16>
      %58 = vector.shape_cast %57 : vector<16x16x4xbf16> to vector<256x4xbf16>
      %59 = tpu.concatenate %42, %44, %46, %48, %50, %52, %54, %56, %58 in 1 : vector<256x4xbf16>, vector<256x4xbf16>, vector<256x4xbf16>, vector<256x4xbf16>, vector<256x4xbf16>, vector<256x4xbf16>, vector<256x4xbf16>, vector<256x4xbf16>, vector<256x4xbf16> -> vector<256x36xbf16>
      %c0_46 = arith.constant 0 : index
      %c0_47 = arith.constant 0 : index
      %60 = vector.load %arg7[%c0_46, %c0_47] : memref<256x36xbf16, #tpu.memory_space<vmem>>, vector<256x36xbf16>
      tpu.vector_store %arg7[%c0_46, %c0_47], %59 {strides = array<i32>} : memref<256x36xbf16, #tpu.memory_space<vmem>>, vector<256x36xbf16>,
    } else {
    }
    %c128_i32 = arith.constant 128 : i32
    %3 = arith.muli %arg1, %c128_i32 : i32
    %4 = tpu.assume_multiple %3, 128 : i32
    %c0 = arith.constant 0 : index
    %5 = arith.index_cast %4 : i32 to index
    %6 = vector.load %arg4[%c0, %5] : memref<36x128xbf16, #tpu.memory_space<vmem>>, vector<36x128xbf16>
    %c0_1 = arith.constant 0 : index
    %c0_2 = arith.constant 0 : index
    %7 = vector.load %arg7[%c0_1, %c0_2] : memref<256x36xbf16, #tpu.memory_space<vmem>>, vector<256x36xbf16>
    %cst = arith.constant dense<0.000000e+00> : vector<256x128xf32>
    %8 = tpu.matmul %7, %6, %cst {dimension_numbers = #tpu.dot_dimension_numbers<[1], [0], [0], [1], [0, 0, 1, 1], [], []>} : vector<256x36xbf16>, vector<36x128xbf16>, vector<256x128xf32> -> vector<256x128xf32>
    %c2 = arith.constant 2 : index
    %9 = memref.load %arg2[%c2] : memref<3xf32, #tpu.memory_space<smem>>
    %10 = vector.broadcast %9 : f32 to vector<256x128xf32>
    %11 = arith.mulf %8, %10 : vector<256x128xf32>
    %c1 = arith.constant 1 : index
    %12 = memref.load %arg2[%c1] : memref<3xf32, #tpu.memory_space<smem>>
    %13 = vector.broadcast %12 : f32 to vector<256x128xf32>
    %14 = arith.addf %11, %13 : vector<256x128xf32>
    %15 = math.roundeven %14 : vector<256x128xf32>
    %cst_3 = arith.constant -1.280000e+02 : f32
    %cst_4 = arith.constant 1.270000e+02 : f32
    %16 = vector.broadcast %cst_3 : f32 to vector<256x128xf32>
    %17 = arith.maximumf %16, %15 : vector<256x128xf32>
    %18 = vector.broadcast %cst_4 : f32 to vector<256x128xf32>
    %19 = arith.minimumf %18, %17 : vector<256x128xf32>
    %20 = arith.fptosi %19 : vector<256x128xf32> to vector<256x128xi8>
    %c0_5 = arith.constant 0 : index
    %c0_6 = arith.constant 0 : index
    %c0_7 = arith.constant 0 : index
    %21 = vector.load %arg5[%c0_5, %c0_6, %c0_7] : memref<1x256x128xi8, #tpu.memory_space<vmem>>, vector<1x256x128xi8>
    %22 = vector.shape_cast %21 : vector<1x256x128xi8> to vector<256x128xi8>
    %23 = vector.shape_cast %20 : vector<256x128xi8> to vector<1x256x128xi8>
    tpu.vector_store %arg5[%c0_5, %c0_6, %c0_7], %23 {strides = array<i32>} : memref<1x256x128xi8, #tpu.memory_space<vmem>>, vector<1x256x128xi8>,
    return
  }
  func.func @transform_0(%arg0: i32, %arg1: i32) -> i32 {
    %c0_i32 = arith.constant 0 : i32
    %c0_i32_0 = arith.constant 0 : i32
    return %c0_i32 : i32
  }
  func.func @transform_1(%arg0: i32, %arg1: i32) -> (i32, i32, i32, i32) {
    %c0_i32 = arith.constant 0 : i32
    %c0_i32_0 = arith.constant 0 : i32
    %c0_i32_1 = arith.constant 0 : i32
    %c0_i32_2 = arith.constant 0 : i32
    return %arg0, %c0_i32, %c0_i32_0, %c0_i32_1 : i32, i32, i32, i32
  }
  func.func @transform_2(%arg0: i32, %arg1: i32) -> (i32, i32) {
    %c0_i32 = arith.constant 0 : i32
    %c0_i32_0 = arith.constant 0 : i32
    %c0_i32_1 = arith.constant 0 : i32
    return %c0_i32, %c0_i32_0 : i32, i32
  }
  func.func @transform_3(%arg0: i32, %arg1: i32) -> (i32, i32, i32) {
    %c0_i32 = arith.constant 0 : i32
    %c0_i32_0 = arith.constant 0 : i32
    return %arg0, %c0_i32, %arg1 : i32, i32, i32
  }
}

</mosaic_0001>

<llo_original>
// kernel: qconv2d_forward.1
$region0: #{qconv2d_forward.1}
  #allocation0 [shape = 'u32[]', space=smem, size = 0x4, offset = 0x4, fixed_abs, tag = 'smem constant byte address 0x4 - core index']
  #allocation1 [shape = 'u32[144,128]{1,0:T(1,128)}', space=vmem, size = 0x12000, scoped, tag = 'internal scratch']
  #allocation2 [shape = 'bf16[18,18,4]{2,1,0:T(8,128)(2,1)}', space=vmem, size = 0x1b000, scoped, tag = 'scratch operand']
  #allocation3 [shape = 'bf16[256,36]{1,0:T(16,128)(2,1)}', space=vmem, size = 0x10000, scoped, tag = 'scratch operand']
  %s0 = inlined_call_operand.vmem [shape: f32[3], index: 0, kind: input, shape index: {}]
  %s1 = inlined_call_operand.vmem [shape: f32[2,18,18,4], index: 1, kind: input, shape index: {}]
  %s2 = inlined_call_operand.vmem [shape: bf16[36,128], index: 2, kind: input, shape index: {}]
  %s3 = inlined_call_operand.vmem [shape: s8[2,256,128], index: 3, kind: output, shape index: {}]
  %s4 = sld [smem:[#allocation0]]
  $region53: #{qconv2d_forward.1} parent=0
    _
  %s6 = ssub.s32 1, %s4
  %s7 = scalar_select 0, %s6, %s4
  $region1: #{qconv2d_forward.1} parent=0
    #allocation4 [shape = 'u8[512]{0}', space=smem, size = 0x200, scoped, tag = 'input window, operand 0, single buffered']
    #allocation5 [shape = 's32[2]{0}', space=sflag, size = 0x8, scoped, tag = 'scoped memory for qconv2d_forward.1']
    %8 = vsyncpa [#allocation5], 0
    loop: start=0, step=1, limit=4
    $region2: #{qconv2d_forward.1} parent=1 // loop_pre_header
      _
    $region3: #{qconv2d_forward.1} parent=1 // loop_header
      %s10 = sphi 0, %s14
      %p11 = scmp.ge.s32.totalorder %s10, 4
      %s17 = sphi 0, %s29
      %s18 = sphi 0, %s25
      %s19 = sphi 0, %s17
      %s20 = sphi 0, %s18
      %s21 = sphi 0, %s19
      %s22 = sphi 0, %s20
      %s30 = sphi 0, %s30
      %s32 = sphi 0, %s30
      %s33 = sphi 0, %s32
      %s47 = sphi 0, %s33
      %s53 = sphi 0, %s55
      %s56 = sphi 0, %s53
      %s57 = sphi 0, %s56
      %s73 = sphi 0, %s57
      %s77 = sphi 0, %s77
      %s79 = sphi 0, %s77
      %s80 = sphi 0, %s79
      %s94 = sphi 0, %s80
      %s102 = sphi 0, %s104
      %s105 = sphi 0, %s102
      %s106 = sphi 0, %s105
      %s122 = sphi 0, %s106
    $region4: #{qconv2d_forward.1} parent=1 // loop_header_branch
      %13 = sbr.rel (%p11) target = $region8
    $region5: #{qconv2d_forward.1} parent=1 // loop_body
      %s15 = ssub.s32 %s10, 1
      %s16 = ssub.s32 %s10, 2
      %s23 = sadd.s32 1, %s18
      %p24 = scmp.ge.s32.totalorder %s23, 1
      %s25 = scalar_select %p24, 0, %s23
      %s26 = sadd.s32 1, %s17
      %s27 = scalar_select %p24, %s26, %s17
      %p28 = scmp.ge.s32.totalorder %s27, 2
      %s29 = scalar_select %p28, 0, %s27
      %s31 = sadd.s32 %s30, 1
      %p34 = scmp.eq.s32.totalorder %s10, 1
      %p35 = scmp.ne.s32.totalorder %s30, %s32
      %p36 = scmp.eq.s32.totalorder %s10, 0
      %p37 = por %p35, %p36
      %p38 = scmp.ne.s32.totalorder %s30, %s32
      %p39 = scmp.eq.s32.totalorder %s15, 1
      %p40 = por %p38, %p39
      %p41 = scmp.ne.s32.totalorder %s32, %s33
      %p42 = scmp.eq.s32.totalorder %s15, 0
      %p43 = por %p41, %p42
      %p44 = scmp.ne.s32.totalorder %s32, %s33
      %p45 = scmp.eq.s32.totalorder %s16, 1
      %p46 = por %p44, %p45
      %p48 = scmp.ne.s32.totalorder %s33, %s47
      %p49 = scmp.eq.s32.totalorder %s16, 0
      %p50 = por %p48, %p49
      %s51 = ssub.s32 %s17, %s29
      %p52 = scmp.eq.s32.totalorder %s51, 0
      %s54 = sadd.s32 %s53, 1
      %s55 = scalar_select %p52, %s53, %s54
      %p58 = pneg %p52
      %p59 = scmp.eq.s32.totalorder %s10, 1
      %p60 = por %p58, %p59
      %p61 = scmp.ne.s32.totalorder %s53, %s56
      %p62 = scmp.eq.s32.totalorder %s10, 0
      %p63 = por %p61, %p62
      %p64 = scmp.ne.s32.totalorder %s53, %s56
      %p65 = scmp.eq.s32.totalorder %s15, 1
      %p66 = por %p64, %p65
      %p67 = scmp.ne.s32.totalorder %s56, %s57
      %p68 = scmp.eq.s32.totalorder %s15, 0
      %p69 = por %p67, %p68
      %p70 = scmp.ne.s32.totalorder %s56, %s57
      %p71 = scmp.eq.s32.totalorder %s16, 1
      %p72 = por %p70, %p71
      %p74 = scmp.ne.s32.totalorder %s57, %s73
      %p75 = scmp.eq.s32.totalorder %s16, 0
      %p76 = por %p74, %p75
      %s78 = sadd.s32 %s77, 1
      %p81 = scmp.eq.s32.totalorder %s10, 1
      %p82 = scmp.ne.s32.totalorder %s77, %s79
      %p83 = scmp.eq.s32.totalorder %s10, 0
      %p84 = por %p82, %p83
      %p85 = scmp.ne.s32.totalorder %s77, %s79
      %p86 = scmp.eq.s32.totalorder %s15, 1
      %p87 = por %p85, %p86
      %p88 = scmp.ne.s32.totalorder %s79, %s80
      %p89 = scmp.eq.s32.totalorder %s15, 0
      %p90 = por %p88, %p89
      %p91 = scmp.ne.s32.totalorder %s79, %s80
      %p92 = scmp.eq.s32.totalorder %s16, 1
      %p93 = por %p91, %p92
      %p95 = scmp.ne.s32.totalorder %s80, %s94
      %p96 = scmp.eq.s32.totalorder %s16, 0
      %p97 = por %p95, %p96
      %s98 = ssub.s32 %s17, %s29
      %s99 = ssub.s32 %s18, %s25
      %s100 = sor.u32 %s98, %s99
      %p101 = scmp.eq.s32.totalorder %s100, 0
      %s103 = sadd.s32 %s102, 1
      %s104 = scalar_select %p101, %s102, %s103
      %p107 = pneg %p101
      %p108 = scmp.eq.s32.totalorder %s10, 1
      %p109 = por %p107, %p108
      %p110 = scmp.ne.s32.totalorder %s102, %s105
      %p111 = scmp.eq.s32.totalorder %s10, 0
      %p112 = por %p110, %p111
      %p113 = scmp.ne.s32.totalorder %s102, %s105
      %p114 = scmp.eq.s32.totalorder %s15, 1
      %p115 = por %p113, %p114
      %p116 = scmp.ne.s32.totalorder %s105, %s106
      %p117 = scmp.eq.s32.totalorder %s15, 0
      %p118 = por %p116, %p117
      %p119 = scmp.ne.s32.totalorder %s105, %s106
      %p120 = scmp.eq.s32.totalorder %s16, 1
      %p121 = por %p119, %p120
      %p123 = scmp.ne.s32.totalorder %s106, %s122
      %p124 = scmp.eq.s32.totalorder %s16, 0
      %p125 = por %p123, %p124
      %p126 = scmp.le.s32.totalorder 1, %s10
      %p127 = scmp.lt.s32.totalorder %s10, 3
      %p128 = pnand %p126, %p127
      %p129 = pneg %p128
      // Predicated region
      $region9: #{qconv2d_forward.1} parent=5 // pred_check
        _
      $region10: #{qconv2d_forward.1} parent=5 // pred_check_branch
        %131 = sbr.rel (%p128) target = $region12
      $region11: #{qconv2d_forward.1} parent=5 // pred_region
        %s132 = ssub.s32 %s10, 1
        // Predicated region
        $region13: #{qconv2d_forward.1} parent=11 // pred_check
          %p133 = pneg %p43
        $region14: #{qconv2d_forward.1} parent=11 // pred_check_branch
          %135 = sbr.rel (%p133) target = $region16
        $region15: #{qconv2d_forward.1} parent=11 // pred_region
          %s137 = ssub.s32 16, 16
          %138 = vsyncadd [#allocation5], %s137
          %s140 = sshll.u32 %s0, 4
          %s141 = int_to_ptr.vmem [resolvable:$true] %s140
          %143 = dma.vmem_to_smem %s141, 16, [#allocation4], [#allocation5]
        $region16: #{qconv2d_forward.1} parent=11 // pred_fallthru
          _
        // Predicated region
        $region17: #{qconv2d_forward.1} parent=11 // pred_check
          %p144 = pneg %p90
        $region18: #{qconv2d_forward.1} parent=11 // pred_check_branch
          %146 = sbr.rel (%p144) target = $region20
        $region19: #{qconv2d_forward.1} parent=11 // pred_region
          _
        $region20: #{qconv2d_forward.1} parent=11 // pred_fallthru
          _
      $region12: #{qconv2d_forward.1} parent=5 // pred_fallthru
        _
      %p147 = scmp.lt.s32.totalorder %s10, 2
      // Predicated region
      $region21: #{qconv2d_forward.1} parent=5 // pred_check
        %p148 = pneg %p147
      $region22: #{qconv2d_forward.1} parent=5 // pred_check_branch
        %150 = sbr.rel (%p148) target = $region24
      $region23: #{qconv2d_forward.1} parent=5 // pred_region
        // Predicated region
        $region25: #{qconv2d_forward.1} parent=23 // pred_check
          %p151 = pneg %p63
        $region26: #{qconv2d_forward.1} parent=23 // pred_check_branch
          %153 = sbr.rel (%p151) target = $region28
        $region27: #{qconv2d_forward.1} parent=23 // pred_region
          %p154 = scmp.lt.s32.totalorder %s17, 1
          %s155 = scalar_select %p154, %s17, 1
          %s156 = smul.addr %s155, 54
          %s157 = smul.addr %s156, 8
          %s158 = scalar_lea.vmem %s1, %s157
        $region28: #{qconv2d_forward.1} parent=23 // pred_fallthru
          _
      $region24: #{qconv2d_forward.1} parent=5 // pred_fallthru
        _
      %p159 = scmp.le.s32.totalorder 1, %s10
      %p160 = scmp.lt.s32.totalorder %s10, 3
      %p161 = pnand %p159, %p160
      %p162 = pneg %p161
      // Predicated region
      $region29: #{qconv2d_forward.1} parent=5 // pred_check
        _
      $region30: #{qconv2d_forward.1} parent=5 // pred_check_branch
        %164 = sbr.rel (%p161) target = $region32
      $region31: #{qconv2d_forward.1} parent=5 // pred_region
        %s165 = ssub.s32 %s10, 1
        // Predicated region
        $region33: #{qconv2d_forward.1} parent=31 // pred_check
          %p166 = pneg %p43
        $region34: #{qconv2d_forward.1} parent=31 // pred_check_branch
          %168 = sbr.rel (%p166) target = $region36
        $region35: #{qconv2d_forward.1} parent=31 // pred_region
          %169 = dma.done [#allocation5], 16
        $region36: #{qconv2d_forward.1} parent=31 // pred_fallthru
          _
        %170 = sfence
        %p171 = pneg %p43
        %p172 = pneg %p40
        %p173 = scmp.lt.s32.totalorder %s19, 1
        %s174 = scalar_select %p173, %s19, 1
        %s175 = smul.addr %s174, 54
        %s176 = smul.addr %s175, 8
        %s177 = scalar_lea.vmem %s1, %s176
        %p178 = pneg %p69
        %p179 = pneg %p66
        %p180 = pneg %p90
        %p181 = pneg %p87
        %p182 = pneg %p118
        %p183 = pneg %p115
        %p184 = scmp.lt.s32.totalorder %s19, 1
        %s185 = scalar_select %p184, %s19, 1
        %p186 = scmp.lt.s32.totalorder %s20, 0
        %s187 = scalar_select %p186, %s20, 0
        %s188 = smul.addr %s185, 32
        %s189 = sadd.s32 %s187, %s188
        %s190 = smul.addr %s189, 2
        %s191 = scalar_lea.vmem %s3, %s190
        %p192 = scmp.lt.s32.totalorder %s19, 1
        %s193 = scalar_select %p192, %s19, 1
        %s194 = smul.addr %s193, 54
        %s195 = smul.addr %s194, 8
        %s196 = scalar_lea.vmem %s1, %s195
        %p197 = scmp.lt.s32.totalorder %s19, 1
        %s198 = scalar_select %p197, %s19, 1
        %p199 = scmp.lt.s32.totalorder %s20, 0
        %s200 = scalar_select %p199, %s20, 0
        %s201 = smul.addr %s198, 32
        %s202 = sadd.s32 %s200, %s201
        %s203 = smul.addr %s202, 2
        %s204 = scalar_lea.vmem %s3, %s203
        %p206 = scmp.eq.s32.totalorder %s20, 0
        // Predicated region
        $region37: #{qconv2d_forward.1} parent=31 // pred_check
          %p207 = pneg %p206
        $region38: #{qconv2d_forward.1} parent=31 // pred_check_branch
          %209 = sbr.rel (%p207) target = $region40
        $region39: #{qconv2d_forward.1} parent=31 // pred_region
          %s210 = sld [smem:[#allocation4]]
          %s211 = sld [smem:[#allocation4 + $0x1]]
          %v212 = vld [vmem:[%s196] sm:$0xff]
          %v213 = vld [vmem:[%s196 + $0x8] sm:$0xff]
          %v214 = vld [vmem:[%s196 + $0x10] sm:$0x3]
          %v215 = vld [vmem:[%s196 + $0x18] sm:$0xff]
          %v216 = vld [vmem:[%s196 + $0x20] sm:$0xff]
          %v217 = vld [vmem:[%s196 + $0x28] sm:$0x3]
          %v218 = vld [vmem:[%s196 + $0x30] sm:$0xff]
          %v219 = vld [vmem:[%s196 + $0x38] sm:$0xff]
          %v220 = vld [vmem:[%s196 + $0x40] sm:$0x3]
          %v221 = vld [vmem:[%s196 + $0x48] sm:$0xff]
          %v222 = vld [vmem:[%s196 + $0x50] sm:$0xff]
          %v223 = vld [vmem:[%s196 + $0x58] sm:$0x3]
          %v224 = vld [vmem:[%s196 + $0x60] sm:$0xff]
          %v225 = vld [vmem:[%s196 + $0x68] sm:$0xff]
          %v226 = vld [vmem:[%s196 + $0x70] sm:$0x3]
          %v227 = vld [vmem:[%s196 + $0x78] sm:$0xff]
          %v228 = vld [vmem:[%s196 + $0x80] sm:$0xff]
          %v229 = vld [vmem:[%s196 + $0x88] sm:$0x3]
          %v230 = vld [vmem:[%s196 + $0x90] sm:$0xff]
          %v231 = vld [vmem:[%s196 + $0x98] sm:$0xff]
          %v232 = vld [vmem:[%s196 + $0xa0] sm:$0x3]
          %v233 = vld [vmem:[%s196 + $0xa8] sm:$0xff]
          %v234 = vld [vmem:[%s196 + $0xb0] sm:$0xff]
          %v235 = vld [vmem:[%s196 + $0xb8] sm:$0x3]
          %v236 = vld [vmem:[%s196 + $0xc0] sm:$0xff]
          %v237 = vld [vmem:[%s196 + $0xc8] sm:$0xff]
          %v238 = vld [vmem:[%s196 + $0xd0] sm:$0x3]
          %v239 = vld [vmem:[%s196 + $0xd8] sm:$0xff]
          %v240 = vld [vmem:[%s196 + $0xe0] sm:$0xff]
          %v241 = vld [vmem:[%s196 + $0xe8] sm:$0x3]
          %v242 = vld [vmem:[%s196 + $0xf0] sm:$0xff]
          %v243 = vld [vmem:[%s196 + $0xf8] sm:$0xff]
          %v244 = vld [vmem:[%s196 + $0x100] sm:$0x3]
          %v245 = vld [vmem:[%s196 + $0x108] sm:$0xff]
          %v246 = vld [vmem:[%s196 + $0x110] sm:$0xff]
          %v247 = vld [vmem:[%s196 + $0x118] sm:$0x3]
          %v248 = vld [vmem:[%s196 + $0x120] sm:$0xff]
          %v249 = vld [vmem:[%s196 + $0x128] sm:$0xff]
          %v250 = vld [vmem:[%s196 + $0x130] sm:$0x3]
          %v251 = vld [vmem:[%s196 + $0x138] sm:$0xff]
          %v252 = vld [vmem:[%s196 + $0x140] sm:$0xff]
          %v253 = vld [vmem:[%s196 + $0x148] sm:$0x3]
          %v254 = vld [vmem:[%s196 + $0x150] sm:$0xff]
          %v255 = vld [vmem:[%s196 + $0x158] sm:$0xff]
          %v256 = vld [vmem:[%s196 + $0x160] sm:$0x3]
          %v257 = vld [vmem:[%s196 + $0x168] sm:$0xff]
          %v258 = vld [vmem:[%s196 + $0x170] sm:$0xff]
          %v259 = vld [vmem:[%s196 + $0x178] sm:$0x3]
          %v260 = vld [vmem:[%s196 + $0x180] sm:$0xff]
          %v261 = vld [vmem:[%s196 + $0x188] sm:$0xff]
          %v262 = vld [vmem:[%s196 + $0x190] sm:$0x3]
          %v263 = vld [vmem:[%s196 + $0x198] sm:$0xff]
          %v264 = vld [vmem:[%s196 + $0x1a0] sm:$0xff]
          %v265 = vld [vmem:[%s196 + $0x1a8] sm:$0x3]
          %v266 = vstv %s210
          %v267 = vmul.f32 %v212, %v266
          %v268 = vmul.f32 %v213, %v266
          %v269 = vmul.f32 %v214, %v266
          %v270 = vmul.f32 %v215, %v266
          %v271 = vmul.f32 %v216, %v266
          %v272 = vmul.f32 %v217, %v266
          %v273 = vmul.f32 %v218, %v266
          %v274 = vmul.f32 %v219, %v266
          %v275 = vmul.f32 %v220, %v266
          %v276 = vmul.f32 %v221, %v266
          %v277 = vmul.f32 %v222, %v266
          %v278 = vmul.f32 %v223, %v266
          %v279 = vmul.f32 %v224, %v266
          %v280 = vmul.f32 %v225, %v266
          %v281 = vmul.f32 %v226, %v266
          %v282 = vmul.f32 %v227, %v266
          %v283 = vmul.f32 %v228, %v266
          %v284 = vmul.f32 %v229, %v266
          %v285 = vmul.f32 %v230, %v266
          %v286 = vmul.f32 %v231, %v266
          %v287 = vmul.f32 %v232, %v266
          %v288 = vmul.f32 %v233, %v266
          %v289 = vmul.f32 %v234, %v266
          %v290 = vmul.f32 %v235, %v266
          %v291 = vmul.f32 %v236, %v266
          %v292 = vmul.f32 %v237, %v266
          %v293 = vmul.f32 %v238, %v266
          %v294 = vmul.f32 %v239, %v266
          %v295 = vmul.f32 %v240, %v266
          %v296 = vmul.f32 %v241, %v266
          %v297 = vmul.f32 %v242, %v266
          %v298 = vmul.f32 %v243, %v266
          %v299 = vmul.f32 %v244, %v266
          %v300 = vmul.f32 %v245, %v266
          %v301 = vmul.f32 %v246, %v266
          %v302 = vmul.f32 %v247, %v266
          %v303 = vmul.f32 %v248, %v266
          %v304 = vmul.f32 %v249, %v266
          %v305 = vmul.f32 %v250, %v266
          %v306 = vmul.f32 %v251, %v266
          %v307 = vmul.f32 %v252, %v266
          %v308 = vmul.f32 %v253, %v266
          %v309 = vmul.f32 %v254, %v266
          %v310 = vmul.f32 %v255, %v266
          %v311 = vmul.f32 %v256, %v266
          %v312 = vmul.f32 %v257, %v266
          %v313 = vmul.f32 %v258, %v266
          %v314 = vmul.f32 %v259, %v266
          %v315 = vmul.f32 %v260, %v266
          %v316 = vmul.f32 %v261, %v266
          %v317 = vmul.f32 %v262, %v266
          %v318 = vmul.f32 %v263, %v266
          %v319 = vmul.f32 %v264, %v266
          %v320 = vmul.f32 %v265, %v266
          %v321 = vstv %s211
          %v322 = vadd.f32 %v267, %v321
          %v323 = vadd.f32 %v268, %v321
          %v324 = vadd.f32 %v269, %v321
          %v325 = vadd.f32 %v270, %v321
          %v326 = vadd.f32 %v271, %v321
          %v327 = vadd.f32 %v272, %v321
          %v328 = vadd.f32 %v273, %v321
          %v329 = vadd.f32 %v274, %v321
          %v330 = vadd.f32 %v275, %v321
          %v331 = vadd.f32 %v276, %v321
          %v332 = vadd.f32 %v277, %v321
          %v333 = vadd.f32 %v278, %v321
          %v334 = vadd.f32 %v279, %v321
          %v335 = vadd.f32 %v280, %v321
          %v336 = vadd.f32 %v281, %v321
          %v337 = vadd.f32 %v282, %v321
          %v338 = vadd.f32 %v283, %v321
          %v339 = vadd.f32 %v284, %v321
          %v340 = vadd.f32 %v285, %v321
          %v341 = vadd.f32 %v286, %v321
          %v342 = vadd.f32 %v287, %v321
          %v343 = vadd.f32 %v288, %v321
          %v344 = vadd.f32 %v289, %v321
          %v345 = vadd.f32 %v290, %v321
          %v346 = vadd.f32 %v291, %v321
          %v347 = vadd.f32 %v292, %v321
          %v348 = vadd.f32 %v293, %v321
          %v349 = vadd.f32 %v294, %v321
          %v350 = vadd.f32 %v295, %v321
          %v351 = vadd.f32 %v296, %v321
          %v352 = vadd.f32 %v297, %v321
          %v353 = vadd.f32 %v298, %v321
          %v354 = vadd.f32 %v299, %v321
          %v355 = vadd.f32 %v300, %v321
          %v356 = vadd.f32 %v301, %v321
          %v357 = vadd.f32 %v302, %v321
          %v358 = vadd.f32 %v303, %v321
          %v359 = vadd.f32 %v304, %v321
          %v360 = vadd.f32 %v305, %v321
          %v361 = vadd.f32 %v306, %v321
          %v362 = vadd.f32 %v307, %v321
          %v363 = vadd.f32 %v308, %v321
          %v364 = vadd.f32 %v309, %v321
          %v365 = vadd.f32 %v310, %v321
          %v366 = vadd.f32 %v311, %v321
          %v367 = vadd.f32 %v312, %v321
          %v368 = vadd.f32 %v313, %v321
          %v369 = vadd.f32 %v314, %v321
          %v370 = vadd.f32 %v315, %v321
          %v371 = vadd.f32 %v316, %v321
          %v372 = vadd.f32 %v317, %v321
          %v373 = vadd.f32 %v318, %v321
          %v374 = vadd.f32 %v319, %v321
          %v375 = vadd.f32 %v320, %v321
          %v376 = vround.ne.pseudo %v322
          %v377 = vround.ne.pseudo %v323
          %v378 = vround.ne.pseudo %v324
          %v379 = vround.ne.pseudo %v325
          %v380 = vround.ne.pseudo %v326
          %v381 = vround.ne.pseudo %v327
          %v382 = vround.ne.pseudo %v328
          %v383 = vround.ne.pseudo %v329
          %v384 = vround.ne.pseudo %v330
          %v385 = vround.ne.pseudo %v331
          %v386 = vround.ne.pseudo %v332
          %v387 = vround.ne.pseudo %v333
          %v388 = vround.ne.pseudo %v334
          %v389 = vround.ne.pseudo %v335
          %v390 = vround.ne.pseudo %v336
          %v391 = vround.ne.pseudo %v337
          %v392 = vround.ne.pseudo %v338
          %v393 = vround.ne.pseudo %v339
          %v394 = vround.ne.pseudo %v340
          %v395 = vround.ne.pseudo %v341
          %v396 = vround.ne.pseudo %v342
          %v397 = vround.ne.pseudo %v343
          %v398 = vround.ne.pseudo %v344
          %v399 = vround.ne.pseudo %v345
          %v400 = vround.ne.pseudo %v346
          %v401 = vround.ne.pseudo %v347
          %v402 = vround.ne.pseudo %v348
          %v403 = vround.ne.pseudo %v349
          %v404 = vround.ne.pseudo %v350
          %v405 = vround.ne.pseudo %v351
          %v406 = vround.ne.pseudo %v352
          %v407 = vround.ne.pseudo %v353
          %v408 = vround.ne.pseudo %v354
          %v409 = vround.ne.pseudo %v355
          %v410 = vround.ne.pseudo %v356
          %v411 = vround.ne.pseudo %v357
          %v412 = vround.ne.pseudo %v358
          %v413 = vround.ne.pseudo %v359
          %v414 = vround.ne.pseudo %v360
          %v415 = vround.ne.pseudo %v361
          %v416 = vround.ne.pseudo %v362
          %v417 = vround.ne.pseudo %v363
          %v418 = vround.ne.pseudo %v364
          %v419 = vround.ne.pseudo %v365
          %v420 = vround.ne.pseudo %v366
          %v421 = vround.ne.pseudo %v367
          %v422 = vround.ne.pseudo %v368
          %v423 = vround.ne.pseudo %v369
          %v424 = vround.ne.pseudo %v370
          %v425 = vround.ne.pseudo %v371
          %v426 = vround.ne.pseudo %v372
          %v427 = vround.ne.pseudo %v373
          %v428 = vround.ne.pseudo %v374
          %v429 = vround.ne.pseudo %v375
          %v430 = vmax.f32 %v376, 0.0
          %v431 = vmax.f32 %v377, 0.0
          %v432 = vmax.f32 %v378, 0.0
          %v433 = vmax.f32 %v379, 0.0
          %v434 = vmax.f32 %v380, 0.0
          %v435 = vmax.f32 %v381, 0.0
          %v436 = vmax.f32 %v382, 0.0
          %v437 = vmax.f32 %v383, 0.0
          %v438 = vmax.f32 %v384, 0.0
          %v439 = vmax.f32 %v385, 0.0
          %v440 = vmax.f32 %v386, 0.0
          %v441 = vmax.f32 %v387, 0.0
          %v442 = vmax.f32 %v388, 0.0
          %v443 = vmax.f32 %v389, 0.0
          %v444 = vmax.f32 %v390, 0.0
          %v445 = vmax.f32 %v391, 0.0
          %v446 = vmax.f32 %v392, 0.0
          %v447 = vmax.f32 %v393, 0.0
          %v448 = vmax.f32 %v394, 0.0
          %v449 = vmax.f32 %v395, 0.0
          %v450 = vmax.f32 %v396, 0.0
          %v451 = vmax.f32 %v397, 0.0
          %v452 = vmax.f32 %v398, 0.0
          %v453 = vmax.f32 %v399, 0.0
          %v454 = vmax.f32 %v400, 0.0
          %v455 = vmax.f32 %v401, 0.0
          %v456 = vmax.f32 %v402, 0.0
          %v457 = vmax.f32 %v403, 0.0
          %v458 = vmax.f32 %v404, 0.0
          %v459 = vmax.f32 %v405, 0.0
          %v460 = vmax.f32 %v406, 0.0
          %v461 = vmax.f32 %v407, 0.0
          %v462 = vmax.f32 %v408, 0.0
          %v463 = vmax.f32 %v409, 0.0
          %v464 = vmax.f32 %v410, 0.0
          %v465 = vmax.f32 %v411, 0.0
          %v466 = vmax.f32 %v412, 0.0
          %v467 = vmax.f32 %v413, 0.0
          %v468 = vmax.f32 %v414, 0.0
          %v469 = vmax.f32 %v415, 0.0
          %v470 = vmax.f32 %v416, 0.0
          %v471 = vmax.f32 %v417, 0.0
          %v472 = vmax.f32 %v418, 0.0
          %v473 = vmax.f32 %v419, 0.0
          %v474 = vmax.f32 %v420, 0.0
          %v475 = vmax.f32 %v421, 0.0
          %v476 = vmax.f32 %v422, 0.0
          %v477 = vmax.f32 %v423, 0.0
          %v478 = vmax.f32 %v424, 0.0
          %v479 = vmax.f32 %v425, 0.0
          %v480 = vmax.f32 %v426, 0.0
          %v481 = vmax.f32 %v427, 0.0
          %v482 = vmax.f32 %v428, 0.0
          %v483 = vmax.f32 %v429, 0.0
          %v484 = vmin.f32 %v430, 255.0
          %v485 = vmin.f32 %v431, 255.0
          %v486 = vmin.f32 %v432, 255.0
          %v487 = vmin.f32 %v433, 255.0
          %v488 = vmin.f32 %v434, 255.0
          %v489 = vmin.f32 %v435, 255.0
          %v490 = vmin.f32 %v436, 255.0
          %v491 = vmin.f32 %v437, 255.0
          %v492 = vmin.f32 %v438, 255.0
          %v493 = vmin.f32 %v439, 255.0
          %v494 = vmin.f32 %v440, 255.0
          %v495 = vmin.f32 %v441, 255.0
          %v496 = vmin.f32 %v442, 255.0
          %v497 = vmin.f32 %v443, 255.0
          %v498 = vmin.f32 %v444, 255.0
          %v499 = vmin.f32 %v445, 255.0
          %v500 = vmin.f32 %v446, 255.0
          %v501 = vmin.f32 %v447, 255.0
          %v502 = vmin.f32 %v448, 255.0
          %v503 = vmin.f32 %v449, 255.0
          %v504 = vmin.f32 %v450, 255.0
          %v505 = vmin.f32 %v451, 255.0
          %v506 = vmin.f32 %v452, 255.0
          %v507 = vmin.f32 %v453, 255.0
          %v508 = vmin.f32 %v454, 255.0
          %v509 = vmin.f32 %v455, 255.0
          %v510 = vmin.f32 %v456, 255.0
          %v511 = vmin.f32 %v457, 255.0
          %v512 = vmin.f32 %v458, 255.0
          %v513 = vmin.f32 %v459, 255.0
          %v514 = vmin.f32 %v460, 255.0
          %v515 = vmin.f32 %v461, 255.0
          %v516 = vmin.f32 %v462, 255.0
          %v517 = vmin.f32 %v463, 255.0
          %v518 = vmin.f32 %v464, 255.0
          %v519 = vmin.f32 %v465, 255.0
          %v520 = vmin.f32 %v466, 255.0
          %v521 = vmin.f32 %v467, 255.0
          %v522 = vmin.f32 %v468, 255.0
          %v523 = vmin.f32 %v469, 255.0
          %v524 = vmin.f32 %v470, 255.0
          %v525 = vmin.f32 %v471, 255.0
          %v526 = vmin.f32 %v472, 255.0
          %v527 = vmin.f32 %v473, 255.0
          %v528 = vmin.f32 %v474, 255.0
          %v529 = vmin.f32 %v475, 255.0
          %v530 = vmin.f32 %v476, 255.0
          %v531 = vmin.f32 %v477, 255.0
          %v532 = vmin.f32 %v478, 255.0
          %v533 = vmin.f32 %v479, 255.0
          %v534 = vmin.f32 %v480, 255.0
          %v535 = vmin.f32 %v481, 255.0
          %v536 = vmin.f32 %v482, 255.0
          %v537 = vmin.f32 %v483, 255.0
          %v538 = vsub.f32 %v484, %v321
          %v539 = vsub.f32 %v485, %v321
          %v540 = vsub.f32 %v486, %v321
          %v541 = vsub.f32 %v487, %v321
          %v542 = vsub.f32 %v488, %v321
          %v543 = vsub.f32 %v489, %v321
          %v544 = vsub.f32 %v490, %v321
          %v545 = vsub.f32 %v491, %v321
          %v546 = vsub.f32 %v492, %v321
          %v547 = vsub.f32 %v493, %v321
          %v548 = vsub.f32 %v494, %v321
          %v549 = vsub.f32 %v495, %v321
          %v550 = vsub.f32 %v496, %v321
          %v551 = vsub.f32 %v497, %v321
          %v552 = vsub.f32 %v498, %v321
          %v553 = vsub.f32 %v499, %v321
          %v554 = vsub.f32 %v500, %v321
          %v555 = vsub.f32 %v501, %v321
          %v556 = vsub.f32 %v502, %v321
          %v557 = vsub.f32 %v503, %v321
          %v558 = vsub.f32 %v504, %v321
          %v559 = vsub.f32 %v505, %v321
          %v560 = vsub.f32 %v506, %v321
          %v561 = vsub.f32 %v507, %v321
          %v562 = vsub.f32 %v508, %v321
          %v563 = vsub.f32 %v509, %v321
          %v564 = vsub.f32 %v510, %v321
          %v565 = vsub.f32 %v511, %v321
          %v566 = vsub.f32 %v512, %v321
          %v567 = vsub.f32 %v513, %v321
          %v568 = vsub.f32 %v514, %v321
          %v569 = vsub.f32 %v515, %v321
          %v570 = vsub.f32 %v516, %v321
          %v571 = vsub.f32 %v517, %v321
          %v572 = vsub.f32 %v518, %v321
          %v573 = vsub.f32 %v519, %v321
          %v574 = vsub.f32 %v520, %v321
          %v575 = vsub.f32 %v521, %v321
          %v576 = vsub.f32 %v522, %v321
          %v577 = vsub.f32 %v523, %v321
          %v578 = vsub.f32 %v524, %v321
          %v579 = vsub.f32 %v525, %v321
          %v580 = vsub.f32 %v526, %v321
          %v581 = vsub.f32 %v527, %v321
          %v582 = vsub.f32 %v528, %v321
          %v583 = vsub.f32 %v529, %v321
          %v584 = vsub.f32 %v530, %v321
          %v585 = vsub.f32 %v531, %v321
          %v586 = vsub.f32 %v532, %v321
          %v587 = vsub.f32 %v533, %v321
          %v588 = vsub.f32 %v534, %v321
          %v589 = vsub.f32 %v535, %v321
          %v590 = vsub.f32 %v536, %v321
          %v591 = vsub.f32 %v537, %v321
          %v592 = vpack.c.bf16 %v539, %v538
          %v593 = vpack.c.bf16 %v540, %v540
          %v594 = vpack.c.bf16 %v542, %v541
          %v595 = vpack.c.bf16 %v543, %v543
          %v596 = vpack.c.bf16 %v545, %v544
          %v597 = vpack.c.bf16 %v546, %v546
          %v598 = vpack.c.bf16 %v548, %v547
          %v599 = vpack.c.bf16 %v549, %v549
          %v600 = vpack.c.bf16 %v551, %v550
          %v601 = vpack.c.bf16 %v552, %v552
          %v602 = vpack.c.bf16 %v554, %v553
          %v603 = vpack.c.bf16 %v555, %v555
          %v604 = vpack.c.bf16 %v557, %v556
          %v605 = vpack.c.bf16 %v558, %v558
          %v606 = vpack.c.bf16 %v560, %v559
          %v607 = vpack.c.bf16 %v561, %v561
          %v608 = vpack.c.bf16 %v563, %v562
          %v609 = vpack.c.bf16 %v564, %v564
          %v610 = vpack.c.bf16 %v566, %v565
          %v611 = vpack.c.bf16 %v567, %v567
          %v612 = vpack.c.bf16 %v569, %v568
          %v613 = vpack.c.bf16 %v570, %v570
          %v614 = vpack.c.bf16 %v572, %v571
          %v615 = vpack.c.bf16 %v573, %v573
          %v616 = vpack.c.bf16 %v575, %v574
          %v617 = vpack.c.bf16 %v576, %v576
          %v618 = vpack.c.bf16 %v578, %v577
          %v619 = vpack.c.bf16 %v579, %v579
          %v620 = vpack.c.bf16 %v581, %v580
          %v621 = vpack.c.bf16 %v582, %v582
          %v622 = vpack.c.bf16 %v584, %v583
          %v623 = vpack.c.bf16 %v585, %v585
          %v624 = vpack.c.bf16 %v587, %v586
          %v625 = vpack.c.bf16 %v588, %v588
          %v626 = vpack.c.bf16 %v590, %v589
          %v627 = vpack.c.bf16 %v591, %v591
          %v664 = vunpack.c.l.b16 %v592
          %v665 = vunpack.c.h.b16 %v592
          %v666 = vunpack.c.l.b16 %v593
          %v667 = vunpack.c.l.b16 %v594
          %v668 = vunpack.c.h.b16 %v594
          %v669 = vunpack.c.l.b16 %v595
          %v670 = vunpack.c.l.b16 %v596
          %v671 = vunpack.c.h.b16 %v596
          %v672 = vunpack.c.l.b16 %v597
          %v673 = vunpack.c.l.b16 %v598
          %v674 = vunpack.c.h.b16 %v598
          %v675 = vunpack.c.l.b16 %v599
          %v676 = vunpack.c.l.b16 %v600
          %v677 = vunpack.c.h.b16 %v600
          %v678 = vunpack.c.l.b16 %v601
          %v679 = vunpack.c.l.b16 %v602
          %v680 = vunpack.c.h.b16 %v602
          %v681 = vunpack.c.l.b16 %v603
          %v682 = vunpack.c.l.b16 %v604
          %v683 = vunpack.c.h.b16 %v604
          %v684 = vunpack.c.l.b16 %v605
          %v685 = vunpack.c.l.b16 %v606
          %v686 = vunpack.c.h.b16 %v606
          %v687 = vunpack.c.l.b16 %v607
          %v688 = vunpack.c.l.b16 %v608
          %v689 = vunpack.c.h.b16 %v608
          %v690 = vunpack.c.l.b16 %v609
          %v691 = vunpack.c.l.b16 %v610
          %v692 = vunpack.c.h.b16 %v610
          %v693 = vunpack.c.l.b16 %v611
          %v694 = vunpack.c.l.b16 %v612
          %v695 = vunpack.c.h.b16 %v612
          %v696 = vunpack.c.l.b16 %v613
          %v697 = vunpack.c.l.b16 %v614
          %v698 = vunpack.c.h.b16 %v614
          %v699 = vunpack.c.l.b16 %v615
          %v700 = vunpack.c.l.b16 %v616
          %v701 = vunpack.c.h.b16 %v616
          %v702 = vunpack.c.l.b16 %v617
          %v703 = vunpack.c.l.b16 %v618
          %v704 = vunpack.c.h.b16 %v618
          %v705 = vunpack.c.l.b16 %v619
          %v706 = vunpack.c.l.b16 %v620
          %v707 = vunpack.c.h.b16 %v620
          %v708 = vunpack.c.l.b16 %v621
          %v709 = vunpack.c.l.b16 %v622
          %v710 = vunpack.c.h.b16 %v622
          %v711 = vunpack.c.l.b16 %v623
          %v712 = vunpack.c.l.b16 %v624
          %v713 = vunpack.c.h.b16 %v624
          %v714 = vunpack.c.l.b16 %v625
          %v715 = vunpack.c.l.b16 %v626
          %v716 = vunpack.c.h.b16 %v626
          %v717 = vunpack.c.l.b16 %v627
          %v718 = vpack.c.b16 %v664, %v664
          %v719 = vpack.c.b16 %v665, %v665
          %v720 = vpack.c.b16 %v666, %v666
          %v721 = vpack.c.b16 %v667, %v667
          %v722 = vpack.c.b16 %v668, %v668
          %v723 = vpack.c.b16 %v669, %v669
          %v724 = vpack.c.b16 %v670, %v670
          %v725 = vpack.c.b16 %v671, %v671
          %v726 = vpack.c.b16 %v672, %v672
          %v727 = vpack.c.b16 %v673, %v673
          %v728 = vpack.c.b16 %v674, %v674
          %v729 = vpack.c.b16 %v675, %v675
          %v730 = vpack.c.b16 %v676, %v676
          %v731 = vpack.c.b16 %v677, %v677
          %v732 = vpack.c.b16 %v678, %v678
          %v733 = vpack.c.b16 %v679, %v679
          %v734 = vpack.c.b16 %v680, %v680
          %v735 = vpack.c.b16 %v681, %v681
          %v736 = vpack.c.b16 %v682, %v682
          %v737 = vpack.c.b16 %v683, %v683
          %v738 = vpack.c.b16 %v684, %v684
          %v739 = vpack.c.b16 %v685, %v685
          %v740 = vpack.c.b16 %v686, %v686
          %v741 = vpack.c.b16 %v687, %v687
          %v742 = vpack.c.b16 %v688, %v688
          %v743 = vpack.c.b16 %v689, %v689
          %v744 = vpack.c.b16 %v690, %v690
          %v745 = vpack.c.b16 %v691, %v691
          %v746 = vpack.c.b16 %v692, %v692
          %v747 = vpack.c.b16 %v693, %v693
          %v748 = vpack.c.b16 %v694, %v694
          %v749 = vpack.c.b16 %v695, %v695
          %v750 = vpack.c.b16 %v696, %v696
          %v751 = vpack.c.b16 %v697, %v697
          %v752 = vpack.c.b16 %v698, %v698
          %v753 = vpack.c.b16 %v699, %v699
          %v754 = vpack.c.b16 %v700, %v700
          %v755 = vpack.c.b16 %v701, %v701
          %v756 = vpack.c.b16 %v702, %v702
          %v757 = vpack.c.b16 %v703, %v703
          %v758 = vpack.c.b16 %v704, %v704
          %v759 = vpack.c.b16 %v705, %v705
          %v760 = vpack.c.b16 %v706, %v706
          %v761 = vpack.c.b16 %v707, %v707
          %v762 = vpack.c.b16 %v708, %v708
          %v763 = vpack.c.b16 %v709, %v709
          %v764 = vpack.c.b16 %v710, %v710
          %v765 = vpack.c.b16 %v711, %v711
          %v766 = vpack.c.b16 %v712, %v712
          %v767 = vpack.c.b16 %v713, %v713
          %v768 = vpack.c.b16 %v714, %v714
          %v769 = vpack.c.b16 %v715, %v715
          %v770 = vpack.c.b16 %v716, %v716
          %v771 = vpack.c.b16 %v717, %v717
          %vm826 = vcmask 27648
          %827 = vst.msk [vmem:[#allocation2] sm:$0xf] %vm826, %v718
          %828 = vst.msk [vmem:[#allocation2 + $0x4] sm:$0xf] %vm826, %v719
          %vm829 = vcmask 24576
          %830 = vst.msk [vmem:[#allocation2 + $0x8] sm:$0x1] %vm829, %v720
          %831 = vst.msk [vmem:[#allocation2 + $0xc] sm:$0xf] %vm826, %v721
          %832 = vst.msk [vmem:[#allocation2 + $0x10] sm:$0xf] %vm826, %v722
          %833 = vst.msk [vmem:[#allocation2 + $0x14] sm:$0x1] %vm829, %v723
          %834 = vst.msk [vmem:[#allocation2 + $0x18] sm:$0xf] %vm826, %v724
          %835 = vst.msk [vmem:[#allocation2 + $0x1c] sm:$0xf] %vm826, %v725
          %836 = vst.msk [vmem:[#allocation2 + $0x20] sm:$0x1] %vm829, %v726
          %837 = vst.msk [vmem:[#allocation2 + $0x24] sm:$0xf] %vm826, %v727
          %838 = vst.msk [vmem:[#allocation2 + $0x28] sm:$0xf] %vm826, %v728
          %839 = vst.msk [vmem:[#allocation2 + $0x2c] sm:$0x1] %vm829, %v729
          %840 = vst.msk [vmem:[#allocation2 + $0x30] sm:$0xf] %vm826, %v730
          %841 = vst.msk [vmem:[#allocation2 + $0x34] sm:$0xf] %vm826, %v731
          %842 = vst.msk [vmem:[#allocation2 + $0x38] sm:$0x1] %vm829, %v732
          %843 = vst.msk [vmem:[#allocation2 + $0x3c] sm:$0xf] %vm826, %v733
          %844 = vst.msk [vmem:[#allocation2 + $0x40] sm:$0xf] %vm826, %v734
          %845 = vst.msk [vmem:[#allocation2 + $0x44] sm:$0x1] %vm829, %v735
          %846 = vst.msk [vmem:[#allocation2 + $0x48] sm:$0xf] %vm826, %v736
          %847 = vst.msk [vmem:[#allocation2 + $0x4c] sm:$0xf] %vm826, %v737
          %848 = vst.msk [vmem:[#allocation2 + $0x50] sm:$0x1] %vm829, %v738
          %849 = vst.msk [vmem:[#allocation2 + $0x54] sm:$0xf] %vm826, %v739
          %850 = vst.msk [vmem:[#allocation2 + $0x58] sm:$0xf] %vm826, %v740
          %851 = vst.msk [vmem:[#allocation2 + $0x5c] sm:$0x1] %vm829, %v741
          %852 = vst.msk [vmem:[#allocation2 + $0x60] sm:$0xf] %vm826, %v742
          %853 = vst.msk [vmem:[#allocation2 + $0x64] sm:$0xf] %vm826, %v743
          %854 = vst.msk [vmem:[#allocation2 + $0x68] sm:$0x1] %vm829, %v744
          %855 = vst.msk [vmem:[#allocation2 + $0x6c] sm:$0xf] %vm826, %v745
          %856 = vst.msk [vmem:[#allocation2 + $0x70] sm:$0xf] %vm826, %v746
          %857 = vst.msk [vmem:[#allocation2 + $0x74] sm:$0x1] %vm829, %v747
          %858 = vst.msk [vmem:[#allocation2 + $0x78] sm:$0xf] %vm826, %v748
          %859 = vst.msk [vmem:[#allocation2 + $0x7c] sm:$0xf] %vm826, %v749
          %860 = vst.msk [vmem:[#allocation2 + $0x80] sm:$0x1] %vm829, %v750
          %861 = vst.msk [vmem:[#allocation2 + $0x84] sm:$0xf] %vm826, %v751
          %862 = vst.msk [vmem:[#allocation2 + $0x88] sm:$0xf] %vm826, %v752
          %863 = vst.msk [vmem:[#allocation2 + $0x8c] sm:$0x1] %vm829, %v753
          %864 = vst.msk [vmem:[#allocation2 + $0x90] sm:$0xf] %vm826, %v754
          %865 = vst.msk [vmem:[#allocation2 + $0x94] sm:$0xf] %vm826, %v755
          %866 = vst.msk [vmem:[#allocation2 + $0x98] sm:$0x1] %vm829, %v756
          %867 = vst.msk [vmem:[#allocation2 + $0x9c] sm:$0xf] %vm826, %v757
          %868 = vst.msk [vmem:[#allocation2 + $0xa0] sm:$0xf] %vm826, %v758
          %869 = vst.msk [vmem:[#allocation2 + $0xa4] sm:$0x1] %vm829, %v759
          %870 = vst.msk [vmem:[#allocation2 + $0xa8] sm:$0xf] %vm826, %v760
          %871 = vst.msk [vmem:[#allocation2 + $0xac] sm:$0xf] %vm826, %v761
          %872 = vst.msk [vmem:[#allocation2 + $0xb0] sm:$0x1] %vm829, %v762
          %873 = vst.msk [vmem:[#allocation2 + $0xb4] sm:$0xf] %vm826, %v763
          %874 = vst.msk [vmem:[#allocation2 + $0xb8] sm:$0xf] %vm826, %v764
          %875 = vst.msk [vmem:[#allocation2 + $0xbc] sm:$0x1] %vm829, %v765
          %876 = vst.msk [vmem:[#allocation2 + $0xc0] sm:$0xf] %vm826, %v766
          %877 = vst.msk [vmem:[#allocation2 + $0xc4] sm:$0xf] %vm826, %v767
          %878 = vst.msk [vmem:[#allocation2 + $0xc8] sm:$0x1] %vm829, %v768
          %879 = vst.msk [vmem:[#allocation2 + $0xcc] sm:$0xf] %vm826, %v769
          %880 = vst.msk [vmem:[#allocation2 + $0xd0] sm:$0xf] %vm826, %v770
          %881 = vst.msk [vmem:[#allocation2 + $0xd4] sm:$0x1] %vm829, %v771
          %v882 = vld [vmem:[#allocation2] sm:$0xf]
          %v883 = vld [vmem:[#allocation2 + $0x4] sm:$0xf]
          %v884 = vld [vmem:[#allocation2 + $0xc] sm:$0xf]
          %v885 = vld [vmem:[#allocation2 + $0x10] sm:$0xf]
          %v886 = vld [vmem:[#allocation2 + $0x18] sm:$0xf]
          %v887 = vld [vmem:[#allocation2 + $0x1c] sm:$0xf]
          %v888 = vld [vmem:[#allocation2 + $0x24] sm:$0xf]
          %v889 = vld [vmem:[#allocation2 + $0x28] sm:$0xf]
          %v890 = vld [vmem:[#allocation2 + $0x30] sm:$0xf]
          %v891 = vld [vmem:[#allocation2 + $0x34] sm:$0xf]
          %v892 = vld [vmem:[#allocation2 + $0x3c] sm:$0xf]
          %v893 = vld [vmem:[#allocation2 + $0x40] sm:$0xf]
          %v894 = vld [vmem:[#allocation2 + $0x48] sm:$0xf]
          %v895 = vld [vmem:[#allocation2 + $0x4c] sm:$0xf]
          %v896 = vld [vmem:[#allocation2 + $0x54] sm:$0xf]
          %v897 = vld [vmem:[#allocation2 + $0x58] sm:$0xf]
          %v898 = vld [vmem:[#allocation2 + $0x60] sm:$0xf]
          %v899 = vld [vmem:[#allocation2 + $0x64] sm:$0xf]
          %v900 = vld [vmem:[#allocation2 + $0x6c] sm:$0xf]
          %v901 = vld [vmem:[#allocation2 + $0x70] sm:$0xf]
          %v902 = vld [vmem:[#allocation2 + $0x78] sm:$0xf]
          %v903 = vld [vmem:[#allocation2 + $0x7c] sm:$0xf]
          %v904 = vld [vmem:[#allocation2 + $0x84] sm:$0xf]
          %v905 = vld [vmem:[#allocation2 + $0x88] sm:$0xf]
          %v906 = vld [vmem:[#allocation2 + $0x90] sm:$0xf]
          %v907 = vld [vmem:[#allocation2 + $0x94] sm:$0xf]
          %v908 = vld [vmem:[#allocation2 + $0x9c] sm:$0xf]
          %v909 = vld [vmem:[#allocation2 + $0xa0] sm:$0xf]
          %v910 = vld [vmem:[#allocation2 + $0xa8] sm:$0xf]
          %v911 = vld [vmem:[#allocation2 + $0xac] sm:$0xf]
          %v912 = vld [vmem:[#allocation2 + $0xb4] sm:$0xf]
          %v913 = vld [vmem:[#allocation2 + $0xb8] sm:$0xf]
          %v914 = vld [vmem:[#allocation2 + $0x8] sm:$0x1]
          %v915 = vld [vmem:[#allocation2 + $0x14] sm:$0x1]
          %v916 = vld [vmem:[#allocation2 + $0x20] sm:$0x1]
          %v917 = vld [vmem:[#allocation2 + $0x2c] sm:$0x1]
          %v918 = vld [vmem:[#allocation2 + $0x38] sm:$0x1]
          %v919 = vld [vmem:[#allocation2 + $0x44] sm:$0x1]
          %v920 = vld [vmem:[#allocation2 + $0x50] sm:$0x1]
          %v921 = vld [vmem:[#allocation2 + $0x5c] sm:$0x1]
          %v922 = vld [vmem:[#allocation2 + $0x68] sm:$0x1]
          %v923 = vld [vmem:[#allocation2 + $0x74] sm:$0x1]
          %v924 = vld [vmem:[#allocation2 + $0x80] sm:$0x1]
          %v925 = vld [vmem:[#allocation2 + $0x8c] sm:$0x1]
          %v926 = vld [vmem:[#allocation2 + $0x98] sm:$0x1]
          %v927 = vld [vmem:[#allocation2 + $0xa4] sm:$0x1]
          %v928 = vld [vmem:[#allocation2 + $0xb0] sm:$0x1]
          %v929 = vld [vmem:[#allocation2 + $0xbc] sm:$0x1]
          %vm930 = vsmask.f32 3328
          %vm931 = vsmask.f32 7440
          %vm932 = vmor %vm930, %vm931
          %v934 = vshrl.u32 %v882, 16
          %v936 = vrot.slane %v934, 4
          %v937 = vshll.u32 %v882, 16
          %v939 = vrot.slane %v937, 5
          %v940 = vor.u32 %v936, %v939
          %v941 = vrot.slane %v940, 4
          %v943 = vshll.u32 %v883, 16
          %v945 = vrot.slane %v943, 5
          %v946 = vsel %vm932, %v941, %v945
          %v947 = vshrl.u32 %v883, 16
          %v949 = vrot.slane %v947, 4
          %v950 = vor.u32 %v949, %v945
          %v951 = vrot.slane %v950, 4
          %v953 = vshll.u32 %v914, 16
          %v955 = vrot.slane %v953, 5
          %v956 = vsel %vm932, %v951, %v955
          %v958 = vshrl.u32 %v884, 16
          %v960 = vrot.slane %v958, 4
          %v961 = vshll.u32 %v884, 16
          %v963 = vrot.slane %v961, 5
          %v964 = vor.u32 %v960, %v963
          %v965 = vrot.slane %v964, 4
          %v967 = vshll.u32 %v885, 16
          %v969 = vrot.slane %v967, 5
          %v970 = vsel %vm932, %v965, %v969
          %v971 = vshrl.u32 %v885, 16
          %v973 = vrot.slane %v971, 4
          %v974 = vor.u32 %v973, %v969
          %v975 = vrot.slane %v974, 4
          %v977 = vshll.u32 %v915, 16
          %v979 = vrot.slane %v977, 5
          %v980 = vsel %vm932, %v975, %v979
          %v982 = vshrl.u32 %v886, 16
          %v984 = vrot.slane %v982, 4
          %v985 = vshll.u32 %v886, 16
          %v987 = vrot.slane %v985, 5
          %v988 = vor.u32 %v984, %v987
          %v989 = vrot.slane %v988, 4
          %v991 = vshll.u32 %v887, 16
          %v993 = vrot.slane %v991, 5
          %v994 = vsel %vm932, %v989, %v993
          %v995 = vshrl.u32 %v887, 16
          %v997 = vrot.slane %v995, 4
          %v998 = vor.u32 %v997, %v993
          %v999 = vrot.slane %v998, 4
          %v1001 = vshll.u32 %v916, 16
          %v1003 = vrot.slane %v1001, 5
          %v1004 = vsel %vm932, %v999, %v1003
          %v1006 = vshrl.u32 %v888, 16
          %v1008 = vrot.slane %v1006, 4
          %v1009 = vshll.u32 %v888, 16
          %v1011 = vrot.slane %v1009, 5
          %v1012 = vor.u32 %v1008, %v1011
          %v1013 = vrot.slane %v1012, 4
          %v1015 = vshll.u32 %v889, 16
          %v1017 = vrot.slane %v1015, 5
          %v1018 = vsel %vm932, %v1013, %v1017
          %v1019 = vshrl.u32 %v889, 16
          %v1021 = vrot.slane %v1019, 4
          %v1022 = vor.u32 %v1021, %v1017
          %v1023 = vrot.slane %v1022, 4
          %v1025 = vshll.u32 %v917, 16
          %v1027 = vrot.slane %v1025, 5
          %v1028 = vsel %vm932, %v1023, %v1027
          %v1030 = vshrl.u32 %v890, 16
          %v1032 = vrot.slane %v1030, 4
          %v1033 = vshll.u32 %v890, 16
          %v1035 = vrot.slane %v1033, 5
          %v1036 = vor.u32 %v1032, %v1035
          %v1037 = vrot.slane %v1036, 4
          %v1039 = vshll.u32 %v891, 16
          %v1041 = vrot.slane %v1039, 5
          %v1042 = vsel %vm932, %v1037, %v1041
          %v1043 = vshrl.u32 %v891, 16
          %v1045 = vrot.slane %v1043, 4
          %v1046 = vor.u32 %v1045, %v1041
          %v1047 = vrot.slane %v1046, 4
          %v1049 = vshll.u32 %v918, 16
          %v1051 = vrot.slane %v1049, 5
          %v1052 = vsel %vm932, %v1047, %v1051
          %v1054 = vshrl.u32 %v892, 16
          %v1056 = vrot.slane %v1054, 4
          %v1057 = vshll.u32 %v892, 16
          %v1059 = vrot.slane %v1057, 5
          %v1060 = vor.u32 %v1056, %v1059
          %v1061 = vrot.slane %v1060, 4
          %v1063 = vshll.u32 %v893, 16
          %v1065 = vrot.slane %v1063, 5
          %v1066 = vsel %vm932, %v1061, %v1065
          %v1067 = vshrl.u32 %v893, 16
          %v1069 = vrot.slane %v1067, 4
          %v1070 = vor.u32 %v1069, %v1065
          %v1071 = vrot.slane %v1070, 4
          %v1073 = vshll.u32 %v919, 16
          %v1075 = vrot.slane %v1073, 5
          %v1076 = vsel %vm932, %v1071, %v1075
          %v1078 = vshrl.u32 %v894, 16
          %v1080 = vrot.slane %v1078, 4
          %v1081 = vshll.u32 %v894, 16
          %v1083 = vrot.slane %v1081, 5
          %v1084 = vor.u32 %v1080, %v1083
          %v1085 = vrot.slane %v1084, 4
          %v1087 = vshll.u32 %v895, 16
          %v1089 = vrot.slane %v1087, 5
          %v1090 = vsel %vm932, %v1085, %v1089
          %v1091 = vshrl.u32 %v895, 16
          %v1093 = vrot.slane %v1091, 4
          %v1094 = vor.u32 %v1093, %v1089
          %v1095 = vrot.slane %v1094, 4
          %v1097 = vshll.u32 %v920, 16
          %v1099 = vrot.slane %v1097, 5
          %v1100 = vsel %vm932, %v1095, %v1099
          %v1102 = vshrl.u32 %v896, 16
          %v1104 = vrot.slane %v1102, 4
          %v1105 = vshll.u32 %v896, 16
          %v1107 = vrot.slane %v1105, 5
          %v1108 = vor.u32 %v1104, %v1107
          %v1109 = vrot.slane %v1108, 4
          %v1111 = vshll.u32 %v897, 16
          %v1113 = vrot.slane %v1111, 5
          %v1114 = vsel %vm932, %v1109, %v1113
          %v1115 = vshrl.u32 %v897, 16
          %v1117 = vrot.slane %v1115, 4
          %v1118 = vor.u32 %v1117, %v1113
          %v1119 = vrot.slane %v1118, 4
          %v1121 = vshll.u32 %v921, 16
          %v1123 = vrot.slane %v1121, 5
          %v1124 = vsel %vm932, %v1119, %v1123
          %v1126 = vshrl.u32 %v898, 16
          %v1128 = vrot.slane %v1126, 4
          %v1129 = vshll.u32 %v898, 16
          %v1131 = vrot.slane %v1129, 5
          %v1132 = vor.u32 %v1128, %v1131
          %v1133 = vrot.slane %v1132, 4
          %v1135 = vshll.u32 %v899, 16
          %v1137 = vrot.slane %v1135, 5
          %v1138 = vsel %vm932, %v1133, %v1137
          %v1139 = vshrl.u32 %v899, 16
          %v1141 = vrot.slane %v1139, 4
          %v1142 = vor.u32 %v1141, %v1137
          %v1143 = vrot.slane %v1142, 4
          %v1145 = vshll.u32 %v922, 16
          %v1147 = vrot.slane %v1145, 5
          %v1148 = vsel %vm932, %v1143, %v1147
          %v1150 = vshrl.u32 %v900, 16
          %v1152 = vrot.slane %v1150, 4
          %v1153 = vshll.u32 %v900, 16
          %v1155 = vrot.slane %v1153, 5
          %v1156 = vor.u32 %v1152, %v1155
          %v1157 = vrot.slane %v1156, 4
          %v1159 = vshll.u32 %v901, 16
          %v1161 = vrot.slane %v1159, 5
          %v1162 = vsel %vm932, %v1157, %v1161
          %v1163 = vshrl.u32 %v901, 16
          %v1165 = vrot.slane %v1163, 4
          %v1166 = vor.u32 %v1165, %v1161
          %v1167 = vrot.slane %v1166, 4
          %v1169 = vshll.u32 %v923, 16
          %v1171 = vrot.slane %v1169, 5
          %v1172 = vsel %vm932, %v1167, %v1171
          %v1174 = vshrl.u32 %v902, 16
          %v1176 = vrot.slane %v1174, 4
          %v1177 = vshll.u32 %v902, 16
          %v1179 = vrot.slane %v1177, 5
          %v1180 = vor.u32 %v1176, %v1179
          %v1181 = vrot.slane %v1180, 4
          %v1183 = vshll.u32 %v903, 16
          %v1185 = vrot.slane %v1183, 5
          %v1186 = vsel %vm932, %v1181, %v1185
          %v1187 = vshrl.u32 %v903, 16
          %v1189 = vrot.slane %v1187, 4
          %v1190 = vor.u32 %v1189, %v1185
          %v1191 = vrot.slane %v1190, 4
          %v1193 = vshll.u32 %v924, 16
          %v1195 = vrot.slane %v1193, 5
          %v1196 = vsel %vm932, %v1191, %v1195
          %v1198 = vshrl.u32 %v904, 16
          %v1200 = vrot.slane %v1198, 4
          %v1201 = vshll.u32 %v904, 16
          %v1203 = vrot.slane %v1201, 5
          %v1204 = vor.u32 %v1200, %v1203
          %v1205 = vrot.slane %v1204, 4
          %v1207 = vshll.u32 %v905, 16
          %v1209 = vrot.slane %v1207, 5
          %v1210 = vsel %vm932, %v1205, %v1209
          %v1211 = vshrl.u32 %v905, 16
          %v1213 = vrot.slane %v1211, 4
          %v1214 = vor.u32 %v1213, %v1209
          %v1215 = vrot.slane %v1214, 4
          %v1217 = vshll.u32 %v925, 16
          %v1219 = vrot.slane %v1217, 5
          %v1220 = vsel %vm932, %v1215, %v1219
          %v1222 = vshrl.u32 %v906, 16
          %v1224 = vrot.slane %v1222, 4
          %v1225 = vshll.u32 %v906, 16
          %v1227 = vrot.slane %v1225, 5
          %v1228 = vor.u32 %v1224, %v1227
          %v1229 = vrot.slane %v1228, 4
          %v1231 = vshll.u32 %v907, 16
          %v1233 = vrot.slane %v1231, 5
          %v1234 = vsel %vm932, %v1229, %v1233
          %v1235 = vshrl.u32 %v907, 16
          %v1237 = vrot.slane %v1235, 4
          %v1238 = vor.u32 %v1237, %v1233
          %v1239 = vrot.slane %v1238, 4
          %v1241 = vshll.u32 %v926, 16
          %v1243 = vrot.slane %v1241, 5
          %v1244 = vsel %vm932, %v1239, %v1243
          %v1246 = vshrl.u32 %v908, 16
          %v1248 = vrot.slane %v1246, 4
          %v1249 = vshll.u32 %v908, 16
          %v1251 = vrot.slane %v1249, 5
          %v1252 = vor.u32 %v1248, %v1251
          %v1253 = vrot.slane %v1252, 4
          %v1255 = vshll.u32 %v909, 16
          %v1257 = vrot.slane %v1255, 5
          %v1258 = vsel %vm932, %v1253, %v1257
          %v1259 = vshrl.u32 %v909, 16
          %v1261 = vrot.slane %v1259, 4
          %v1262 = vor.u32 %v1261, %v1257
          %v1263 = vrot.slane %v1262, 4
          %v1265 = vshll.u32 %v927, 16
          %v1267 = vrot.slane %v1265, 5
          %v1268 = vsel %vm932, %v1263, %v1267
          %v1270 = vshrl.u32 %v910, 16
          %v1272 = vrot.slane %v1270, 4
          %v1273 = vshll.u32 %v910, 16
          %v1275 = vrot.slane %v1273, 5
          %v1276 = vor.u32 %v1272, %v1275
          %v1277 = vrot.slane %v1276, 4
          %v1279 = vshll.u32 %v911, 16
          %v1281 = vrot.slane %v1279, 5
          %v1282 = vsel %vm932, %v1277, %v1281
          %v1283 = vshrl.u32 %v911, 16
          %v1285 = vrot.slane %v1283, 4
          %v1286 = vor.u32 %v1285, %v1281
          %v1287 = vrot.slane %v1286, 4
          %v1289 = vshll.u32 %v928, 16
          %v1291 = vrot.slane %v1289, 5
          %v1292 = vsel %vm932, %v1287, %v1291
          %v1294 = vshrl.u32 %v912, 16
          %v1296 = vrot.slane %v1294, 4
          %v1297 = vshll.u32 %v912, 16
          %v1299 = vrot.slane %v1297, 5
          %v1300 = vor.u32 %v1296, %v1299
          %v1301 = vrot.slane %v1300, 4
          %v1303 = vshll.u32 %v913, 16
          %v1305 = vrot.slane %v1303, 5
          %v1306 = vsel %vm932, %v1301, %v1305
          %v1307 = vshrl.u32 %v913, 16
          %v1309 = vrot.slane %v1307, 4
          %v1310 = vor.u32 %v1309, %v1305
          %v1311 = vrot.slane %v1310, 4
          %v1313 = vshll.u32 %v929, 16
          %v1315 = vrot.slane %v1313, 5
          %v1316 = vsel %vm932, %v1311, %v1315
          %v1317 = vld [vmem:[#allocation2] sm:$0xe]
          %v1318 = vld [vmem:[#allocation2 + $0xc] sm:$0xe]
          %v1319 = vld [vmem:[#allocation2 + $0x18] sm:$0xe]
          %v1320 = vld [vmem:[#allocation2 + $0x24] sm:$0xe]
          %v1321 = vld [vmem:[#allocation2 + $0x30] sm:$0xe]
          %v1322 = vld [vmem:[#allocation2 + $0x3c] sm:$0xe]
          %v1323 = vld [vmem:[#allocation2 + $0x48] sm:$0xe]
          %v1324 = vld [vmem:[#allocation2 + $0x54] sm:$0xe]
          %v1325 = vld [vmem:[#allocation2 + $0x60] sm:$0xe]
          %v1326 = vld [vmem:[#allocation2 + $0x6c] sm:$0xe]
          %v1327 = vld [vmem:[#allocation2 + $0x78] sm:$0xe]
          %v1328 = vld [vmem:[#allocation2 + $0x84] sm:$0xe]
          %v1329 = vld [vmem:[#allocation2 + $0x90] sm:$0xe]
          %v1330 = vld [vmem:[#allocation2 + $0x9c] sm:$0xe]
          %v1331 = vld [vmem:[#allocation2 + $0xa8] sm:$0xe]
          %v1332 = vld [vmem:[#allocation2 + $0xb4] sm:$0xe]
          %vm1381 = vcmask 1042432
          %vm1382 = vcmask 1046532
          %vm1383 = vmor %vm1381, %vm1382
          %v1384 = vrot.slane %v1317, 5
          %v1385 = vrot.slane %v1384, 4
          %v1386 = vrot.slane %v883, 5
          %v1387 = vsel %vm1383, %v1385, %v1386
          %v1388 = vrot.slane %v1386, 4
          %v1389 = vrot.slane %v914, 5
          %v1390 = vsel %vm1383, %v1388, %v1389
          %v1391 = vrot.slane %v1318, 5
          %v1392 = vrot.slane %v1391, 4
          %v1393 = vrot.slane %v885, 5
          %v1394 = vsel %vm1383, %v1392, %v1393
          %v1395 = vrot.slane %v1393, 4
          %v1396 = vrot.slane %v915, 5
          %v1397 = vsel %vm1383, %v1395, %v1396
          %v1398 = vrot.slane %v1319, 5
          %v1399 = vrot.slane %v1398, 4
          %v1400 = vrot.slane %v887, 5
          %v1401 = vsel %vm1383, %v1399, %v1400
          %v1402 = vrot.slane %v1400, 4
          %v1403 = vrot.slane %v916, 5
          %v1404 = vsel %vm1383, %v1402, %v1403
          %v1405 = vrot.slane %v1320, 5
          %v1406 = vrot.slane %v1405, 4
          %v1407 = vrot.slane %v889, 5
          %v1408 = vsel %vm1383, %v1406, %v1407
          %v1409 = vrot.slane %v1407, 4
          %v1410 = vrot.slane %v917, 5
          %v1411 = vsel %vm1383, %v1409, %v1410
          %v1412 = vrot.slane %v1321, 5
          %v1413 = vrot.slane %v1412, 4
          %v1414 = vrot.slane %v891, 5
          %v1415 = vsel %vm1383, %v1413, %v1414
          %v1416 = vrot.slane %v1414, 4
          %v1417 = vrot.slane %v918, 5
          %v1418 = vsel %vm1383, %v1416, %v1417
          %v1419 = vrot.slane %v1322, 5
          %v1420 = vrot.slane %v1419, 4
          %v1421 = vrot.slane %v893, 5
          %v1422 = vsel %vm1383, %v1420, %v1421
          %v1423 = vrot.slane %v1421, 4
          %v1424 = vrot.slane %v919, 5
          %v1425 = vsel %vm1383, %v1423, %v1424
          %v1426 = vrot.slane %v1323, 5
          %v1427 = vrot.slane %v1426, 4
          %v1428 = vrot.slane %v895, 5
          %v1429 = vsel %vm1383, %v1427, %v1428
          %v1430 = vrot.slane %v1428, 4
          %v1431 = vrot.slane %v920, 5
          %v1432 = vsel %vm1383, %v1430, %v1431
          %v1433 = vrot.slane %v1324, 5
          %v1434 = vrot.slane %v1433, 4
          %v1435 = vrot.slane %v897, 5
          %v1436 = vsel %vm1383, %v1434, %v1435
          %v1437 = vrot.slane %v1435, 4
          %v1438 = vrot.slane %v921, 5
          %v1439 = vsel %vm1383, %v1437, %v1438
          %v1440 = vrot.slane %v1325, 5
          %v1441 = vrot.slane %v1440, 4
          %v1442 = vrot.slane %v899, 5
          %v1443 = vsel %vm1383, %v1441, %v1442
          %v1444 = vrot.slane %v1442, 4
          %v1445 = vrot.slane %v922, 5
          %v1446 = vsel %vm1383, %v1444, %v1445
          %v1447 = vrot.slane %v1326, 5
          %v1448 = vrot.slane %v1447, 4
          %v1449 = vrot.slane %v901, 5
          %v1450 = vsel %vm1383, %v1448, %v1449
          %v1451 = vrot.slane %v1449, 4
          %v1452 = vrot.slane %v923, 5
          %v1453 = vsel %vm1383, %v1451, %v1452
          %v1454 = vrot.slane %v1327, 5
          %v1455 = vrot.slane %v1454, 4
          %v1456 = vrot.slane %v903, 5
          %v1457 = vsel %vm1383, %v1455, %v1456
          %v1458 = vrot.slane %v1456, 4
          %v1459 = vrot.slane %v924, 5
          %v1460 = vsel %vm1383, %v1458, %v1459
          %v1461 = vrot.slane %v1328, 5
          %v1462 = vrot.slane %v1461, 4
          %v1463 = vrot.slane %v905, 5
          %v1464 = vsel %vm1383, %v1462, %v1463
          %v1465 = vrot.slane %v1463, 4
          %v1466 = vrot.slane %v925, 5
          %v1467 = vsel %vm1383, %v1465, %v1466
          %v1468 = vrot.slane %v1329, 5
          %v1469 = vrot.slane %v1468, 4
          %v1470 = vrot.slane %v907, 5
          %v1471 = vsel %vm1383, %v1469, %v1470
          %v1472 = vrot.slane %v1470, 4
          %v1473 = vrot.slane %v926, 5
          %v1474 = vsel %vm1383, %v1472, %v1473
          %v1475 = vrot.slane %v1330, 5
          %v1476 = vrot.slane %v1475, 4
          %v1477 = vrot.slane %v909, 5
          %v1478 = vsel %vm1383, %v1476, %v1477
          %v1479 = vrot.slane %v1477, 4
          %v1480 = vrot.slane %v927, 5
          %v1481 = vsel %vm1383, %v1479, %v1480
          %v1482 = vrot.slane %v1331, 5
          %v1483 = vrot.slane %v1482, 4
          %v1484 = vrot.slane %v911, 5
          %v1485 = vsel %vm1383, %v1483, %v1484
          %v1486 = vrot.slane %v1484, 4
          %v1487 = vrot.slane %v928, 5
          %v1488 = vsel %vm1383, %v1486, %v1487
          %v1489 = vrot.slane %v1332, 5
          %v1490 = vrot.slane %v1489, 4
          %v1491 = vrot.slane %v913, 5
          %v1492 = vsel %vm1383, %v1490, %v1491
          %v1493 = vrot.slane %v1491, 4
          %v1494 = vrot.slane %v929, 5
          %v1495 = vsel %vm1383, %v1493, %v1494
          %s1496 = scalar_lea.vmem [#allocation2], 12
          %v1497 = vld [vmem:[%s1496] sm:$0xf]
          %v1498 = vld [vmem:[%s1496 + $0x4] sm:$0xf]
          %v1499 = vld [vmem:[%s1496 + $0xc] sm:$0xf]
          %v1500 = vld [vmem:[%s1496 + $0x10] sm:$0xf]
          %v1501 = vld [vmem:[%s1496 + $0x18] sm:$0xf]
          %v1502 = vld [vmem:[%s1496 + $0x1c] sm:$0xf]
          %v1503 = vld [vmem:[%s1496 + $0x24] sm:$0xf]
          %v1504 = vld [vmem:[%s1496 + $0x28] sm:$0xf]
          %v1505 = vld [vmem:[%s1496 + $0x30] sm:$0xf]
          %v1506 = vld [vmem:[%s1496 + $0x34] sm:$0xf]
          %v1507 = vld [vmem:[%s1496 + $0x3c] sm:$0xf]
          %v1508 = vld [vmem:[%s1496 + $0x40] sm:$0xf]
          %v1509 = vld [vmem:[%s1496 + $0x48] sm:$0xf]
          %v1510 = vld [vmem:[%s1496 + $0x4c] sm:$0xf]
          %v1511 = vld [vmem:[%s1496 + $0x54] sm:$0xf]
          %v1512 = vld [vmem:[%s1496 + $0x58] sm:$0xf]
          %v1513 = vld [vmem:[%s1496 + $0x60] sm:$0xf]
          %v1514 = vld [vmem:[%s1496 + $0x64] sm:$0xf]
          %v1515 = vld [vmem:[%s1496 + $0x6c] sm:$0xf]
          %v1516 = vld [vmem:[%s1496 + $0x70] sm:$0xf]
          %v1517 = vld [vmem:[%s1496 + $0x78] sm:$0xf]
          %v1518 = vld [vmem:[%s1496 + $0x7c] sm:$0xf]
          %v1519 = vld [vmem:[%s1496 + $0x84] sm:$0xf]
          %v1520 = vld [vmem:[%s1496 + $0x88] sm:$0xf]
          %v1521 = vld [vmem:[%s1496 + $0x90] sm:$0xf]
          %v1522 = vld [vmem:[%s1496 + $0x94] sm:$0xf]
          %v1523 = vld [vmem:[%s1496 + $0x9c] sm:$0xf]
          %v1524 = vld [vmem:[%s1496 + $0xa0] sm:$0xf]
          %v1525 = vld [vmem:[%s1496 + $0xa8] sm:$0xf]
          %v1526 = vld [vmem:[%s1496 + $0xac] sm:$0xf]
          %v1527 = vld [vmem:[%s1496 + $0xb4] sm:$0xf]
          %v1528 = vld [vmem:[%s1496 + $0xb8] sm:$0xf]
          %v1529 = vld [vmem:[%s1496 + $0x8] sm:$0x1]
          %v1530 = vld [vmem:[%s1496 + $0x14] sm:$0x1]
          %v1531 = vld [vmem:[%s1496 + $0x20] sm:$0x1]
          %v1532 = vld [vmem:[%s1496 + $0x2c] sm:$0x1]
          %v1533 = vld [vmem:[%s1496 + $0x38] sm:$0x1]
          %v1534 = vld [vmem:[%s1496 + $0x44] sm:$0x1]
          %v1535 = vld [vmem:[%s1496 + $0x50] sm:$0x1]
          %v1536 = vld [vmem:[%s1496 + $0x5c] sm:$0x1]
          %v1537 = vld [vmem:[%s1496 + $0x68] sm:$0x1]
          %v1538 = vld [vmem:[%s1496 + $0x74] sm:$0x1]
          %v1539 = vld [vmem:[%s1496 + $0x80] sm:$0x1]
          %v1540 = vld [vmem:[%s1496 + $0x8c] sm:$0x1]
          %v1541 = vld [vmem:[%s1496 + $0x98] sm:$0x1]
          %v1542 = vld [vmem:[%s1496 + $0xa4] sm:$0x1]
          %v1543 = vld [vmem:[%s1496 + $0xb0] sm:$0x1]
          %v1544 = vld [vmem:[%s1496 + $0xbc] sm:$0x1]
          %v1546 = vshrl.u32 %v1497, 16
          %v1548 = vrot.slane %v1546, 4
          %v1549 = vshll.u32 %v1497, 16
          %v1551 = vrot.slane %v1549, 5
          %v1552 = vor.u32 %v1548, %v1551
          %v1553 = vrot.slane %v1552, 4
          %v1555 = vshll.u32 %v1498, 16
          %v1557 = vrot.slane %v1555, 5
          %v1558 = vsel %vm932, %v1553, %v1557
          %v1559 = vshrl.u32 %v1498, 16
          %v1561 = vrot.slane %v1559, 4
          %v1562 = vor.u32 %v1561, %v1557
          %v1563 = vrot.slane %v1562, 4
          %v1565 = vshll.u32 %v1529, 16
          %v1567 = vrot.slane %v1565, 5
          %v1568 = vsel %vm932, %v1563, %v1567
          %v1570 = vshrl.u32 %v1499, 16
          %v1572 = vrot.slane %v1570, 4
          %v1573 = vshll.u32 %v1499, 16
          %v1575 = vrot.slane %v1573, 5
          %v1576 = vor.u32 %v1572, %v1575
          %v1577 = vrot.slane %v1576, 4
          %v1579 = vshll.u32 %v1500, 16
          %v1581 = vrot.slane %v1579, 5
          %v1582 = vsel %vm932, %v1577, %v1581
          %v1583 = vshrl.u32 %v1500, 16
          %v1585 = vrot.slane %v1583, 4
          %v1586 = vor.u32 %v1585, %v1581
          %v1587 = vrot.slane %v1586, 4
          %v1589 = vshll.u32 %v1530, 16
          %v1591 = vrot.slane %v1589, 5
          %v1592 = vsel %vm932, %v1587, %v1591
          %v1594 = vshrl.u32 %v1501, 16
          %v1596 = vrot.slane %v1594, 4
          %v1597 = vshll.u32 %v1501, 16
          %v1599 = vrot.slane %v1597, 5
          %v1600 = vor.u32 %v1596, %v1599
          %v1601 = vrot.slane %v1600, 4
          %v1603 = vshll.u32 %v1502, 16
          %v1605 = vrot.slane %v1603, 5
          %v1606 = vsel %vm932, %v1601, %v1605
          %v1607 = vshrl.u32 %v1502, 16
          %v1609 = vrot.slane %v1607, 4
          %v1610 = vor.u32 %v1609, %v1605
          %v1611 = vrot.slane %v1610, 4
          %v1613 = vshll.u32 %v1531, 16
          %v1615 = vrot.slane %v1613, 5
          %v1616 = vsel %vm932, %v1611, %v1615
          %v1618 = vshrl.u32 %v1503, 16
          %v1620 = vrot.slane %v1618, 4
          %v1621 = vshll.u32 %v1503, 16
          %v1623 = vrot.slane %v1621, 5
          %v1624 = vor.u32 %v1620, %v1623
          %v1625 = vrot.slane %v1624, 4
          %v1627 = vshll.u32 %v1504, 16
          %v1629 = vrot.slane %v1627, 5
          %v1630 = vsel %vm932, %v1625, %v1629
          %v1631 = vshrl.u32 %v1504, 16
          %v1633 = vrot.slane %v1631, 4
          %v1634 = vor.u32 %v1633, %v1629
          %v1635 = vrot.slane %v1634, 4
          %v1637 = vshll.u32 %v1532, 16
          %v1639 = vrot.slane %v1637, 5
          %v1640 = vsel %vm932, %v1635, %v1639
          %v1642 = vshrl.u32 %v1505, 16
          %v1644 = vrot.slane %v1642, 4
          %v1645 = vshll.u32 %v1505, 16
          %v1647 = vrot.slane %v1645, 5
          %v1648 = vor.u32 %v1644, %v1647
          %v1649 = vrot.slane %v1648, 4
          %v1651 = vshll.u32 %v1506, 16
          %v1653 = vrot.slane %v1651, 5
          %v1654 = vsel %vm932, %v1649, %v1653
          %v1655 = vshrl.u32 %v1506, 16
          %v1657 = vrot.slane %v1655, 4
          %v1658 = vor.u32 %v1657, %v1653
          %v1659 = vrot.slane %v1658, 4
          %v1661 = vshll.u32 %v1533, 16
          %v1663 = vrot.slane %v1661, 5
          %v1664 = vsel %vm932, %v1659, %v1663
          %v1666 = vshrl.u32 %v1507, 16
          %v1668 = vrot.slane %v1666, 4
          %v1669 = vshll.u32 %v1507, 16
          %v1671 = vrot.slane %v1669, 5
          %v1672 = vor.u32 %v1668, %v1671
          %v1673 = vrot.slane %v1672, 4
          %v1675 = vshll.u32 %v1508, 16
          %v1677 = vrot.slane %v1675, 5
          %v1678 = vsel %vm932, %v1673, %v1677
          %v1679 = vshrl.u32 %v1508, 16
          %v1681 = vrot.slane %v1679, 4
          %v1682 = vor.u32 %v1681, %v1677
          %v1683 = vrot.slane %v1682, 4
          %v1685 = vshll.u32 %v1534, 16
          %v1687 = vrot.slane %v1685, 5
          %v1688 = vsel %vm932, %v1683, %v1687
          %v1690 = vshrl.u32 %v1509, 16
          %v1692 = vrot.slane %v1690, 4
          %v1693 = vshll.u32 %v1509, 16
          %v1695 = vrot.slane %v1693, 5
          %v1696 = vor.u32 %v1692, %v1695
          %v1697 = vrot.slane %v1696, 4
          %v1699 = vshll.u32 %v1510, 16
          %v1701 = vrot.slane %v1699, 5
          %v1702 = vsel %vm932, %v1697, %v1701
          %v1703 = vshrl.u32 %v1510, 16
          %v1705 = vrot.slane %v1703, 4
          %v1706 = vor.u32 %v1705, %v1701
          %v1707 = vrot.slane %v1706, 4
          %v1709 = vshll.u32 %v1535, 16
          %v1711 = vrot.slane %v1709, 5
          %v1712 = vsel %vm932, %v1707, %v1711
          %v1714 = vshrl.u32 %v1511, 16
          %v1716 = vrot.slane %v1714, 4
          %v1717 = vshll.u32 %v1511, 16
          %v1719 = vrot.slane %v1717, 5
          %v1720 = vor.u32 %v1716, %v1719
          %v1721 = vrot.slane %v1720, 4
          %v1723 = vshll.u32 %v1512, 16
          %v1725 = vrot.slane %v1723, 5
          %v1726 = vsel %vm932, %v1721, %v1725
          %v1727 = vshrl.u32 %v1512, 16
          %v1729 = vrot.slane %v1727, 4
          %v1730 = vor.u32 %v1729, %v1725
          %v1731 = vrot.slane %v1730, 4
          %v1733 = vshll.u32 %v1536, 16
          %v1735 = vrot.slane %v1733, 5
          %v1736 = vsel %vm932, %v1731, %v1735
          %v1738 = vshrl.u32 %v1513, 16
          %v1740 = vrot.slane %v1738, 4
          %v1741 = vshll.u32 %v1513, 16
          %v1743 = vrot.slane %v1741, 5
          %v1744 = vor.u32 %v1740, %v1743
          %v1745 = vrot.slane %v1744, 4
          %v1747 = vshll.u32 %v1514, 16
          %v1749 = vrot.slane %v1747, 5
          %v1750 = vsel %vm932, %v1745, %v1749
          %v1751 = vshrl.u32 %v1514, 16
          %v1753 = vrot.slane %v1751, 4
          %v1754 = vor.u32 %v1753, %v1749
          %v1755 = vrot.slane %v1754, 4
          %v1757 = vshll.u32 %v1537, 16
          %v1759 = vrot.slane %v1757, 5
          %v1760 = vsel %vm932, %v1755, %v1759
          %v1762 = vshrl.u32 %v1515, 16
          %v1764 = vrot.slane %v1762, 4
          %v1765 = vshll.u32 %v1515, 16
          %v1767 = vrot.slane %v1765, 5
          %v1768 = vor.u32 %v1764, %v1767
          %v1769 = vrot.slane %v1768, 4
          %v1771 = vshll.u32 %v1516, 16
          %v1773 = vrot.slane %v1771, 5
          %v1774 = vsel %vm932, %v1769, %v1773
          %v1775 = vshrl.u32 %v1516, 16
          %v1777 = vrot.slane %v1775, 4
          %v1778 = vor.u32 %v1777, %v1773
          %v1779 = vrot.slane %v1778, 4
          %v1781 = vshll.u32 %v1538, 16
          %v1783 = vrot.slane %v1781, 5
          %v1784 = vsel %vm932, %v1779, %v1783
          %v1786 = vshrl.u32 %v1517, 16
          %v1788 = vrot.slane %v1786, 4
          %v1789 = vshll.u32 %v1517, 16
          %v1791 = vrot.slane %v1789, 5
          %v1792 = vor.u32 %v1788, %v1791
          %v1793 = vrot.slane %v1792, 4
          %v1795 = vshll.u32 %v1518, 16
          %v1797 = vrot.slane %v1795, 5
          %v1798 = vsel %vm932, %v1793, %v1797
          %v1799 = vshrl.u32 %v1518, 16
          %v1801 = vrot.slane %v1799, 4
          %v1802 = vor.u32 %v1801, %v1797
          %v1803 = vrot.slane %v1802, 4
          %v1805 = vshll.u32 %v1539, 16
          %v1807 = vrot.slane %v1805, 5
          %v1808 = vsel %vm932, %v1803, %v1807
          %v1810 = vshrl.u32 %v1519, 16
          %v1812 = vrot.slane %v1810, 4
          %v1813 = vshll.u32 %v1519, 16
          %v1815 = vrot.slane %v1813, 5
          %v1816 = vor.u32 %v1812, %v1815
          %v1817 = vrot.slane %v1816, 4
          %v1819 = vshll.u32 %v1520, 16
          %v1821 = vrot.slane %v1819, 5
          %v1822 = vsel %vm932, %v1817, %v1821
          %v1823 = vshrl.u32 %v1520, 16
          %v1825 = vrot.slane %v1823, 4
          %v1826 = vor.u32 %v1825, %v1821
          %v1827 = vrot.slane %v1826, 4
          %v1829 = vshll.u32 %v1540, 16
          %v1831 = vrot.slane %v1829, 5
          %v1832 = vsel %vm932, %v1827, %v1831
          %v1834 = vshrl.u32 %v1521, 16
          %v1836 = vrot.slane %v1834, 4
          %v1837 = vshll.u32 %v1521, 16
          %v1839 = vrot.slane %v1837, 5
          %v1840 = vor.u32 %v1836, %v1839
          %v1841 = vrot.slane %v1840, 4
          %v1843 = vshll.u32 %v1522, 16
          %v1845 = vrot.slane %v1843, 5
          %v1846 = vsel %vm932, %v1841, %v1845
          %v1847 = vshrl.u32 %v1522, 16
          %v1849 = vrot.slane %v1847, 4
          %v1850 = vor.u32 %v1849, %v1845
          %v1851 = vrot.slane %v1850, 4
          %v1853 = vshll.u32 %v1541, 16
          %v1855 = vrot.slane %v1853, 5
          %v1856 = vsel %vm932, %v1851, %v1855
          %v1858 = vshrl.u32 %v1523, 16
          %v1860 = vrot.slane %v1858, 4
          %v1861 = vshll.u32 %v1523, 16
          %v1863 = vrot.slane %v1861, 5
          %v1864 = vor.u32 %v1860, %v1863
          %v1865 = vrot.slane %v1864, 4
          %v1867 = vshll.u32 %v1524, 16
          %v1869 = vrot.slane %v1867, 5
          %v1870 = vsel %vm932, %v1865, %v1869
          %v1871 = vshrl.u32 %v1524, 16
          %v1873 = vrot.slane %v1871, 4
          %v1874 = vor.u32 %v1873, %v1869
          %v1875 = vrot.slane %v1874, 4
          %v1877 = vshll.u32 %v1542, 16
          %v1879 = vrot.slane %v1877, 5
          %v1880 = vsel %vm932, %v1875, %v1879
          %v1882 = vshrl.u32 %v1525, 16
          %v1884 = vrot.slane %v1882, 4
          %v1885 = vshll.u32 %v1525, 16
          %v1887 = vrot.slane %v1885, 5
          %v1888 = vor.u32 %v1884, %v1887
          %v1889 = vrot.slane %v1888, 4
          %v1891 = vshll.u32 %v1526, 16
          %v1893 = vrot.slane %v1891, 5
          %v1894 = vsel %vm932, %v1889, %v1893
          %v1895 = vshrl.u32 %v1526, 16
          %v1897 = vrot.slane %v1895, 4
          %v1898 = vor.u32 %v1897, %v1893
          %v1899 = vrot.slane %v1898, 4
          %v1901 = vshll.u32 %v1543, 16
          %v1903 = vrot.slane %v1901, 5
          %v1904 = vsel %vm932, %v1899, %v1903
          %v1906 = vshrl.u32 %v1527, 16
          %v1908 = vrot.slane %v1906, 4
          %v1909 = vshll.u32 %v1527, 16
          %v1911 = vrot.slane %v1909, 5
          %v1912 = vor.u32 %v1908, %v1911
          %v1913 = vrot.slane %v1912, 4
          %v1915 = vshll.u32 %v1528, 16
          %v1917 = vrot.slane %v1915, 5
          %v1918 = vsel %vm932, %v1913, %v1917
          %v1919 = vshrl.u32 %v1528, 16
          %v1921 = vrot.slane %v1919, 4
          %v1922 = vor.u32 %v1921, %v1917
          %v1923 = vrot.slane %v1922, 4
          %v1925 = vshll.u32 %v1544, 16
          %v1927 = vrot.slane %v1925, 5
          %v1928 = vsel %vm932, %v1923, %v1927
          %v1929 = vld [vmem:[%s1496] sm:$0xe]
          %v1930 = vld [vmem:[%s1496 + $0xc] sm:$0xe]
          %v1931 = vld [vmem:[%s1496 + $0x18] sm:$0xe]
          %v1932 = vld [vmem:[%s1496 + $0x24] sm:$0xe]
          %v1933 = vld [vmem:[%s1496 + $0x30] sm:$0xe]
          %v1934 = vld [vmem:[%s1496 + $0x3c] sm:$0xe]
          %v1935 = vld [vmem:[%s1496 + $0x48] sm:$0xe]
          %v1936 = vld [vmem:[%s1496 + $0x54] sm:$0xe]
          %v1937 = vld [vmem:[%s1496 + $0x60] sm:$0xe]
          %v1938 = vld [vmem:[%s1496 + $0x6c] sm:$0xe]
          %v1939 = vld [vmem:[%s1496 + $0x78] sm:$0xe]
          %v1940 = vld [vmem:[%s1496 + $0x84] sm:$0xe]
          %v1941 = vld [vmem:[%s1496 + $0x90] sm:$0xe]
          %v1942 = vld [vmem:[%s1496 + $0x9c] sm:$0xe]
          %v1943 = vld [vmem:[%s1496 + $0xa8] sm:$0xe]
          %v1944 = vld [vmem:[%s1496 + $0xb4] sm:$0xe]
          %v1993 = vrot.slane %v1929, 5
          %v1994 = vrot.slane %v1993, 4
          %v1995 = vrot.slane %v1498, 5
          %v1996 = vsel %vm1383, %v1994, %v1995
          %v1997 = vrot.slane %v1995, 4
          %v1998 = vrot.slane %v1529, 5
          %v1999 = vsel %vm1383, %v1997, %v1998
          %v2000 = vrot.slane %v1930, 5
          %v2001 = vrot.slane %v2000, 4
          %v2002 = vrot.slane %v1500, 5
          %v2003 = vsel %vm1383, %v2001, %v2002
          %v2004 = vrot.slane %v2002, 4
          %v2005 = vrot.slane %v1530, 5
          %v2006 = vsel %vm1383, %v2004, %v2005
          %v2007 = vrot.slane %v1931, 5
          %v2008 = vrot.slane %v2007, 4
          %v2009 = vrot.slane %v1502, 5
          %v2010 = vsel %vm1383, %v2008, %v2009
          %v2011 = vrot.slane %v2009, 4
          %v2012 = vrot.slane %v1531, 5
          %v2013 = vsel %vm1383, %v2011, %v2012
          %v2014 = vrot.slane %v1932, 5
          %v2015 = vrot.slane %v2014, 4
          %v2016 = vrot.slane %v1504, 5
          %v2017 = vsel %vm1383, %v2015, %v2016
          %v2018 = vrot.slane %v2016, 4
          %v2019 = vrot.slane %v1532, 5
          %v2020 = vsel %vm1383, %v2018, %v2019
          %v2021 = vrot.slane %v1933, 5
          %v2022 = vrot.slane %v2021, 4
          %v2023 = vrot.slane %v1506, 5
          %v2024 = vsel %vm1383, %v2022, %v2023
          %v2025 = vrot.slane %v2023, 4
          %v2026 = vrot.slane %v1533, 5
          %v2027 = vsel %vm1383, %v2025, %v2026
          %v2028 = vrot.slane %v1934, 5
          %v2029 = vrot.slane %v2028, 4
          %v2030 = vrot.slane %v1508, 5
          %v2031 = vsel %vm1383, %v2029, %v2030
          %v2032 = vrot.slane %v2030, 4
          %v2033 = vrot.slane %v1534, 5
          %v2034 = vsel %vm1383, %v2032, %v2033
          %v2035 = vrot.slane %v1935, 5
          %v2036 = vrot.slane %v2035, 4
          %v2037 = vrot.slane %v1510, 5
          %v2038 = vsel %vm1383, %v2036, %v2037
          %v2039 = vrot.slane %v2037, 4
          %v2040 = vrot.slane %v1535, 5
          %v2041 = vsel %vm1383, %v2039, %v2040
          %v2042 = vrot.slane %v1936, 5
          %v2043 = vrot.slane %v2042, 4
          %v2044 = vrot.slane %v1512, 5
          %v2045 = vsel %vm1383, %v2043, %v2044
          %v2046 = vrot.slane %v2044, 4
          %v2047 = vrot.slane %v1536, 5
          %v2048 = vsel %vm1383, %v2046, %v2047
          %v2049 = vrot.slane %v1937, 5
          %v2050 = vrot.slane %v2049, 4
          %v2051 = vrot.slane %v1514, 5
          %v2052 = vsel %vm1383, %v2050, %v2051
          %v2053 = vrot.slane %v2051, 4
          %v2054 = vrot.slane %v1537, 5
          %v2055 = vsel %vm1383, %v2053, %v2054
          %v2056 = vrot.slane %v1938, 5
          %v2057 = vrot.slane %v2056, 4
          %v2058 = vrot.slane %v1516, 5
          %v2059 = vsel %vm1383, %v2057, %v2058
          %v2060 = vrot.slane %v2058, 4
          %v2061 = vrot.slane %v1538, 5
          %v2062 = vsel %vm1383, %v2060, %v2061
          %v2063 = vrot.slane %v1939, 5
          %v2064 = vrot.slane %v2063, 4
          %v2065 = vrot.slane %v1518, 5
          %v2066 = vsel %vm1383, %v2064, %v2065
          %v2067 = vrot.slane %v2065, 4
          %v2068 = vrot.slane %v1539, 5
          %v2069 = vsel %vm1383, %v2067, %v2068
          %v2070 = vrot.slane %v1940, 5
          %v2071 = vrot.slane %v2070, 4
          %v2072 = vrot.slane %v1520, 5
          %v2073 = vsel %vm1383, %v2071, %v2072
          %v2074 = vrot.slane %v2072, 4
          %v2075 = vrot.slane %v1540, 5
          %v2076 = vsel %vm1383, %v2074, %v2075
          %v2077 = vrot.slane %v1941, 5
          %v2078 = vrot.slane %v2077, 4
          %v2079 = vrot.slane %v1522, 5
          %v2080 = vsel %vm1383, %v2078, %v2079
          %v2081 = vrot.slane %v2079, 4
          %v2082 = vrot.slane %v1541, 5
          %v2083 = vsel %vm1383, %v2081, %v2082
          %v2084 = vrot.slane %v1942, 5
          %v2085 = vrot.slane %v2084, 4
          %v2086 = vrot.slane %v1524, 5
          %v2087 = vsel %vm1383, %v2085, %v2086
          %v2088 = vrot.slane %v2086, 4
          %v2089 = vrot.slane %v1542, 5
          %v2090 = vsel %vm1383, %v2088, %v2089
          %v2091 = vrot.slane %v1943, 5
          %v2092 = vrot.slane %v2091, 4
          %v2093 = vrot.slane %v1526, 5
          %v2094 = vsel %vm1383, %v2092, %v2093
          %v2095 = vrot.slane %v2093, 4
          %v2096 = vrot.slane %v1543, 5
          %v2097 = vsel %vm1383, %v2095, %v2096
          %v2098 = vrot.slane %v1944, 5
          %v2099 = vrot.slane %v2098, 4
          %v2100 = vrot.slane %v1528, 5
          %v2101 = vsel %vm1383, %v2099, %v2100
          %v2102 = vrot.slane %v2100, 4
          %v2103 = vrot.slane %v1544, 5
          %v2104 = vsel %vm1383, %v2102, %v2103
          %s2105 = scalar_lea.vmem [#allocation2], 24
          %v2106 = vld [vmem:[%s2105] sm:$0xf]
          %v2107 = vld [vmem:[%s2105 + $0x4] sm:$0xf]
          %v2108 = vld [vmem:[%s2105 + $0xc] sm:$0xf]
          %v2109 = vld [vmem:[%s2105 + $0x10] sm:$0xf]
          %v2110 = vld [vmem:[%s2105 + $0x18] sm:$0xf]
          %v2111 = vld [vmem:[%s2105 + $0x1c] sm:$0xf]
          %v2112 = vld [vmem:[%s2105 + $0x24] sm:$0xf]
          %v2113 = vld [vmem:[%s2105 + $0x28] sm:$0xf]
          %v2114 = vld [vmem:[%s2105 + $0x30] sm:$0xf]
          %v2115 = vld [vmem:[%s2105 + $0x34] sm:$0xf]
          %v2116 = vld [vmem:[%s2105 + $0x3c] sm:$0xf]
          %v2117 = vld [vmem:[%s2105 + $0x40] sm:$0xf]
          %v2118 = vld [vmem:[%s2105 + $0x48] sm:$0xf]
          %v2119 = vld [vmem:[%s2105 + $0x4c] sm:$0xf]
          %v2120 = vld [vmem:[%s2105 + $0x54] sm:$0xf]
          %v2121 = vld [vmem:[%s2105 + $0x58] sm:$0xf]
          %v2122 = vld [vmem:[%s2105 + $0x60] sm:$0xf]
          %v2123 = vld [vmem:[%s2105 + $0x64] sm:$0xf]
          %v2124 = vld [vmem:[%s2105 + $0x6c] sm:$0xf]
          %v2125 = vld [vmem:[%s2105 + $0x70] sm:$0xf]
          %v2126 = vld [vmem:[%s2105 + $0x78] sm:$0xf]
          %v2127 = vld [vmem:[%s2105 + $0x7c] sm:$0xf]
          %v2128 = vld [vmem:[%s2105 + $0x84] sm:$0xf]
          %v2129 = vld [vmem:[%s2105 + $0x88] sm:$0xf]
          %v2130 = vld [vmem:[%s2105 + $0x90] sm:$0xf]
          %v2131 = vld [vmem:[%s2105 + $0x94] sm:$0xf]
          %v2132 = vld [vmem:[%s2105 + $0x9c] sm:$0xf]
          %v2133 = vld [vmem:[%s2105 + $0xa0] sm:$0xf]
          %v2134 = vld [vmem:[%s2105 + $0xa8] sm:$0xf]
          %v2135 = vld [vmem:[%s2105 + $0xac] sm:$0xf]
          %v2136 = vld [vmem:[%s2105 + $0xb4] sm:$0xf]
          %v2137 = vld [vmem:[%s2105 + $0xb8] sm:$0xf]
          %v2138 = vld [vmem:[%s2105 + $0x8] sm:$0x1]
          %v2139 = vld [vmem:[%s2105 + $0x14] sm:$0x1]
          %v2140 = vld [vmem:[%s2105 + $0x20] sm:$0x1]
          %v2141 = vld [vmem:[%s2105 + $0x2c] sm:$0x1]
          %v2142 = vld [vmem:[%s2105 + $0x38] sm:$0x1]
          %v2143 = vld [vmem:[%s2105 + $0x44] sm:$0x1]
          %v2144 = vld [vmem:[%s2105 + $0x50] sm:$0x1]
          %v2145 = vld [vmem:[%s2105 + $0x5c] sm:$0x1]
          %v2146 = vld [vmem:[%s2105 + $0x68] sm:$0x1]
          %v2147 = vld [vmem:[%s2105 + $0x74] sm:$0x1]
          %v2148 = vld [vmem:[%s2105 + $0x80] sm:$0x1]
          %v2149 = vld [vmem:[%s2105 + $0x8c] sm:$0x1]
          %v2150 = vld [vmem:[%s2105 + $0x98] sm:$0x1]
          %v2151 = vld [vmem:[%s2105 + $0xa4] sm:$0x1]
          %v2152 = vld [vmem:[%s2105 + $0xb0] sm:$0x1]
          %v2153 = vld [vmem:[%s2105 + $0xbc] sm:$0x1]
          %v2155 = vshrl.u32 %v2106, 16
          %v2157 = vrot.slane %v2155, 4
          %v2158 = vshll.u32 %v2106, 16
          %v2160 = vrot.slane %v2158, 5
          %v2161 = vor.u32 %v2157, %v2160
          %v2162 = vrot.slane %v2161, 4
          %v2164 = vshll.u32 %v2107, 16
          %v2166 = vrot.slane %v2164, 5
          %v2167 = vsel %vm932, %v2162, %v2166
          %v2168 = vshrl.u32 %v2107, 16
          %v2170 = vrot.slane %v2168, 4
          %v2171 = vor.u32 %v2170, %v2166
          %v2172 = vrot.slane %v2171, 4
          %v2174 = vshll.u32 %v2138, 16
          %v2176 = vrot.slane %v2174, 5
          %v2177 = vsel %vm932, %v2172, %v2176
          %v2179 = vshrl.u32 %v2108, 16
          %v2181 = vrot.slane %v2179, 4
          %v2182 = vshll.u32 %v2108, 16
          %v2184 = vrot.slane %v2182, 5
          %v2185 = vor.u32 %v2181, %v2184
          %v2186 = vrot.slane %v2185, 4
          %v2188 = vshll.u32 %v2109, 16
          %v2190 = vrot.slane %v2188, 5
          %v2191 = vsel %vm932, %v2186, %v2190
          %v2192 = vshrl.u32 %v2109, 16
          %v2194 = vrot.slane %v2192, 4
          %v2195 = vor.u32 %v2194, %v2190
          %v2196 = vrot.slane %v2195, 4
          %v2198 = vshll.u32 %v2139, 16
          %v2200 = vrot.slane %v2198, 5
          %v2201 = vsel %vm932, %v2196, %v2200
          %v2203 = vshrl.u32 %v2110, 16
          %v2205 = vrot.slane %v2203, 4
          %v2206 = vshll.u32 %v2110, 16
          %v2208 = vrot.slane %v2206, 5
          %v2209 = vor.u32 %v2205, %v2208
          %v2210 = vrot.slane %v2209, 4
          %v2212 = vshll.u32 %v2111, 16
          %v2214 = vrot.slane %v2212, 5
          %v2215 = vsel %vm932, %v2210, %v2214
          %v2216 = vshrl.u32 %v2111, 16
          %v2218 = vrot.slane %v2216, 4
          %v2219 = vor.u32 %v2218, %v2214
          %v2220 = vrot.slane %v2219, 4
          %v2222 = vshll.u32 %v2140, 16
          %v2224 = vrot.slane %v2222, 5
          %v2225 = vsel %vm932, %v2220, %v2224
          %v2227 = vshrl.u32 %v2112, 16
          %v2229 = vrot.slane %v2227, 4
          %v2230 = vshll.u32 %v2112, 16
          %v2232 = vrot.slane %v2230, 5
          %v2233 = vor.u32 %v2229, %v2232
          %v2234 = vrot.slane %v2233, 4
          %v2236 = vshll.u32 %v2113, 16
          %v2238 = vrot.slane %v2236, 5
          %v2239 = vsel %vm932, %v2234, %v2238
          %v2240 = vshrl.u32 %v2113, 16
          %v2242 = vrot.slane %v2240, 4
          %v2243 = vor.u32 %v2242, %v2238
          %v2244 = vrot.slane %v2243, 4
          %v2246 = vshll.u32 %v2141, 16
          %v2248 = vrot.slane %v2246, 5
          %v2249 = vsel %vm932, %v2244, %v2248
          %v2251 = vshrl.u32 %v2114, 16
          %v2253 = vrot.slane %v2251, 4
          %v2254 = vshll.u32 %v2114, 16
          %v2256 = vrot.slane %v2254, 5
          %v2257 = vor.u32 %v2253, %v2256
          %v2258 = vrot.slane %v2257, 4
          %v2260 = vshll.u32 %v2115, 16
          %v2262 = vrot.slane %v2260, 5
          %v2263 = vsel %vm932, %v2258, %v2262
          %v2264 = vshrl.u32 %v2115, 16
          %v2266 = vrot.slane %v2264, 4
          %v2267 = vor.u32 %v2266, %v2262
          %v2268 = vrot.slane %v2267, 4
          %v2270 = vshll.u32 %v2142, 16
          %v2272 = vrot.slane %v2270, 5
          %v2273 = vsel %vm932, %v2268, %v2272
          %v2275 = vshrl.u32 %v2116, 16
          %v2277 = vrot.slane %v2275, 4
          %v2278 = vshll.u32 %v2116, 16
          %v2280 = vrot.slane %v2278, 5
          %v2281 = vor.u32 %v2277, %v2280
          %v2282 = vrot.slane %v2281, 4
          %v2284 = vshll.u32 %v2117, 16
          %v2286 = vrot.slane %v2284, 5
          %v2287 = vsel %vm932, %v2282, %v2286
          %v2288 = vshrl.u32 %v2117, 16
          %v2290 = vrot.slane %v2288, 4
          %v2291 = vor.u32 %v2290, %v2286
          %v2292 = vrot.slane %v2291, 4
          %v2294 = vshll.u32 %v2143, 16
          %v2296 = vrot.slane %v2294, 5
          %v2297 = vsel %vm932, %v2292, %v2296
          %v2299 = vshrl.u32 %v2118, 16
          %v2301 = vrot.slane %v2299, 4
          %v2302 = vshll.u32 %v2118, 16
          %v2304 = vrot.slane %v2302, 5
          %v2305 = vor.u32 %v2301, %v2304
          %v2306 = vrot.slane %v2305, 4
          %v2308 = vshll.u32 %v2119, 16
          %v2310 = vrot.slane %v2308, 5
          %v2311 = vsel %vm932, %v2306, %v2310
          %v2312 = vshrl.u32 %v2119, 16
          %v2314 = vrot.slane %v2312, 4
          %v2315 = vor.u32 %v2314, %v2310
          %v2316 = vrot.slane %v2315, 4
          %v2318 = vshll.u32 %v2144, 16
          %v2320 = vrot.slane %v2318, 5
          %v2321 = vsel %vm932, %v2316, %v2320
          %v2323 = vshrl.u32 %v2120, 16
          %v2325 = vrot.slane %v2323, 4
          %v2326 = vshll.u32 %v2120, 16
          %v2328 = vrot.slane %v2326, 5
          %v2329 = vor.u32 %v2325, %v2328
          %v2330 = vrot.slane %v2329, 4
          %v2332 = vshll.u32 %v2121, 16
          %v2334 = vrot.slane %v2332, 5
          %v2335 = vsel %vm932, %v2330, %v2334
          %v2336 = vshrl.u32 %v2121, 16
          %v2338 = vrot.slane %v2336, 4
          %v2339 = vor.u32 %v2338, %v2334
          %v2340 = vrot.slane %v2339, 4
          %v2342 = vshll.u32 %v2145, 16
          %v2344 = vrot.slane %v2342, 5
          %v2345 = vsel %vm932, %v2340, %v2344
          %v2347 = vshrl.u32 %v2122, 16
          %v2349 = vrot.slane %v2347, 4
          %v2350 = vshll.u32 %v2122, 16
          %v2352 = vrot.slane %v2350, 5
          %v2353 = vor.u32 %v2349, %v2352
          %v2354 = vrot.slane %v2353, 4
          %v2356 = vshll.u32 %v2123, 16
          %v2358 = vrot.slane %v2356, 5
          %v2359 = vsel %vm932, %v2354, %v2358
          %v2360 = vshrl.u32 %v2123, 16
          %v2362 = vrot.slane %v2360, 4
          %v2363 = vor.u32 %v2362, %v2358
          %v2364 = vrot.slane %v2363, 4
          %v2366 = vshll.u32 %v2146, 16
          %v2368 = vrot.slane %v2366, 5
          %v2369 = vsel %vm932, %v2364, %v2368
          %v2371 = vshrl.u32 %v2124, 16
          %v2373 = vrot.slane %v2371, 4
          %v2374 = vshll.u32 %v2124, 16
          %v2376 = vrot.slane %v2374, 5
          %v2377 = vor.u32 %v2373, %v2376
          %v2378 = vrot.slane %v2377, 4
          %v2380 = vshll.u32 %v2125, 16
          %v2382 = vrot.slane %v2380, 5
          %v2383 = vsel %vm932, %v2378, %v2382
          %v2384 = vshrl.u32 %v2125, 16
          %v2386 = vrot.slane %v2384, 4
          %v2387 = vor.u32 %v2386, %v2382
          %v2388 = vrot.slane %v2387, 4
          %v2390 = vshll.u32 %v2147, 16
          %v2392 = vrot.slane %v2390, 5
          %v2393 = vsel %vm932, %v2388, %v2392
          %v2395 = vshrl.u32 %v2126, 16
          %v2397 = vrot.slane %v2395, 4
          %v2398 = vshll.u32 %v2126, 16
          %v2400 = vrot.slane %v2398, 5
          %v2401 = vor.u32 %v2397, %v2400
          %v2402 = vrot.slane %v2401, 4
          %v2404 = vshll.u32 %v2127, 16
          %v2406 = vrot.slane %v2404, 5
          %v2407 = vsel %vm932, %v2402, %v2406
          %v2408 = vshrl.u32 %v2127, 16
          %v2410 = vrot.slane %v2408, 4
          %v2411 = vor.u32 %v2410, %v2406
          %v2412 = vrot.slane %v2411, 4
          %v2414 = vshll.u32 %v2148, 16
          %v2416 = vrot.slane %v2414, 5
          %v2417 = vsel %vm932, %v2412, %v2416
          %v2419 = vshrl.u32 %v2128, 16
          %v2421 = vrot.slane %v2419, 4
          %v2422 = vshll.u32 %v2128, 16
          %v2424 = vrot.slane %v2422, 5
          %v2425 = vor.u32 %v2421, %v2424
          %v2426 = vrot.slane %v2425, 4
          %v2428 = vshll.u32 %v2129, 16
          %v2430 = vrot.slane %v2428, 5
          %v2431 = vsel %vm932, %v2426, %v2430
          %v2432 = vshrl.u32 %v2129, 16
          %v2434 = vrot.slane %v2432, 4
          %v2435 = vor.u32 %v2434, %v2430
          %v2436 = vrot.slane %v2435, 4
          %v2438 = vshll.u32 %v2149, 16
          %v2440 = vrot.slane %v2438, 5
          %v2441 = vsel %vm932, %v2436, %v2440
          %v2443 = vshrl.u32 %v2130, 16
          %v2445 = vrot.slane %v2443, 4
          %v2446 = vshll.u32 %v2130, 16
          %v2448 = vrot.slane %v2446, 5
          %v2449 = vor.u32 %v2445, %v2448
          %v2450 = vrot.slane %v2449, 4
          %v2452 = vshll.u32 %v2131, 16
          %v2454 = vrot.slane %v2452, 5
          %v2455 = vsel %vm932, %v2450, %v2454
          %v2456 = vshrl.u32 %v2131, 16
          %v2458 = vrot.slane %v2456, 4
          %v2459 = vor.u32 %v2458, %v2454
          %v2460 = vrot.slane %v2459, 4
          %v2462 = vshll.u32 %v2150, 16
          %v2464 = vrot.slane %v2462, 5
          %v2465 = vsel %vm932, %v2460, %v2464
          %v2467 = vshrl.u32 %v2132, 16
          %v2469 = vrot.slane %v2467, 4
          %v2470 = vshll.u32 %v2132, 16
          %v2472 = vrot.slane %v2470, 5
          %v2473 = vor.u32 %v2469, %v2472
          %v2474 = vrot.slane %v2473, 4
          %v2476 = vshll.u32 %v2133, 16
          %v2478 = vrot.slane %v2476, 5
          %v2479 = vsel %vm932, %v2474, %v2478
          %v2480 = vshrl.u32 %v2133, 16
          %v2482 = vrot.slane %v2480, 4
          %v2483 = vor.u32 %v2482, %v2478
          %v2484 = vrot.slane %v2483, 4
          %v2486 = vshll.u32 %v2151, 16
          %v2488 = vrot.slane %v2486, 5
          %v2489 = vsel %vm932, %v2484, %v2488
          %v2491 = vshrl.u32 %v2134, 16
          %v2493 = vrot.slane %v2491, 4
          %v2494 = vshll.u32 %v2134, 16
          %v2496 = vrot.slane %v2494, 5
          %v2497 = vor.u32 %v2493, %v2496
          %v2498 = vrot.slane %v2497, 4
          %v2500 = vshll.u32 %v2135, 16
          %v2502 = vrot.slane %v2500, 5
          %v2503 = vsel %vm932, %v2498, %v2502
          %v2504 = vshrl.u32 %v2135, 16
          %v2506 = vrot.slane %v2504, 4
          %v2507 = vor.u32 %v2506, %v2502
          %v2508 = vrot.slane %v2507, 4
          %v2510 = vshll.u32 %v2152, 16
          %v2512 = vrot.slane %v2510, 5
          %v2513 = vsel %vm932, %v2508, %v2512
          %v2515 = vshrl.u32 %v2136, 16
          %v2517 = vrot.slane %v2515, 4
          %v2518 = vshll.u32 %v2136, 16
          %v2520 = vrot.slane %v2518, 5
          %v2521 = vor.u32 %v2517, %v2520
          %v2522 = vrot.slane %v2521, 4
          %v2524 = vshll.u32 %v2137, 16
          %v2526 = vrot.slane %v2524, 5
          %v2527 = vsel %vm932, %v2522, %v2526
          %v2528 = vshrl.u32 %v2137, 16
          %v2530 = vrot.slane %v2528, 4
          %v2531 = vor.u32 %v2530, %v2526
          %v2532 = vrot.slane %v2531, 4
          %v2534 = vshll.u32 %v2153, 16
          %v2536 = vrot.slane %v2534, 5
          %v2537 = vsel %vm932, %v2532, %v2536
          %v2538 = vld [vmem:[%s2105] sm:$0xe]
          %v2539 = vld [vmem:[%s2105 + $0xc] sm:$0xe]
          %v2540 = vld [vmem:[%s2105 + $0x18] sm:$0xe]
          %v2541 = vld [vmem:[%s2105 + $0x24] sm:$0xe]
          %v2542 = vld [vmem:[%s2105 + $0x30] sm:$0xe]
          %v2543 = vld [vmem:[%s2105 + $0x3c] sm:$0xe]
          %v2544 = vld [vmem:[%s2105 + $0x48] sm:$0xe]
          %v2545 = vld [vmem:[%s2105 + $0x54] sm:$0xe]
          %v2546 = vld [vmem:[%s2105 + $0x60] sm:$0xe]
          %v2547 = vld [vmem:[%s2105 + $0x6c] sm:$0xe]
          %v2548 = vld [vmem:[%s2105 + $0x78] sm:$0xe]
          %v2549 = vld [vmem:[%s2105 + $0x84] sm:$0xe]
          %v2550 = vld [vmem:[%s2105 + $0x90] sm:$0xe]
          %v2551 = vld [vmem:[%s2105 + $0x9c] sm:$0xe]
          %v2552 = vld [vmem:[%s2105 + $0xa8] sm:$0xe]
          %v2553 = vld [vmem:[%s2105 + $0xb4] sm:$0xe]
          %v2602 = vrot.slane %v2538, 5
          %v2603 = vrot.slane %v2602, 4
          %v2604 = vrot.slane %v2107, 5
          %v2605 = vsel %vm1383, %v2603, %v2604
          %v2606 = vrot.slane %v2604, 4
          %v2607 = vrot.slane %v2138, 5
          %v2608 = vsel %vm1383, %v2606, %v2607
          %v2609 = vrot.slane %v2539, 5
          %v2610 = vrot.slane %v2609, 4
          %v2611 = vrot.slane %v2109, 5
          %v2612 = vsel %vm1383, %v2610, %v2611
          %v2613 = vrot.slane %v2611, 4
          %v2614 = vrot.slane %v2139, 5
          %v2615 = vsel %vm1383, %v2613, %v2614
          %v2616 = vrot.slane %v2540, 5
          %v2617 = vrot.slane %v2616, 4
          %v2618 = vrot.slane %v2111, 5
          %v2619 = vsel %vm1383, %v2617, %v2618
          %v2620 = vrot.slane %v2618, 4
          %v2621 = vrot.slane %v2140, 5
          %v2622 = vsel %vm1383, %v2620, %v2621
          %v2623 = vrot.slane %v2541, 5
          %v2624 = vrot.slane %v2623, 4
          %v2625 = vrot.slane %v2113, 5
          %v2626 = vsel %vm1383, %v2624, %v2625
          %v2627 = vrot.slane %v2625, 4
          %v2628 = vrot.slane %v2141, 5
          %v2629 = vsel %vm1383, %v2627, %v2628
          %v2630 = vrot.slane %v2542, 5
          %v2631 = vrot.slane %v2630, 4
          %v2632 = vrot.slane %v2115, 5
          %v2633 = vsel %vm1383, %v2631, %v2632
          %v2634 = vrot.slane %v2632, 4
          %v2635 = vrot.slane %v2142, 5
          %v2636 = vsel %vm1383, %v2634, %v2635
          %v2637 = vrot.slane %v2543, 5
          %v2638 = vrot.slane %v2637, 4
          %v2639 = vrot.slane %v2117, 5
          %v2640 = vsel %vm1383, %v2638, %v2639
          %v2641 = vrot.slane %v2639, 4
          %v2642 = vrot.slane %v2143, 5
          %v2643 = vsel %vm1383, %v2641, %v2642
          %v2644 = vrot.slane %v2544, 5
          %v2645 = vrot.slane %v2644, 4
          %v2646 = vrot.slane %v2119, 5
          %v2647 = vsel %vm1383, %v2645, %v2646
          %v2648 = vrot.slane %v2646, 4
          %v2649 = vrot.slane %v2144, 5
          %v2650 = vsel %vm1383, %v2648, %v2649
          %v2651 = vrot.slane %v2545, 5
          %v2652 = vrot.slane %v2651, 4
          %v2653 = vrot.slane %v2121, 5
          %v2654 = vsel %vm1383, %v2652, %v2653
          %v2655 = vrot.slane %v2653, 4
          %v2656 = vrot.slane %v2145, 5
          %v2657 = vsel %vm1383, %v2655, %v2656
          %v2658 = vrot.slane %v2546, 5
          %v2659 = vrot.slane %v2658, 4
          %v2660 = vrot.slane %v2123, 5
          %v2661 = vsel %vm1383, %v2659, %v2660
          %v2662 = vrot.slane %v2660, 4
          %v2663 = vrot.slane %v2146, 5
          %v2664 = vsel %vm1383, %v2662, %v2663
          %v2665 = vrot.slane %v2547, 5
          %v2666 = vrot.slane %v2665, 4
          %v2667 = vrot.slane %v2125, 5
          %v2668 = vsel %vm1383, %v2666, %v2667
          %v2669 = vrot.slane %v2667, 4
          %v2670 = vrot.slane %v2147, 5
          %v2671 = vsel %vm1383, %v2669, %v2670
          %v2672 = vrot.slane %v2548, 5
          %v2673 = vrot.slane %v2672, 4
          %v2674 = vrot.slane %v2127, 5
          %v2675 = vsel %vm1383, %v2673, %v2674
          %v2676 = vrot.slane %v2674, 4
          %v2677 = vrot.slane %v2148, 5
          %v2678 = vsel %vm1383, %v2676, %v2677
          %v2679 = vrot.slane %v2549, 5
          %v2680 = vrot.slane %v2679, 4
          %v2681 = vrot.slane %v2129, 5
          %v2682 = vsel %vm1383, %v2680, %v2681
          %v2683 = vrot.slane %v2681, 4
          %v2684 = vrot.slane %v2149, 5
          %v2685 = vsel %vm1383, %v2683, %v2684
          %v2686 = vrot.slane %v2550, 5
          %v2687 = vrot.slane %v2686, 4
          %v2688 = vrot.slane %v2131, 5
          %v2689 = vsel %vm1383, %v2687, %v2688
          %v2690 = vrot.slane %v2688, 4
          %v2691 = vrot.slane %v2150, 5
          %v2692 = vsel %vm1383, %v2690, %v2691
          %v2693 = vrot.slane %v2551, 5
          %v2694 = vrot.slane %v2693, 4
          %v2695 = vrot.slane %v2133, 5
          %v2696 = vsel %vm1383, %v2694, %v2695
          %v2697 = vrot.slane %v2695, 4
          %v2698 = vrot.slane %v2151, 5
          %v2699 = vsel %vm1383, %v2697, %v2698
          %v2700 = vrot.slane %v2552, 5
          %v2701 = vrot.slane %v2700, 4
          %v2702 = vrot.slane %v2135, 5
          %v2703 = vsel %vm1383, %v2701, %v2702
          %v2704 = vrot.slane %v2702, 4
          %v2705 = vrot.slane %v2152, 5
          %v2706 = vsel %vm1383, %v2704, %v2705
          %v2707 = vrot.slane %v2553, 5
          %v2708 = vrot.slane %v2707, 4
          %v2709 = vrot.slane %v2137, 5
          %v2710 = vsel %vm1383, %v2708, %v2709
          %v2711 = vrot.slane %v2709, 4
          %v2712 = vrot.slane %v2153, 5
          %v2713 = vsel %vm1383, %v2711, %v2712
          %v2730 = vunpack.c.l.b16 %v882
          %v2731 = vunpack.c.l.b16 %v883
          %v2732 = vunpack.c.l.b16 %v884
          %v2733 = vunpack.c.l.b16 %v885
          %v2734 = vunpack.c.l.b16 %v886
          %v2735 = vunpack.c.l.b16 %v887
          %v2736 = vunpack.c.l.b16 %v888
          %v2737 = vunpack.c.l.b16 %v889
          %v2738 = vunpack.c.l.b16 %v890
          %v2739 = vunpack.c.l.b16 %v891
          %v2740 = vunpack.c.l.b16 %v892
          %v2741 = vunpack.c.l.b16 %v893
          %v2742 = vunpack.c.l.b16 %v894
          %v2743 = vunpack.c.l.b16 %v895
          %v2744 = vunpack.c.l.b16 %v896
          %v2745 = vunpack.c.l.b16 %v897
          %v2746 = vunpack.c.l.b16 %v898
          %v2747 = vunpack.c.l.b16 %v899
          %v2748 = vunpack.c.l.b16 %v900
          %v2749 = vunpack.c.l.b16 %v901
          %v2750 = vunpack.c.l.b16 %v902
          %v2751 = vunpack.c.l.b16 %v903
          %v2752 = vunpack.c.l.b16 %v904
          %v2753 = vunpack.c.l.b16 %v905
          %v2754 = vunpack.c.l.b16 %v906
          %v2755 = vunpack.c.l.b16 %v907
          %v2756 = vunpack.c.l.b16 %v908
          %v2757 = vunpack.c.l.b16 %v909
          %v2758 = vunpack.c.l.b16 %v910
          %v2759 = vunpack.c.l.b16 %v911
          %v2760 = vunpack.c.l.b16 %v912
          %v2761 = vunpack.c.l.b16 %v913
          %v2762 = vpack.c.b16 %v2731, %v2730
          %v2763 = vpack.c.b16 %v2733, %v2732
          %v2764 = vpack.c.b16 %v2735, %v2734
          %v2765 = vpack.c.b16 %v2737, %v2736
          %v2766 = vpack.c.b16 %v2739, %v2738
          %v2767 = vpack.c.b16 %v2741, %v2740
          %v2768 = vpack.c.b16 %v2743, %v2742
          %v2769 = vpack.c.b16 %v2745, %v2744
          %v2770 = vpack.c.b16 %v2747, %v2746
          %v2771 = vpack.c.b16 %v2749, %v2748
          %v2772 = vpack.c.b16 %v2751, %v2750
          %v2773 = vpack.c.b16 %v2753, %v2752
          %v2774 = vpack.c.b16 %v2755, %v2754
          %v2775 = vpack.c.b16 %v2757, %v2756
          %v2776 = vpack.c.b16 %v2759, %v2758
          %v2777 = vpack.c.b16 %v2761, %v2760
          %v2778 = vunpack.c.l.b16 %v946
          %v2779 = vunpack.c.l.b16 %v956
          %v2780 = vunpack.c.l.b16 %v970
          %v2781 = vunpack.c.l.b16 %v980
          %v2782 = vunpack.c.l.b16 %v994
          %v2783 = vunpack.c.l.b16 %v1004
          %v2784 = vunpack.c.l.b16 %v1018
          %v2785 = vunpack.c.l.b16 %v1028
          %v2786 = vunpack.c.l.b16 %v1042
          %v2787 = vunpack.c.l.b16 %v1052
          %v2788 = vunpack.c.l.b16 %v1066
          %v2789 = vunpack.c.l.b16 %v1076
          %v2790 = vunpack.c.l.b16 %v1090
          %v2791 = vunpack.c.l.b16 %v1100
          %v2792 = vunpack.c.l.b16 %v1114
          %v2793 = vunpack.c.l.b16 %v1124
          %v2794 = vunpack.c.l.b16 %v1138
          %v2795 = vunpack.c.l.b16 %v1148
          %v2796 = vunpack.c.l.b16 %v1162
          %v2797 = vunpack.c.l.b16 %v1172
          %v2798 = vunpack.c.l.b16 %v1186
          %v2799 = vunpack.c.l.b16 %v1196
          %v2800 = vunpack.c.l.b16 %v1210
          %v2801 = vunpack.c.l.b16 %v1220
          %v2802 = vunpack.c.l.b16 %v1234
          %v2803 = vunpack.c.l.b16 %v1244
          %v2804 = vunpack.c.l.b16 %v1258
          %v2805 = vunpack.c.l.b16 %v1268
          %v2806 = vunpack.c.l.b16 %v1282
          %v2807 = vunpack.c.l.b16 %v1292
          %v2808 = vunpack.c.l.b16 %v1306
          %v2809 = vunpack.c.l.b16 %v1316
          %v2810 = vpack.c.b16 %v2779, %v2778
          %v2811 = vpack.c.b16 %v2781, %v2780
          %v2812 = vpack.c.b16 %v2783, %v2782
          %v2813 = vpack.c.b16 %v2785, %v2784
          %v2814 = vpack.c.b16 %v2787, %v2786
          %v2815 = vpack.c.b16 %v2789, %v2788
          %v2816 = vpack.c.b16 %v2791, %v2790
          %v2817 = vpack.c.b16 %v2793, %v2792
          %v2818 = vpack.c.b16 %v2795, %v2794
          %v2819 = vpack.c.b16 %v2797, %v2796
          %v2820 = vpack.c.b16 %v2799, %v2798
          %v2821 = vpack.c.b16 %v2801, %v2800
          %v2822 = vpack.c.b16 %v2803, %v2802
          %v2823 = vpack.c.b16 %v2805, %v2804
          %v2824 = vpack.c.b16 %v2807, %v2806
          %v2825 = vpack.c.b16 %v2809, %v2808
          %2826 = vrot.lane.b32.xlu0 %v2810, 4
          %v2827 = vpop.permute.xlu0 %2826
          %2828 = vrot.lane.b32.xlu0 %v2811, 4
          %v2829 = vpop.permute.xlu0 %2828
          %2830 = vrot.lane.b32.xlu0 %v2812, 4
          %v2831 = vpop.permute.xlu0 %2830
          %2832 = vrot.lane.b32.xlu0 %v2813, 4
          %v2833 = vpop.permute.xlu0 %2832
          %2834 = vrot.lane.b32.xlu0 %v2814, 4
          %v2835 = vpop.permute.xlu0 %2834
          %2836 = vrot.lane.b32.xlu0 %v2815, 4
          %v2837 = vpop.permute.xlu0 %2836
          %2838 = vrot.lane.b32.xlu0 %v2816, 4
          %v2839 = vpop.permute.xlu0 %2838
          %2840 = vrot.lane.b32.xlu0 %v2817, 4
          %v2841 = vpop.permute.xlu0 %2840
          %2842 = vrot.lane.b32.xlu0 %v2818, 4
          %v2843 = vpop.permute.xlu0 %2842
          %2844 = vrot.lane.b32.xlu0 %v2819, 4
          %v2845 = vpop.permute.xlu0 %2844
          %2846 = vrot.lane.b32.xlu0 %v2820, 4
          %v2847 = vpop.permute.xlu0 %2846
          %2848 = vrot.lane.b32.xlu0 %v2821, 4
          %v2849 = vpop.permute.xlu0 %2848
          %2850 = vrot.lane.b32.xlu0 %v2822, 4
          %v2851 = vpop.permute.xlu0 %2850
          %2852 = vrot.lane.b32.xlu0 %v2823, 4
          %v2853 = vpop.permute.xlu0 %2852
          %2854 = vrot.lane.b32.xlu0 %v2824, 4
          %v2855 = vpop.permute.xlu0 %2854
          %2856 = vrot.lane.b32.xlu0 %v2825, 4
          %v2857 = vpop.permute.xlu0 %2856
          %v2858 = vunpack.c.l.b16 %v1387
          %v2859 = vunpack.c.l.b16 %v1390
          %v2860 = vunpack.c.l.b16 %v1394
          %v2861 = vunpack.c.l.b16 %v1397
          %v2862 = vunpack.c.l.b16 %v1401
          %v2863 = vunpack.c.l.b16 %v1404
          %v2864 = vunpack.c.l.b16 %v1408
          %v2865 = vunpack.c.l.b16 %v1411
          %v2866 = vunpack.c.l.b16 %v1415
          %v2867 = vunpack.c.l.b16 %v1418
          %v2868 = vunpack.c.l.b16 %v1422
          %v2869 = vunpack.c.l.b16 %v1425
          %v2870 = vunpack.c.l.b16 %v1429
          %v2871 = vunpack.c.l.b16 %v1432
          %v2872 = vunpack.c.l.b16 %v1436
          %v2873 = vunpack.c.l.b16 %v1439
          %v2874 = vunpack.c.l.b16 %v1443
          %v2875 = vunpack.c.l.b16 %v1446
          %v2876 = vunpack.c.l.b16 %v1450
          %v2877 = vunpack.c.l.b16 %v1453
          %v2878 = vunpack.c.l.b16 %v1457
          %v2879 = vunpack.c.l.b16 %v1460
          %v2880 = vunpack.c.l.b16 %v1464
          %v2881 = vunpack.c.l.b16 %v1467
          %v2882 = vunpack.c.l.b16 %v1471
          %v2883 = vunpack.c.l.b16 %v1474
          %v2884 = vunpack.c.l.b16 %v1478
          %v2885 = vunpack.c.l.b16 %v1481
          %v2886 = vunpack.c.l.b16 %v1485
          %v2887 = vunpack.c.l.b16 %v1488
          %v2888 = vunpack.c.l.b16 %v1492
          %v2889 = vunpack.c.l.b16 %v1495
          %v2890 = vpack.c.b16 %v2859, %v2858
          %v2891 = vpack.c.b16 %v2861, %v2860
          %v2892 = vpack.c.b16 %v2863, %v2862
          %v2893 = vpack.c.b16 %v2865, %v2864
          %v2894 = vpack.c.b16 %v2867, %v2866
          %v2895 = vpack.c.b16 %v2869, %v2868
          %v2896 = vpack.c.b16 %v2871, %v2870
          %v2897 = vpack.c.b16 %v2873, %v2872
          %v2898 = vpack.c.b16 %v2875, %v2874
          %v2899 = vpack.c.b16 %v2877, %v2876
          %v2900 = vpack.c.b16 %v2879, %v2878
          %v2901 = vpack.c.b16 %v2881, %v2880
          %v2902 = vpack.c.b16 %v2883, %v2882
          %v2903 = vpack.c.b16 %v2885, %v2884
          %v2904 = vpack.c.b16 %v2887, %v2886
          %v2905 = vpack.c.b16 %v2889, %v2888
          %2906 = vrot.lane.b32.xlu0 %v2890, 8
          %v2907 = vpop.permute.xlu0 %2906
          %2908 = vrot.lane.b32.xlu0 %v2891, 8
          %v2909 = vpop.permute.xlu0 %2908
          %2910 = vrot.lane.b32.xlu0 %v2892, 8
          %v2911 = vpop.permute.xlu0 %2910
          %2912 = vrot.lane.b32.xlu0 %v2893, 8
          %v2913 = vpop.permute.xlu0 %2912
          %2914 = vrot.lane.b32.xlu0 %v2894, 8
          %v2915 = vpop.permute.xlu0 %2914
          %2916 = vrot.lane.b32.xlu0 %v2895, 8
          %v2917 = vpop.permute.xlu0 %2916
          %2918 = vrot.lane.b32.xlu0 %v2896, 8
          %v2919 = vpop.permute.xlu0 %2918
          %2920 = vrot.lane.b32.xlu0 %v2897, 8
          %v2921 = vpop.permute.xlu0 %2920
          %2922 = vrot.lane.b32.xlu0 %v2898, 8
          %v2923 = vpop.permute.xlu0 %2922
          %2924 = vrot.lane.b32.xlu0 %v2899, 8
          %v2925 = vpop.permute.xlu0 %2924
          %2926 = vrot.lane.b32.xlu0 %v2900, 8
          %v2927 = vpop.permute.xlu0 %2926
          %2928 = vrot.lane.b32.xlu0 %v2901, 8
          %v2929 = vpop.permute.xlu0 %2928
          %2930 = vrot.lane.b32.xlu0 %v2902, 8
          %v2931 = vpop.permute.xlu0 %2930
          %2932 = vrot.lane.b32.xlu0 %v2903, 8
          %v2933 = vpop.permute.xlu0 %2932
          %2934 = vrot.lane.b32.xlu0 %v2904, 8
          %v2935 = vpop.permute.xlu0 %2934
          %2936 = vrot.lane.b32.xlu0 %v2905, 8
          %v2937 = vpop.permute.xlu0 %2936
          %v2954 = vunpack.c.l.b16 %v1497
          %v2955 = vunpack.c.l.b16 %v1498
          %v2956 = vunpack.c.l.b16 %v1499
          %v2957 = vunpack.c.l.b16 %v1500
          %v2958 = vunpack.c.l.b16 %v1501
          %v2959 = vunpack.c.l.b16 %v1502
          %v2960 = vunpack.c.l.b16 %v1503
          %v2961 = vunpack.c.l.b16 %v1504
          %v2962 = vunpack.c.l.b16 %v1505
          %v2963 = vunpack.c.l.b16 %v1506
          %v2964 = vunpack.c.l.b16 %v1507
          %v2965 = vunpack.c.l.b16 %v1508
          %v2966 = vunpack.c.l.b16 %v1509
          %v2967 = vunpack.c.l.b16 %v1510
          %v2968 = vunpack.c.l.b16 %v1511
          %v2969 = vunpack.c.l.b16 %v1512
          %v2970 = vunpack.c.l.b16 %v1513
          %v2971 = vunpack.c.l.b16 %v1514
          %v2972 = vunpack.c.l.b16 %v1515
          %v2973 = vunpack.c.l.b16 %v1516
          %v2974 = vunpack.c.l.b16 %v1517
          %v2975 = vunpack.c.l.b16 %v1518
          %v2976 = vunpack.c.l.b16 %v1519
          %v2977 = vunpack.c.l.b16 %v1520
          %v2978 = vunpack.c.l.b16 %v1521
          %v2979 = vunpack.c.l.b16 %v1522
          %v2980 = vunpack.c.l.b16 %v1523
          %v2981 = vunpack.c.l.b16 %v1524
          %v2982 = vunpack.c.l.b16 %v1525
          %v2983 = vunpack.c.l.b16 %v1526
          %v2984 = vunpack.c.l.b16 %v1527
          %v2985 = vunpack.c.l.b16 %v1528
          %v2986 = vpack.c.b16 %v2955, %v2954
          %v2987 = vpack.c.b16 %v2957, %v2956
          %v2988 = vpack.c.b16 %v2959, %v2958
          %v2989 = vpack.c.b16 %v2961, %v2960
          %v2990 = vpack.c.b16 %v2963, %v2962
          %v2991 = vpack.c.b16 %v2965, %v2964
          %v2992 = vpack.c.b16 %v2967, %v2966
          %v2993 = vpack.c.b16 %v2969, %v2968
          %v2994 = vpack.c.b16 %v2971, %v2970
          %v2995 = vpack.c.b16 %v2973, %v2972
          %v2996 = vpack.c.b16 %v2975, %v2974
          %v2997 = vpack.c.b16 %v2977, %v2976
          %v2998 = vpack.c.b16 %v2979, %v2978
          %v2999 = vpack.c.b16 %v2981, %v2980
          %v3000 = vpack.c.b16 %v2983, %v2982
          %v3001 = vpack.c.b16 %v2985, %v2984
          %3002 = vrot.lane.b32.xlu0 %v2986, 12
          %v3003 = vpop.permute.xlu0 %3002
          %3004 = vrot.lane.b32.xlu0 %v2987, 12
          %v3005 = vpop.permute.xlu0 %3004
          %3006 = vrot.lane.b32.xlu0 %v2988, 12
          %v3007 = vpop.permute.xlu0 %3006
          %3008 = vrot.lane.b32.xlu0 %v2989, 12
          %v3009 = vpop.permute.xlu0 %3008
          %3010 = vrot.lane.b32.xlu0 %v2990, 12
          %v3011 = vpop.permute.xlu0 %3010
          %3012 = vrot.lane.b32.xlu0 %v2991, 12
          %v3013 = vpop.permute.xlu0 %3012
          %3014 = vrot.lane.b32.xlu0 %v2992, 12
          %v3015 = vpop.permute.xlu0 %3014
          %3016 = vrot.lane.b32.xlu0 %v2993, 12
          %v3017 = vpop.permute.xlu0 %3016
          %3018 = vrot.lane.b32.xlu0 %v2994, 12
          %v3019 = vpop.permute.xlu0 %3018
          %3020 = vrot.lane.b32.xlu0 %v2995, 12
          %v3021 = vpop.permute.xlu0 %3020
          %3022 = vrot.lane.b32.xlu0 %v2996, 12
          %v3023 = vpop.permute.xlu0 %3022
          %3024 = vrot.lane.b32.xlu0 %v2997, 12
          %v3025 = vpop.permute.xlu0 %3024
          %3026 = vrot.lane.b32.xlu0 %v2998, 12
          %v3027 = vpop.permute.xlu0 %3026
          %3028 = vrot.lane.b32.xlu0 %v2999, 12
          %v3029 = vpop.permute.xlu0 %3028
          %3030 = vrot.lane.b32.xlu0 %v3000, 12
          %v3031 = vpop.permute.xlu0 %3030
          %3032 = vrot.lane.b32.xlu0 %v3001, 12
          %v3033 = vpop.permute.xlu0 %3032
          %v3034 = vunpack.c.l.b16 %v1558
          %v3035 = vunpack.c.l.b16 %v1568
          %v3036 = vunpack.c.l.b16 %v1582
          %v3037 = vunpack.c.l.b16 %v1592
          %v3038 = vunpack.c.l.b16 %v1606
          %v3039 = vunpack.c.l.b16 %v1616
          %v3040 = vunpack.c.l.b16 %v1630
          %v3041 = vunpack.c.l.b16 %v1640
          %v3042 = vunpack.c.l.b16 %v1654
          %v3043 = vunpack.c.l.b16 %v1664
          %v3044 = vunpack.c.l.b16 %v1678
          %v3045 = vunpack.c.l.b16 %v1688
          %v3046 = vunpack.c.l.b16 %v1702
          %v3047 = vunpack.c.l.b16 %v1712
          %v3048 = vunpack.c.l.b16 %v1726
          %v3049 = vunpack.c.l.b16 %v1736
          %v3050 = vunpack.c.l.b16 %v1750
          %v3051 = vunpack.c.l.b16 %v1760
          %v3052 = vunpack.c.l.b16 %v1774
          %v3053 = vunpack.c.l.b16 %v1784
          %v3054 = vunpack.c.l.b16 %v1798
          %v3055 = vunpack.c.l.b16 %v1808
          %v3056 = vunpack.c.l.b16 %v1822
          %v3057 = vunpack.c.l.b16 %v1832
          %v3058 = vunpack.c.l.b16 %v1846
          %v3059 = vunpack.c.l.b16 %v1856
          %v3060 = vunpack.c.l.b16 %v1870
          %v3061 = vunpack.c.l.b16 %v1880
          %v3062 = vunpack.c.l.b16 %v1894
          %v3063 = vunpack.c.l.b16 %v1904
          %v3064 = vunpack.c.l.b16 %v1918
          %v3065 = vunpack.c.l.b16 %v1928
          %v3066 = vpack.c.b16 %v3035, %v3034
          %v3067 = vpack.c.b16 %v3037, %v3036
          %v3068 = vpack.c.b16 %v3039, %v3038
          %v3069 = vpack.c.b16 %v3041, %v3040
          %v3070 = vpack.c.b16 %v3043, %v3042
          %v3071 = vpack.c.b16 %v3045, %v3044
          %v3072 = vpack.c.b16 %v3047, %v3046
          %v3073 = vpack.c.b16 %v3049, %v3048
          %v3074 = vpack.c.b16 %v3051, %v3050
          %v3075 = vpack.c.b16 %v3053, %v3052
          %v3076 = vpack.c.b16 %v3055, %v3054
          %v3077 = vpack.c.b16 %v3057, %v3056
          %v3078 = vpack.c.b16 %v3059, %v3058
          %v3079 = vpack.c.b16 %v3061, %v3060
          %v3080 = vpack.c.b16 %v3063, %v3062
          %v3081 = vpack.c.b16 %v3065, %v3064
          %3082 = vrot.lane.b32.xlu0 %v3066, 16
          %v3083 = vpop.permute.xlu0 %3082
          %3084 = vrot.lane.b32.xlu0 %v3067, 16
          %v3085 = vpop.permute.xlu0 %3084
          %3086 = vrot.lane.b32.xlu0 %v3068, 16
          %v3087 = vpop.permute.xlu0 %3086
          %3088 = vrot.lane.b32.xlu0 %v3069, 16
          %v3089 = vpop.permute.xlu0 %3088
          %3090 = vrot.lane.b32.xlu0 %v3070, 16
          %v3091 = vpop.permute.xlu0 %3090
          %3092 = vrot.lane.b32.xlu0 %v3071, 16
          %v3093 = vpop.permute.xlu0 %3092
          %3094 = vrot.lane.b32.xlu0 %v3072, 16
          %v3095 = vpop.permute.xlu0 %3094
          %3096 = vrot.lane.b32.xlu0 %v3073, 16
          %v3097 = vpop.permute.xlu0 %3096
          %3098 = vrot.lane.b32.xlu0 %v3074, 16
          %v3099 = vpop.permute.xlu0 %3098
          %3100 = vrot.lane.b32.xlu0 %v3075, 16
          %v3101 = vpop.permute.xlu0 %3100
          %3102 = vrot.lane.b32.xlu0 %v3076, 16
          %v3103 = vpop.permute.xlu0 %3102
          %3104 = vrot.lane.b32.xlu0 %v3077, 16
          %v3105 = vpop.permute.xlu0 %3104
          %3106 = vrot.lane.b32.xlu0 %v3078, 16
          %v3107 = vpop.permute.xlu0 %3106
          %3108 = vrot.lane.b32.xlu0 %v3079, 16
          %v3109 = vpop.permute.xlu0 %3108
          %3110 = vrot.lane.b32.xlu0 %v3080, 16
          %v3111 = vpop.permute.xlu0 %3110
          %3112 = vrot.lane.b32.xlu0 %v3081, 16
          %v3113 = vpop.permute.xlu0 %3112
          %v3114 = vunpack.c.l.b16 %v1996
          %v3115 = vunpack.c.l.b16 %v1999
          %v3116 = vunpack.c.l.b16 %v2003
          %v3117 = vunpack.c.l.b16 %v2006
          %v3118 = vunpack.c.l.b16 %v2010
          %v3119 = vunpack.c.l.b16 %v2013
          %v3120 = vunpack.c.l.b16 %v2017
          %v3121 = vunpack.c.l.b16 %v2020
          %v3122 = vunpack.c.l.b16 %v2024
          %v3123 = vunpack.c.l.b16 %v2027
          %v3124 = vunpack.c.l.b16 %v2031
          %v3125 = vunpack.c.l.b16 %v2034
          %v3126 = vunpack.c.l.b16 %v2038
          %v3127 = vunpack.c.l.b16 %v2041
          %v3128 = vunpack.c.l.b16 %v2045
          %v3129 = vunpack.c.l.b16 %v2048
          %v3130 = vunpack.c.l.b16 %v2052
          %v3131 = vunpack.c.l.b16 %v2055
          %v3132 = vunpack.c.l.b16 %v2059
          %v3133 = vunpack.c.l.b16 %v2062
          %v3134 = vunpack.c.l.b16 %v2066
          %v3135 = vunpack.c.l.b16 %v2069
          %v3136 = vunpack.c.l.b16 %v2073
          %v3137 = vunpack.c.l.b16 %v2076
          %v3138 = vunpack.c.l.b16 %v2080
          %v3139 = vunpack.c.l.b16 %v2083
          %v3140 = vunpack.c.l.b16 %v2087
          %v3141 = vunpack.c.l.b16 %v2090
          %v3142 = vunpack.c.l.b16 %v2094
          %v3143 = vunpack.c.l.b16 %v2097
          %v3144 = vunpack.c.l.b16 %v2101
          %v3145 = vunpack.c.l.b16 %v2104
          %v3146 = vpack.c.b16 %v3115, %v3114
          %v3147 = vpack.c.b16 %v3117, %v3116
          %v3148 = vpack.c.b16 %v3119, %v3118
          %v3149 = vpack.c.b16 %v3121, %v3120
          %v3150 = vpack.c.b16 %v3123, %v3122
          %v3151 = vpack.c.b16 %v3125, %v3124
          %v3152 = vpack.c.b16 %v3127, %v3126
          %v3153 = vpack.c.b16 %v3129, %v3128
          %v3154 = vpack.c.b16 %v3131, %v3130
          %v3155 = vpack.c.b16 %v3133, %v3132
          %v3156 = vpack.c.b16 %v3135, %v3134
          %v3157 = vpack.c.b16 %v3137, %v3136
          %v3158 = vpack.c.b16 %v3139, %v3138
          %v3159 = vpack.c.b16 %v3141, %v3140
          %v3160 = vpack.c.b16 %v3143, %v3142
          %v3161 = vpack.c.b16 %v3145, %v3144
          %3162 = vrot.lane.b32.xlu0 %v3146, 20
          %v3163 = vpop.permute.xlu0 %3162
          %3164 = vrot.lane.b32.xlu0 %v3147, 20
          %v3165 = vpop.permute.xlu0 %3164
          %3166 = vrot.lane.b32.xlu0 %v3148, 20
          %v3167 = vpop.permute.xlu0 %3166
          %3168 = vrot.lane.b32.xlu0 %v3149, 20
          %v3169 = vpop.permute.xlu0 %3168
          %3170 = vrot.lane.b32.xlu0 %v3150, 20
          %v3171 = vpop.permute.xlu0 %3170
          %3172 = vrot.lane.b32.xlu0 %v3151, 20
          %v3173 = vpop.permute.xlu0 %3172
          %3174 = vrot.lane.b32.xlu0 %v3152, 20
          %v3175 = vpop.permute.xlu0 %3174
          %3176 = vrot.lane.b32.xlu0 %v3153, 20
          %v3177 = vpop.permute.xlu0 %3176
          %3178 = vrot.lane.b32.xlu0 %v3154, 20
          %v3179 = vpop.permute.xlu0 %3178
          %3180 = vrot.lane.b32.xlu0 %v3155, 20
          %v3181 = vpop.permute.xlu0 %3180
          %3182 = vrot.lane.b32.xlu0 %v3156, 20
          %v3183 = vpop.permute.xlu0 %3182
          %3184 = vrot.lane.b32.xlu0 %v3157, 20
          %v3185 = vpop.permute.xlu0 %3184
          %3186 = vrot.lane.b32.xlu0 %v3158, 20
          %v3187 = vpop.permute.xlu0 %3186
          %3188 = vrot.lane.b32.xlu0 %v3159, 20
          %v3189 = vpop.permute.xlu0 %3188
          %3190 = vrot.lane.b32.xlu0 %v3160, 20
          %v3191 = vpop.permute.xlu0 %3190
          %3192 = vrot.lane.b32.xlu0 %v3161, 20
          %v3193 = vpop.permute.xlu0 %3192
          %v3210 = vunpack.c.l.b16 %v2106
          %v3211 = vunpack.c.l.b16 %v2107
          %v3212 = vunpack.c.l.b16 %v2108
          %v3213 = vunpack.c.l.b16 %v2109
          %v3214 = vunpack.c.l.b16 %v2110
          %v3215 = vunpack.c.l.b16 %v2111
          %v3216 = vunpack.c.l.b16 %v2112
          %v3217 = vunpack.c.l.b16 %v2113
          %v3218 = vunpack.c.l.b16 %v2114
          %v3219 = vunpack.c.l.b16 %v2115
          %v3220 = vunpack.c.l.b16 %v2116
          %v3221 = vunpack.c.l.b16 %v2117
          %v3222 = vunpack.c.l.b16 %v2118
          %v3223 = vunpack.c.l.b16 %v2119
          %v3224 = vunpack.c.l.b16 %v2120
          %v3225 = vunpack.c.l.b16 %v2121
          %v3226 = vunpack.c.l.b16 %v2122
          %v3227 = vunpack.c.l.b16 %v2123
          %v3228 = vunpack.c.l.b16 %v2124
          %v3229 = vunpack.c.l.b16 %v2125
          %v3230 = vunpack.c.l.b16 %v2126
          %v3231 = vunpack.c.l.b16 %v2127
          %v3232 = vunpack.c.l.b16 %v2128
          %v3233 = vunpack.c.l.b16 %v2129
          %v3234 = vunpack.c.l.b16 %v2130
          %v3235 = vunpack.c.l.b16 %v2131
          %v3236 = vunpack.c.l.b16 %v2132
          %v3237 = vunpack.c.l.b16 %v2133
          %v3238 = vunpack.c.l.b16 %v2134
          %v3239 = vunpack.c.l.b16 %v2135
          %v3240 = vunpack.c.l.b16 %v2136
          %v3241 = vunpack.c.l.b16 %v2137
          %v3242 = vpack.c.b16 %v3211, %v3210
          %v3243 = vpack.c.b16 %v3213, %v3212
          %v3244 = vpack.c.b16 %v3215, %v3214
          %v3245 = vpack.c.b16 %v3217, %v3216
          %v3246 = vpack.c.b16 %v3219, %v3218
          %v3247 = vpack.c.b16 %v3221, %v3220
          %v3248 = vpack.c.b16 %v3223, %v3222
          %v3249 = vpack.c.b16 %v3225, %v3224
          %v3250 = vpack.c.b16 %v3227, %v3226
          %v3251 = vpack.c.b16 %v3229, %v3228
          %v3252 = vpack.c.b16 %v3231, %v3230
          %v3253 = vpack.c.b16 %v3233, %v3232
          %v3254 = vpack.c.b16 %v3235, %v3234
          %v3255 = vpack.c.b16 %v3237, %v3236
          %v3256 = vpack.c.b16 %v3239, %v3238
          %v3257 = vpack.c.b16 %v3241, %v3240
          %3258 = vrot.lane.b32.xlu0 %v3242, 24
          %v3259 = vpop.permute.xlu0 %3258
          %3260 = vrot.lane.b32.xlu0 %v3243, 24
          %v3261 = vpop.permute.xlu0 %3260
          %3262 = vrot.lane.b32.xlu0 %v3244, 24
          %v3263 = vpop.permute.xlu0 %3262
          %3264 = vrot.lane.b32.xlu0 %v3245, 24
          %v3265 = vpop.permute.xlu0 %3264
          %3266 = vrot.lane.b32.xlu0 %v3246, 24
          %v3267 = vpop.permute.xlu0 %3266
          %3268 = vrot.lane.b32.xlu0 %v3247, 24
          %v3269 = vpop.permute.xlu0 %3268
          %3270 = vrot.lane.b32.xlu0 %v3248, 24
          %v3271 = vpop.permute.xlu0 %3270
          %3272 = vrot.lane.b32.xlu0 %v3249, 24
          %v3273 = vpop.permute.xlu0 %3272
          %3274 = vrot.lane.b32.xlu0 %v3250, 24
          %v3275 = vpop.permute.xlu0 %3274
          %3276 = vrot.lane.b32.xlu0 %v3251, 24
          %v3277 = vpop.permute.xlu0 %3276
          %3278 = vrot.lane.b32.xlu0 %v3252, 24
          %v3279 = vpop.permute.xlu0 %3278
          %3280 = vrot.lane.b32.xlu0 %v3253, 24
          %v3281 = vpop.permute.xlu0 %3280
          %3282 = vrot.lane.b32.xlu0 %v3254, 24
          %v3283 = vpop.permute.xlu0 %3282
          %3284 = vrot.lane.b32.xlu0 %v3255, 24
          %v3285 = vpop.permute.xlu0 %3284
          %3286 = vrot.lane.b32.xlu0 %v3256, 24
          %v3287 = vpop.permute.xlu0 %3286
          %3288 = vrot.lane.b32.xlu0 %v3257, 24
          %v3289 = vpop.permute.xlu0 %3288
          %v3290 = vunpack.c.l.b16 %v2167
          %v3291 = vunpack.c.l.b16 %v2177
          %v3292 = vunpack.c.l.b16 %v2191
          %v3293 = vunpack.c.l.b16 %v2201
          %v3294 = vunpack.c.l.b16 %v2215
          %v3295 = vunpack.c.l.b16 %v2225
          %v3296 = vunpack.c.l.b16 %v2239
          %v3297 = vunpack.c.l.b16 %v2249
          %v3298 = vunpack.c.l.b16 %v2263
          %v3299 = vunpack.c.l.b16 %v2273
          %v3300 = vunpack.c.l.b16 %v2287
          %v3301 = vunpack.c.l.b16 %v2297
          %v3302 = vunpack.c.l.b16 %v2311
          %v3303 = vunpack.c.l.b16 %v2321
          %v3304 = vunpack.c.l.b16 %v2335
          %v3305 = vunpack.c.l.b16 %v2345
          %v3306 = vunpack.c.l.b16 %v2359
          %v3307 = vunpack.c.l.b16 %v2369
          %v3308 = vunpack.c.l.b16 %v2383
          %v3309 = vunpack.c.l.b16 %v2393
          %v3310 = vunpack.c.l.b16 %v2407
          %v3311 = vunpack.c.l.b16 %v2417
          %v3312 = vunpack.c.l.b16 %v2431
          %v3313 = vunpack.c.l.b16 %v2441
          %v3314 = vunpack.c.l.b16 %v2455
          %v3315 = vunpack.c.l.b16 %v2465
          %v3316 = vunpack.c.l.b16 %v2479
          %v3317 = vunpack.c.l.b16 %v2489
          %v3318 = vunpack.c.l.b16 %v2503
          %v3319 = vunpack.c.l.b16 %v2513
          %v3320 = vunpack.c.l.b16 %v2527
          %v3321 = vunpack.c.l.b16 %v2537
          %v3322 = vpack.c.b16 %v3291, %v3290
          %v3323 = vpack.c.b16 %v3293, %v3292
          %v3324 = vpack.c.b16 %v3295, %v3294
          %v3325 = vpack.c.b16 %v3297, %v3296
          %v3326 = vpack.c.b16 %v3299, %v3298
          %v3327 = vpack.c.b16 %v3301, %v3300
          %v3328 = vpack.c.b16 %v3303, %v3302
          %v3329 = vpack.c.b16 %v3305, %v3304
          %v3330 = vpack.c.b16 %v3307, %v3306
          %v3331 = vpack.c.b16 %v3309, %v3308
          %v3332 = vpack.c.b16 %v3311, %v3310
          %v3333 = vpack.c.b16 %v3313, %v3312
          %v3334 = vpack.c.b16 %v3315, %v3314
          %v3335 = vpack.c.b16 %v3317, %v3316
          %v3336 = vpack.c.b16 %v3319, %v3318
          %v3337 = vpack.c.b16 %v3321, %v3320
          %3338 = vrot.lane.b32.xlu0 %v3322, 28
          %v3339 = vpop.permute.xlu0 %3338
          %3340 = vrot.lane.b32.xlu0 %v3323, 28
          %v3341 = vpop.permute.xlu0 %3340
          %3342 = vrot.lane.b32.xlu0 %v3324, 28
          %v3343 = vpop.permute.xlu0 %3342
          %3344 = vrot.lane.b32.xlu0 %v3325, 28
          %v3345 = vpop.permute.xlu0 %3344
          %3346 = vrot.lane.b32.xlu0 %v3326, 28
          %v3347 = vpop.permute.xlu0 %3346
          %3348 = vrot.lane.b32.xlu0 %v3327, 28
          %v3349 = vpop.permute.xlu0 %3348
          %3350 = vrot.lane.b32.xlu0 %v3328, 28
          %v3351 = vpop.permute.xlu0 %3350
          %3352 = vrot.lane.b32.xlu0 %v3329, 28
          %v3353 = vpop.permute.xlu0 %3352
          %3354 = vrot.lane.b32.xlu0 %v3330, 28
          %v3355 = vpop.permute.xlu0 %3354
          %3356 = vrot.lane.b32.xlu0 %v3331, 28
          %v3357 = vpop.permute.xlu0 %3356
          %3358 = vrot.lane.b32.xlu0 %v3332, 28
          %v3359 = vpop.permute.xlu0 %3358
          %3360 = vrot.lane.b32.xlu0 %v3333, 28
          %v3361 = vpop.permute.xlu0 %3360
          %3362 = vrot.lane.b32.xlu0 %v3334, 28
          %v3363 = vpop.permute.xlu0 %3362
          %3364 = vrot.lane.b32.xlu0 %v3335, 28
          %v3365 = vpop.permute.xlu0 %3364
          %3366 = vrot.lane.b32.xlu0 %v3336, 28
          %v3367 = vpop.permute.xlu0 %3366
          %3368 = vrot.lane.b32.xlu0 %v3337, 28
          %v3369 = vpop.permute.xlu0 %3368
          %v3370 = vunpack.c.l.b16 %v2605
          %v3371 = vunpack.c.l.b16 %v2608
          %v3372 = vunpack.c.l.b16 %v2612
          %v3373 = vunpack.c.l.b16 %v2615
          %v3374 = vunpack.c.l.b16 %v2619
          %v3375 = vunpack.c.l.b16 %v2622
          %v3376 = vunpack.c.l.b16 %v2626
          %v3377 = vunpack.c.l.b16 %v2629
          %v3378 = vunpack.c.l.b16 %v2633
          %v3379 = vunpack.c.l.b16 %v2636
          %v3380 = vunpack.c.l.b16 %v2640
          %v3381 = vunpack.c.l.b16 %v2643
          %v3382 = vunpack.c.l.b16 %v2647
          %v3383 = vunpack.c.l.b16 %v2650
          %v3384 = vunpack.c.l.b16 %v2654
          %v3385 = vunpack.c.l.b16 %v2657
          %v3386 = vunpack.c.l.b16 %v2661
          %v3387 = vunpack.c.l.b16 %v2664
          %v3388 = vunpack.c.l.b16 %v2668
          %v3389 = vunpack.c.l.b16 %v2671
          %v3390 = vunpack.c.l.b16 %v2675
          %v3391 = vunpack.c.l.b16 %v2678
          %v3392 = vunpack.c.l.b16 %v2682
          %v3393 = vunpack.c.l.b16 %v2685
          %v3394 = vunpack.c.l.b16 %v2689
          %v3395 = vunpack.c.l.b16 %v2692
          %v3396 = vunpack.c.l.b16 %v2696
          %v3397 = vunpack.c.l.b16 %v2699
          %v3398 = vunpack.c.l.b16 %v2703
          %v3399 = vunpack.c.l.b16 %v2706
          %v3400 = vunpack.c.l.b16 %v2710
          %v3401 = vunpack.c.l.b16 %v2713
          %v3402 = vpack.c.b16 %v3371, %v3370
          %v3403 = vpack.c.b16 %v3373, %v3372
          %v3404 = vpack.c.b16 %v3375, %v3374
          %v3405 = vpack.c.b16 %v3377, %v3376
          %v3406 = vpack.c.b16 %v3379, %v3378
          %v3407 = vpack.c.b16 %v3381, %v3380
          %v3408 = vpack.c.b16 %v3383, %v3382
          %v3409 = vpack.c.b16 %v3385, %v3384
          %v3410 = vpack.c.b16 %v3387, %v3386
          %v3411 = vpack.c.b16 %v3389, %v3388
          %v3412 = vpack.c.b16 %v3391, %v3390
          %v3413 = vpack.c.b16 %v3393, %v3392
          %v3414 = vpack.c.b16 %v3395, %v3394
          %v3415 = vpack.c.b16 %v3397, %v3396
          %v3416 = vpack.c.b16 %v3399, %v3398
          %v3417 = vpack.c.b16 %v3401, %v3400
          %3418 = vrot.lane.b32.xlu0 %v3402, 32
          %v3419 = vpop.permute.xlu0 %3418
          %3420 = vrot.lane.b32.xlu0 %v3403, 32
          %v3421 = vpop.permute.xlu0 %3420
          %3422 = vrot.lane.b32.xlu0 %v3404, 32
          %v3423 = vpop.permute.xlu0 %3422
          %3424 = vrot.lane.b32.xlu0 %v3405, 32
          %v3425 = vpop.permute.xlu0 %3424
          %3426 = vrot.lane.b32.xlu0 %v3406, 32
          %v3427 = vpop.permute.xlu0 %3426
          %3428 = vrot.lane.b32.xlu0 %v3407, 32
          %v3429 = vpop.permute.xlu0 %3428
          %3430 = vrot.lane.b32.xlu0 %v3408, 32
          %v3431 = vpop.permute.xlu0 %3430
          %3432 = vrot.lane.b32.xlu0 %v3409, 32
          %v3433 = vpop.permute.xlu0 %3432
          %3434 = vrot.lane.b32.xlu0 %v3410, 32
          %v3435 = vpop.permute.xlu0 %3434
          %3436 = vrot.lane.b32.xlu0 %v3411, 32
          %v3437 = vpop.permute.xlu0 %3436
          %3438 = vrot.lane.b32.xlu0 %v3412, 32
          %v3439 = vpop.permute.xlu0 %3438
          %3440 = vrot.lane.b32.xlu0 %v3413, 32
          %v3441 = vpop.permute.xlu0 %3440
          %3442 = vrot.lane.b32.xlu0 %v3414, 32
          %v3443 = vpop.permute.xlu0 %3442
          %3444 = vrot.lane.b32.xlu0 %v3415, 32
          %v3445 = vpop.permute.xlu0 %3444
          %3446 = vrot.lane.b32.xlu0 %v3416, 32
          %v3447 = vpop.permute.xlu0 %3446
          %3448 = vrot.lane.b32.xlu0 %v3417, 32
          %v3449 = vpop.permute.xlu0 %3448
          %vm3450 = vcmask 31744
          %v3453 = vsel %vm3450, %v2762, %v2827
          %v3456 = vsel %vm3450, %v2763, %v2829
          %v3459 = vsel %vm3450, %v2764, %v2831
          %v3462 = vsel %vm3450, %v2765, %v2833
          %v3465 = vsel %vm3450, %v2766, %v2835
          %v3468 = vsel %vm3450, %v2767, %v2837
          %v3471 = vsel %vm3450, %v2768, %v2839
          %v3474 = vsel %vm3450, %v2769, %v2841
          %v3477 = vsel %vm3450, %v2770, %v2843
          %v3480 = vsel %vm3450, %v2771, %v2845
          %v3483 = vsel %vm3450, %v2772, %v2847
          %v3486 = vsel %vm3450, %v2773, %v2849
          %v3489 = vsel %vm3450, %v2774, %v2851
          %v3492 = vsel %vm3450, %v2775, %v2853
          %v3495 = vsel %vm3450, %v2776, %v2855
          %v3498 = vsel %vm3450, %v2777, %v2857
          %vm3499 = vcmask 64512
          %v3501 = vsel %vm3499, %v3453, %v2907
          %v3503 = vsel %vm3499, %v3456, %v2909
          %v3505 = vsel %vm3499, %v3459, %v2911
          %v3507 = vsel %vm3499, %v3462, %v2913
          %v3509 = vsel %vm3499, %v3465, %v2915
          %v3511 = vsel %vm3499, %v3468, %v2917
          %v3513 = vsel %vm3499, %v3471, %v2919
          %v3515 = vsel %vm3499, %v3474, %v2921
          %v3517 = vsel %vm3499, %v3477, %v2923
          %v3519 = vsel %vm3499, %v3480, %v2925
          %v3521 = vsel %vm3499, %v3483, %v2927
          %v3523 = vsel %vm3499, %v3486, %v2929
          %v3525 = vsel %vm3499, %v3489, %v2931
          %v3527 = vsel %vm3499, %v3492, %v2933
          %v3529 = vsel %vm3499, %v3495, %v2935
          %v3531 = vsel %vm3499, %v3498, %v2937
          %vm3532 = vcmask 97280
          %v3534 = vsel %vm3532, %v3501, %v3003
          %v3536 = vsel %vm3532, %v3503, %v3005
          %v3538 = vsel %vm3532, %v3505, %v3007
          %v3540 = vsel %vm3532, %v3507, %v3009
          %v3542 = vsel %vm3532, %v3509, %v3011
          %v3544 = vsel %vm3532, %v3511, %v3013
          %v3546 = vsel %vm3532, %v3513, %v3015
          %v3548 = vsel %vm3532, %v3515, %v3017
          %v3550 = vsel %vm3532, %v3517, %v3019
          %v3552 = vsel %vm3532, %v3519, %v3021
          %v3554 = vsel %vm3532, %v3521, %v3023
          %v3556 = vsel %vm3532, %v3523, %v3025
          %v3558 = vsel %vm3532, %v3525, %v3027
          %v3560 = vsel %vm3532, %v3527, %v3029
          %v3562 = vsel %vm3532, %v3529, %v3031
          %v3564 = vsel %vm3532, %v3531, %v3033
          %vm3565 = vcmask 130048
          %v3567 = vsel %vm3565, %v3534, %v3083
          %v3569 = vsel %vm3565, %v3536, %v3085
          %v3571 = vsel %vm3565, %v3538, %v3087
          %v3573 = vsel %vm3565, %v3540, %v3089
          %v3575 = vsel %vm3565, %v3542, %v3091
          %v3577 = vsel %vm3565, %v3544, %v3093
          %v3579 = vsel %vm3565, %v3546, %v3095
          %v3581 = vsel %vm3565, %v3548, %v3097
          %v3583 = vsel %vm3565, %v3550, %v3099
          %v3585 = vsel %vm3565, %v3552, %v3101
          %v3587 = vsel %vm3565, %v3554, %v3103
          %v3589 = vsel %vm3565, %v3556, %v3105
          %v3591 = vsel %vm3565, %v3558, %v3107
          %v3593 = vsel %vm3565, %v3560, %v3109
          %v3595 = vsel %vm3565, %v3562, %v3111
          %v3597 = vsel %vm3565, %v3564, %v3113
          %vm3598 = vcmask 162816
          %v3600 = vsel %vm3598, %v3567, %v3163
          %v3602 = vsel %vm3598, %v3569, %v3165
          %v3604 = vsel %vm3598, %v3571, %v3167
          %v3606 = vsel %vm3598, %v3573, %v3169
          %v3608 = vsel %vm3598, %v3575, %v3171
          %v3610 = vsel %vm3598, %v3577, %v3173
          %v3612 = vsel %vm3598, %v3579, %v3175
          %v3614 = vsel %vm3598, %v3581, %v3177
          %v3616 = vsel %vm3598, %v3583, %v3179
          %v3618 = vsel %vm3598, %v3585, %v3181
          %v3620 = vsel %vm3598, %v3587, %v3183
          %v3622 = vsel %vm3598, %v3589, %v3185
          %v3624 = vsel %vm3598, %v3591, %v3187
          %v3626 = vsel %vm3598, %v3593, %v3189
          %v3628 = vsel %vm3598, %v3595, %v3191
          %v3630 = vsel %vm3598, %v3597, %v3193
          %vm3631 = vcmask 195584
          %v3633 = vsel %vm3631, %v3600, %v3259
          %v3635 = vsel %vm3631, %v3602, %v3261
          %v3637 = vsel %vm3631, %v3604, %v3263
          %v3639 = vsel %vm3631, %v3606, %v3265
          %v3641 = vsel %vm3631, %v3608, %v3267
          %v3643 = vsel %vm3631, %v3610, %v3269
          %v3645 = vsel %vm3631, %v3612, %v3271
          %v3647 = vsel %vm3631, %v3614, %v3273
          %v3649 = vsel %vm3631, %v3616, %v3275
          %v3651 = vsel %vm3631, %v3618, %v3277
          %v3653 = vsel %vm3631, %v3620, %v3279
          %v3655 = vsel %vm3631, %v3622, %v3281
          %v3657 = vsel %vm3631, %v3624, %v3283
          %v3659 = vsel %vm3631, %v3626, %v3285
          %v3661 = vsel %vm3631, %v3628, %v3287
          %v3663 = vsel %vm3631, %v3630, %v3289
          %vm3664 = vcmask 228352
          %v3666 = vsel %vm3664, %v3633, %v3339
          %v3668 = vsel %vm3664, %v3635, %v3341
          %v3670 = vsel %vm3664, %v3637, %v3343
          %v3672 = vsel %vm3664, %v3639, %v3345
          %v3674 = vsel %vm3664, %v3641, %v3347
          %v3676 = vsel %vm3664, %v3643, %v3349
          %v3678 = vsel %vm3664, %v3645, %v3351
          %v3680 = vsel %vm3664, %v3647, %v3353
          %v3682 = vsel %vm3664, %v3649, %v3355
          %v3684 = vsel %vm3664, %v3651, %v3357
          %v3686 = vsel %vm3664, %v3653, %v3359
          %v3688 = vsel %vm3664, %v3655, %v3361
          %v3690 = vsel %vm3664, %v3657, %v3363
          %v3692 = vsel %vm3664, %v3659, %v3365
          %v3694 = vsel %vm3664, %v3661, %v3367
          %v3696 = vsel %vm3664, %v3663, %v3369
          %vm3697 = vcmask 261120
          %v3699 = vsel %vm3697, %v3666, %v3419
          %v3702 = vsel %vm3697, %v3668, %v3421
          %v3705 = vsel %vm3697, %v3670, %v3423
          %v3708 = vsel %vm3697, %v3672, %v3425
          %v3711 = vsel %vm3697, %v3674, %v3427
          %v3714 = vsel %vm3697, %v3676, %v3429
          %v3717 = vsel %vm3697, %v3678, %v3431
          %v3720 = vsel %vm3697, %v3680, %v3433
          %v3723 = vsel %vm3697, %v3682, %v3435
          %v3726 = vsel %vm3697, %v3684, %v3437
          %v3729 = vsel %vm3697, %v3686, %v3439
          %v3732 = vsel %vm3697, %v3688, %v3441
          %v3735 = vsel %vm3697, %v3690, %v3443
          %v3738 = vsel %vm3697, %v3692, %v3445
          %v3741 = vsel %vm3697, %v3694, %v3447
          %v3744 = vsel %vm3697, %v3696, %v3449
          %vm3746 = vcmask 293888
          %3747 = vst.msk [vmem:[#allocation3] sm:$0xff] %vm3746, %v3699
          %3748 = vst.msk [vmem:[#allocation3 + $0x8] sm:$0xff] %vm3746, %v3702
          %3749 = vst.msk [vmem:[#allocation3 + $0x10] sm:$0xff] %vm3746, %v3705
          %3750 = vst.msk [vmem:[#allocation3 + $0x18] sm:$0xff] %vm3746, %v3708
          %3751 = vst.msk [vmem:[#allocation3 + $0x20] sm:$0xff] %vm3746, %v3711
          %3752 = vst.msk [vmem:[#allocation3 + $0x28] sm:$0xff] %vm3746, %v3714
          %3753 = vst.msk [vmem:[#allocation3 + $0x30] sm:$0xff] %vm3746, %v3717
          %3754 = vst.msk [vmem:[#allocation3 + $0x38] sm:$0xff] %vm3746, %v3720
          %3755 = vst.msk [vmem:[#allocation3 + $0x40] sm:$0xff] %vm3746, %v3723
          %3756 = vst.msk [vmem:[#allocation3 + $0x48] sm:$0xff] %vm3746, %v3726
          %3757 = vst.msk [vmem:[#allocation3 + $0x50] sm:$0xff] %vm3746, %v3729
          %3758 = vst.msk [vmem:[#allocation3 + $0x58] sm:$0xff] %vm3746, %v3732
          %3759 = vst.msk [vmem:[#allocation3 + $0x60] sm:$0xff] %vm3746, %v3735
          %3760 = vst.msk [vmem:[#allocation3 + $0x68] sm:$0xff] %vm3746, %v3738
          %3761 = vst.msk [vmem:[#allocation3 + $0x70] sm:$0xff] %vm3746, %v3741
          %3762 = vst.msk [vmem:[#allocation3 + $0x78] sm:$0xff] %vm3746, %v3744
        $region40: #{qconv2d_forward.1} parent=31 // pred_fallthru
          _
        %s3763 = smul.u32 %s20, 128
        %s3764 = sshra.s32 %s3763, 7
        %s3765 = sand.u32 %s3763, 127
        %s3766 = smul.addr %s3764, 4
        %s3767 = scalar_lea.vmem %s2, %s3766
        %v3768 = vld [vmem:[%s3767] sm:$0xf]
        %v3769 = vld [vmem:[%s3767 + $0x4] sm:$0xf]
        %v3770 = vld [vmem:[%s3767 + $0x8] sm:$0xf]
        %v3771 = vld [vmem:[%s3767 + $0xc] sm:$0xf]
        %v3772 = vld [vmem:[%s3767 + $0x10] sm:$0x3]
        %v3773 = vld [vmem:[#allocation3] sm:$0xff]
        %v3774 = vld [vmem:[#allocation3 + $0x8] sm:$0xff]
        %v3775 = vld [vmem:[#allocation3 + $0x10] sm:$0xff]
        %v3776 = vld [vmem:[#allocation3 + $0x18] sm:$0xff]
        %v3777 = vld [vmem:[#allocation3 + $0x20] sm:$0xff]
        %v3778 = vld [vmem:[#allocation3 + $0x28] sm:$0xff]
        %v3779 = vld [vmem:[#allocation3 + $0x30] sm:$0xff]
        %v3780 = vld [vmem:[#allocation3 + $0x38] sm:$0xff]
        %v3781 = vld [vmem:[#allocation3 + $0x40] sm:$0xff]
        %v3782 = vld [vmem:[#allocation3 + $0x48] sm:$0xff]
        %v3783 = vld [vmem:[#allocation3 + $0x50] sm:$0xff]
        %v3784 = vld [vmem:[#allocation3 + $0x58] sm:$0xff]
        %v3785 = vld [vmem:[#allocation3 + $0x60] sm:$0xff]
        %v3786 = vld [vmem:[#allocation3 + $0x68] sm:$0xff]
        %v3787 = vld [vmem:[#allocation3 + $0x70] sm:$0xff]
        %v3788 = vld [vmem:[#allocation3 + $0x78] sm:$0xff]
        %v3794 = vunpack.c.l.b16 %v3768
        %v3795 = vunpack.c.l.b16 %v3769
        %v3796 = vunpack.c.l.b16 %v3770
        %v3797 = vunpack.c.l.b16 %v3771
        %v3798 = vunpack.c.l.b16 %v3772
        %v3799 = vpack.c.b16 %v3795, %v3794
        %v3800 = vpack.c.b16 %v3797, %v3796
        %v3801 = vpack.c.b16 %v3798, %v3798
        %vm3804 = vcmask 293888
        %v3806 = vsel %vm3804, %v3773, 0
        %v3809 = vsel %vm3804, %v3774, 0
        %v3812 = vsel %vm3804, %v3775, 0
        %v3815 = vsel %vm3804, %v3776, 0
        %v3818 = vsel %vm3804, %v3777, 0
        %v3821 = vsel %vm3804, %v3778, 0
        %v3824 = vsel %vm3804, %v3779, 0
        %v3827 = vsel %vm3804, %v3780, 0
        %v3830 = vsel %vm3804, %v3781, 0
        %v3833 = vsel %vm3804, %v3782, 0
        %v3836 = vsel %vm3804, %v3783, 0
        %v3839 = vsel %vm3804, %v3784, 0
        %v3842 = vsel %vm3804, %v3785, 0
        %v3845 = vsel %vm3804, %v3786, 0
        %v3848 = vsel %vm3804, %v3787, 0
        %v3851 = vsel %vm3804, %v3788, 0
        %vm3853 = vcmask 1041408
        %v3855 = vsel %vm3853, %v3801, 0
        %3857 = vmatprep.subr.bf16.mxu0 0
        %3858 = vmatpush1.bf16.msra.mxu0 %v3799
        %3859 = vmatprep.subr.bf16.mxu0 0
        %3860 = vmatpush1.bf16.msra.mxu0 %v3800
        %3861 = vmatprep.subr.bf16.mxu0 0
        %3862 = vmatpush1.bf16.msra.mxu0 %v3855
        %3863 = vmatprep.subr.bf16.mxu0 0
        %3864 = vmatpush1.bf16.msra.mxu0 0
        %3865 = vmatprep.subr.bf16.mxu0 0
        %3866 = vmatpush1.bf16.msra.mxu0 0
        %3867 = vmatprep.subr.bf16.mxu0 0
        %3868 = vmatpush1.bf16.msra.mxu0 0
        %3869 = vmatprep.subr.bf16.mxu0 0
        %3870 = vmatpush1.bf16.msra.mxu0 0
        %3871 = vmatprep.subr.bf16.mxu0 0
        %3872 = vmatpush1.bf16.msra.mxu0 0
        %3873 = vmatprep.subr.bf16.mxu0 0
        %3874 = vmatpush1.bf16.msra.mxu0 0
        %3875 = vmatprep.subr.bf16.mxu0 0
        %3876 = vmatpush1.bf16.msra.mxu0 0
        %3877 = vmatprep.subr.bf16.mxu0 0
        %3878 = vmatpush1.bf16.msra.mxu0 0
        %3879 = vmatprep.subr.bf16.mxu0 0
        %3880 = vmatpush1.bf16.msra.mxu0 0
        %3881 = vmatprep.subr.bf16.mxu0 0
        %3882 = vmatpush1.bf16.msra.mxu0 0
        %3883 = vmatprep.subr.bf16.mxu0 0
        %3884 = vmatpush1.bf16.msra.mxu0 0
        %3885 = vmatprep.subr.bf16.mxu0 0
        %3886 = vmatpush1.bf16.msra.mxu0 0
        %3887 = vmatprep.subr.bf16.mxu0 0
        %3888 = vmatpush1.bf16.msra.mxu0 0
        %3889 = vmatprep.mubr.bf16.mxu0 0
        %3890 = vmatmul.mubr.bf16.gmra.mrb[0].mxu0 %v3806
        %v3891 = vpop.f32.mrb[0].mxu0
        %v3892 = vadd.f32 0.0, %v3891
        %v3893 = vpop.f32.mrb[0].mxu0
        %v3894 = vpop.f32.mrb[0].mxu0
        %v3895 = vadd.f32 0.0, %v3894
        %v3896 = vpop.f32.mrb[0].mxu0
        %3897 = vmatprep.mubr.bf16.mxu0 0
        %3898 = vmatmul.mubr.bf16.gmra.mrb[0].mxu0 %v3809
        %v3899 = vpop.f32.mrb[0].mxu0
        %v3900 = vadd.f32 0.0, %v3899
        %v3901 = vpop.f32.mrb[0].mxu0
        %v3902 = vpop.f32.mrb[0].mxu0
        %v3903 = vadd.f32 0.0, %v3902
        %v3904 = vpop.f32.mrb[0].mxu0
        %3905 = vmatprep.mubr.bf16.mxu0 0
        %3906 = vmatmul.mubr.bf16.gmra.mrb[0].mxu0 %v3812
        %v3907 = vpop.f32.mrb[0].mxu0
        %v3908 = vadd.f32 0.0, %v3907
        %v3909 = vpop.f32.mrb[0].mxu0
        %v3910 = vpop.f32.mrb[0].mxu0
        %v3911 = vadd.f32 0.0, %v3910
        %v3912 = vpop.f32.mrb[0].mxu0
        %3913 = vmatprep.mubr.bf16.mxu0 0
        %3914 = vmatmul.mubr.bf16.gmra.mrb[0].mxu0 %v3815
        %v3915 = vpop.f32.mrb[0].mxu0
        %v3916 = vadd.f32 0.0, %v3915
        %v3917 = vpop.f32.mrb[0].mxu0
        %v3918 = vpop.f32.mrb[0].mxu0
        %v3919 = vadd.f32 0.0, %v3918
        %v3920 = vpop.f32.mrb[0].mxu0
        %3921 = vmatprep.mubr.bf16.mxu0 0
        %3922 = vmatmul.mubr.bf16.gmra.mrb[0].mxu0 %v3818
        %v3923 = vpop.f32.mrb[0].mxu0
        %v3924 = vadd.f32 0.0, %v3923
        %v3925 = vpop.f32.mrb[0].mxu0
        %v3926 = vpop.f32.mrb[0].mxu0
        %v3927 = vadd.f32 0.0, %v3926
        %v3928 = vpop.f32.mrb[0].mxu0
        %3929 = vmatprep.mubr.bf16.mxu0 0
        %3930 = vmatmul.mubr.bf16.gmra.mrb[0].mxu0 %v3821
        %v3931 = vpop.f32.mrb[0].mxu0
        %v3932 = vadd.f32 0.0, %v3931
        %v3933 = vpop.f32.mrb[0].mxu0
        %v3934 = vpop.f32.mrb[0].mxu0
        %v3935 = vadd.f32 0.0, %v3934
        %v3936 = vpop.f32.mrb[0].mxu0
        %3937 = vmatprep.mubr.bf16.mxu0 0
        %3938 = vmatmul.mubr.bf16.gmra.mrb[0].mxu0 %v3824
        %v3939 = vpop.f32.mrb[0].mxu0
        %v3940 = vadd.f32 0.0, %v3939
        %v3941 = vpop.f32.mrb[0].mxu0
        %v3942 = vpop.f32.mrb[0].mxu0
        %v3943 = vadd.f32 0.0, %v3942
        %v3944 = vpop.f32.mrb[0].mxu0
        %3945 = vmatprep.mubr.bf16.mxu0 0
        %3946 = vmatmul.mubr.bf16.gmra.mrb[0].mxu0 %v3827
        %v3947 = vpop.f32.mrb[0].mxu0
        %v3948 = vadd.f32 0.0, %v3947
        %v3949 = vpop.f32.mrb[0].mxu0
        %v3950 = vpop.f32.mrb[0].mxu0
        %v3951 = vadd.f32 0.0, %v3950
        %v3952 = vpop.f32.mrb[0].mxu0
        %3953 = vmatprep.mubr.bf16.mxu0 0
        %3954 = vmatmul.mubr.bf16.gmra.mrb[0].mxu0 %v3830
        %v3955 = vpop.f32.mrb[0].mxu0
        %v3956 = vadd.f32 0.0, %v3955
        %v3957 = vpop.f32.mrb[0].mxu0
        %v3958 = vpop.f32.mrb[0].mxu0
        %v3959 = vadd.f32 0.0, %v3958
        %v3960 = vpop.f32.mrb[0].mxu0
        %3961 = vmatprep.mubr.bf16.mxu0 0
        %3962 = vmatmul.mubr.bf16.gmra.mrb[0].mxu0 %v3833
        %v3963 = vpop.f32.mrb[0].mxu0
        %v3964 = vadd.f32 0.0, %v3963
        %v3965 = vpop.f32.mrb[0].mxu0
        %v3966 = vpop.f32.mrb[0].mxu0
        %v3967 = vadd.f32 0.0, %v3966
        %v3968 = vpop.f32.mrb[0].mxu0
        %3969 = vmatprep.mubr.bf16.mxu0 0
        %3970 = vmatmul.mubr.bf16.gmra.mrb[0].mxu0 %v3836
        %v3971 = vpop.f32.mrb[0].mxu0
        %v3972 = vadd.f32 0.0, %v3971
        %v3973 = vpop.f32.mrb[0].mxu0
        %v3974 = vpop.f32.mrb[0].mxu0
        %v3975 = vadd.f32 0.0, %v3974
        %v3976 = vpop.f32.mrb[0].mxu0
        %3977 = vmatprep.mubr.bf16.mxu0 0
        %3978 = vmatmul.mubr.bf16.gmra.mrb[0].mxu0 %v3839
        %v3979 = vpop.f32.mrb[0].mxu0
        %v3980 = vadd.f32 0.0, %v3979
        %v3981 = vpop.f32.mrb[0].mxu0
        %v3982 = vpop.f32.mrb[0].mxu0
        %v3983 = vadd.f32 0.0, %v3982
        %v3984 = vpop.f32.mrb[0].mxu0
        %3985 = vmatprep.mubr.bf16.mxu0 0
        %3986 = vmatmul.mubr.bf16.gmra.mrb[0].mxu0 %v3842
        %v3987 = vpop.f32.mrb[0].mxu0
        %v3988 = vadd.f32 0.0, %v3987
        %v3989 = vpop.f32.mrb[0].mxu0
        %v3990 = vpop.f32.mrb[0].mxu0
        %v3991 = vadd.f32 0.0, %v3990
        %v3992 = vpop.f32.mrb[0].mxu0
        %3993 = vmatprep.mubr.bf16.mxu0 0
        %3994 = vmatmul.mubr.bf16.gmra.mrb[0].mxu0 %v3845
        %v3995 = vpop.f32.mrb[0].mxu0
        %v3996 = vadd.f32 0.0, %v3995
        %v3997 = vpop.f32.mrb[0].mxu0
        %v3998 = vpop.f32.mrb[0].mxu0
        %v3999 = vadd.f32 0.0, %v3998
        %v4000 = vpop.f32.mrb[0].mxu0
        %4001 = vmatprep.mubr.bf16.mxu0 0
        %4002 = vmatmul.mubr.bf16.gmra.mrb[0].mxu0 %v3848
        %v4003 = vpop.f32.mrb[0].mxu0
        %v4004 = vadd.f32 0.0, %v4003
        %v4005 = vpop.f32.mrb[0].mxu0
        %v4006 = vpop.f32.mrb[0].mxu0
        %v4007 = vadd.f32 0.0, %v4006
        %v4008 = vpop.f32.mrb[0].mxu0
        %4009 = vmatprep.mubr.bf16.mxu0 0
        %4010 = vmatmul.mubr.bf16.gmra.mrb[0].mxu0 %v3851
        %v4011 = vpop.f32.mrb[0].mxu0
        %v4012 = vadd.f32 0.0, %v4011
        %v4013 = vpop.f32.mrb[0].mxu0
        %v4014 = vpop.f32.mrb[0].mxu0
        %v4015 = vadd.f32 0.0, %v4014
        %v4016 = vpop.f32.mrb[0].mxu0
        %4017 = vdwg.mxu0
        %s4018 = sld [smem:[#allocation4 + $0x2]]
        %v4019 = vstv %s4018
        %v4020 = vmul.f32 %v3892, %v4019
        %v4021 = vmul.f32 %v3895, %v4019
        %v4022 = vmul.f32 %v3900, %v4019
        %v4023 = vmul.f32 %v3903, %v4019
        %v4024 = vmul.f32 %v3908, %v4019
        %v4025 = vmul.f32 %v3911, %v4019
        %v4026 = vmul.f32 %v3916, %v4019
        %v4027 = vmul.f32 %v3919, %v4019
        %v4028 = vmul.f32 %v3924, %v4019
        %v4029 = vmul.f32 %v3927, %v4019
        %v4030 = vmul.f32 %v3932, %v4019
        %v4031 = vmul.f32 %v3935, %v4019
        %v4032 = vmul.f32 %v3940, %v4019
        %v4033 = vmul.f32 %v3943, %v4019
        %v4034 = vmul.f32 %v3948, %v4019
        %v4035 = vmul.f32 %v3951, %v4019
        %v4036 = vmul.f32 %v3956, %v4019
        %v4037 = vmul.f32 %v3959, %v4019
        %v4038 = vmul.f32 %v3964, %v4019
        %v4039 = vmul.f32 %v3967, %v4019
        %v4040 = vmul.f32 %v3972, %v4019
        %v4041 = vmul.f32 %v3975, %v4019
        %v4042 = vmul.f32 %v3980, %v4019
        %v4043 = vmul.f32 %v3983, %v4019
        %v4044 = vmul.f32 %v3988, %v4019
        %v4045 = vmul.f32 %v3991, %v4019
        %v4046 = vmul.f32 %v3996, %v4019
        %v4047 = vmul.f32 %v3999, %v4019
        %v4048 = vmul.f32 %v4004, %v4019
        %v4049 = vmul.f32 %v4007, %v4019
        %v4050 = vmul.f32 %v4012, %v4019
        %v4051 = vmul.f32 %v4015, %v4019
        %s4052 = sld [smem:[#allocation4 + $0x1]]
        %v4053 = vstv %s4052
        %v4054 = vadd.f32 %v4020, %v4053
        %v4055 = vadd.f32 %v4021, %v4053
        %v4056 = vadd.f32 %v4022, %v4053
        %v4057 = vadd.f32 %v4023, %v4053
        %v4058 = vadd.f32 %v4024, %v4053
        %v4059 = vadd.f32 %v4025, %v4053
        %v4060 = vadd.f32 %v4026, %v4053
        %v4061 = vadd.f32 %v4027, %v4053
        %v4062 = vadd.f32 %v4028, %v4053
        %v4063 = vadd.f32 %v4029, %v4053
        %v4064 = vadd.f32 %v4030, %v4053
        %v4065 = vadd.f32 %v4031, %v4053
        %v4066 = vadd.f32 %v4032, %v4053
        %v4067 = vadd.f32 %v4033, %v4053
        %v4068 = vadd.f32 %v4034, %v4053
        %v4069 = vadd.f32 %v4035, %v4053
        %v4070 = vadd.f32 %v4036, %v4053
        %v4071 = vadd.f32 %v4037, %v4053
        %v4072 = vadd.f32 %v4038, %v4053
        %v4073 = vadd.f32 %v4039, %v4053
        %v4074 = vadd.f32 %v4040, %v4053
        %v4075 = vadd.f32 %v4041, %v4053
        %v4076 = vadd.f32 %v4042, %v4053
        %v4077 = vadd.f32 %v4043, %v4053
        %v4078 = vadd.f32 %v4044, %v4053
        %v4079 = vadd.f32 %v4045, %v4053
        %v4080 = vadd.f32 %v4046, %v4053
        %v4081 = vadd.f32 %v4047, %v4053
        %v4082 = vadd.f32 %v4048, %v4053
        %v4083 = vadd.f32 %v4049, %v4053
        %v4084 = vadd.f32 %v4050, %v4053
        %v4085 = vadd.f32 %v4051, %v4053
        %v4086 = vround.ne.pseudo %v4054
        %v4087 = vround.ne.pseudo %v4055
        %v4088 = vround.ne.pseudo %v4056
        %v4089 = vround.ne.pseudo %v4057
        %v4090 = vround.ne.pseudo %v4058
        %v4091 = vround.ne.pseudo %v4059
        %v4092 = vround.ne.pseudo %v4060
        %v4093 = vround.ne.pseudo %v4061
        %v4094 = vround.ne.pseudo %v4062
        %v4095 = vround.ne.pseudo %v4063
        %v4096 = vround.ne.pseudo %v4064
        %v4097 = vround.ne.pseudo %v4065
        %v4098 = vround.ne.pseudo %v4066
        %v4099 = vround.ne.pseudo %v4067
        %v4100 = vround.ne.pseudo %v4068
        %v4101 = vround.ne.pseudo %v4069
        %v4102 = vround.ne.pseudo %v4070
        %v4103 = vround.ne.pseudo %v4071
        %v4104 = vround.ne.pseudo %v4072
        %v4105 = vround.ne.pseudo %v4073
        %v4106 = vround.ne.pseudo %v4074
        %v4107 = vround.ne.pseudo %v4075
        %v4108 = vround.ne.pseudo %v4076
        %v4109 = vround.ne.pseudo %v4077
        %v4110 = vround.ne.pseudo %v4078
        %v4111 = vround.ne.pseudo %v4079
        %v4112 = vround.ne.pseudo %v4080
        %v4113 = vround.ne.pseudo %v4081
        %v4114 = vround.ne.pseudo %v4082
        %v4115 = vround.ne.pseudo %v4083
        %v4116 = vround.ne.pseudo %v4084
        %v4117 = vround.ne.pseudo %v4085
        %v4118 = vmax.f32 %v4086, -128.0
        %v4119 = vmax.f32 %v4087, -128.0
        %v4120 = vmax.f32 %v4088, -128.0
        %v4121 = vmax.f32 %v4089, -128.0
        %v4122 = vmax.f32 %v4090, -128.0
        %v4123 = vmax.f32 %v4091, -128.0
        %v4124 = vmax.f32 %v4092, -128.0
        %v4125 = vmax.f32 %v4093, -128.0
        %v4126 = vmax.f32 %v4094, -128.0
        %v4127 = vmax.f32 %v4095, -128.0
        %v4128 = vmax.f32 %v4096, -128.0
        %v4129 = vmax.f32 %v4097, -128.0
        %v4130 = vmax.f32 %v4098, -128.0
        %v4131 = vmax.f32 %v4099, -128.0
        %v4132 = vmax.f32 %v4100, -128.0
        %v4133 = vmax.f32 %v4101, -128.0
        %v4134 = vmax.f32 %v4102, -128.0
        %v4135 = vmax.f32 %v4103, -128.0
        %v4136 = vmax.f32 %v4104, -128.0
        %v4137 = vmax.f32 %v4105, -128.0
        %v4138 = vmax.f32 %v4106, -128.0
        %v4139 = vmax.f32 %v4107, -128.0
        %v4140 = vmax.f32 %v4108, -128.0
        %v4141 = vmax.f32 %v4109, -128.0
        %v4142 = vmax.f32 %v4110, -128.0
        %v4143 = vmax.f32 %v4111, -128.0
        %v4144 = vmax.f32 %v4112, -128.0
        %v4145 = vmax.f32 %v4113, -128.0
        %v4146 = vmax.f32 %v4114, -128.0
        %v4147 = vmax.f32 %v4115, -128.0
        %v4148 = vmax.f32 %v4116, -128.0
        %v4149 = vmax.f32 %v4117, -128.0
        %v4150 = vmin.f32 %v4118, 127.0
        %v4151 = vmin.f32 %v4119, 127.0
        %v4152 = vmin.f32 %v4120, 127.0
        %v4153 = vmin.f32 %v4121, 127.0
        %v4154 = vmin.f32 %v4122, 127.0
        %v4155 = vmin.f32 %v4123, 127.0
        %v4156 = vmin.f32 %v4124, 127.0
        %v4157 = vmin.f32 %v4125, 127.0
        %v4158 = vmin.f32 %v4126, 127.0
        %v4159 = vmin.f32 %v4127, 127.0
        %v4160 = vmin.f32 %v4128, 127.0
        %v4161 = vmin.f32 %v4129, 127.0
        %v4162 = vmin.f32 %v4130, 127.0
        %v4163 = vmin.f32 %v4131, 127.0
        %v4164 = vmin.f32 %v4132, 127.0
        %v4165 = vmin.f32 %v4133, 127.0
        %v4166 = vmin.f32 %v4134, 127.0
        %v4167 = vmin.f32 %v4135, 127.0
        %v4168 = vmin.f32 %v4136, 127.0
        %v4169 = vmin.f32 %v4137, 127.0
        %v4170 = vmin.f32 %v4138, 127.0
        %v4171 = vmin.f32 %v4139, 127.0
        %v4172 = vmin.f32 %v4140, 127.0
        %v4173 = vmin.f32 %v4141, 127.0
        %v4174 = vmin.f32 %v4142, 127.0
        %v4175 = vmin.f32 %v4143, 127.0
        %v4176 = vmin.f32 %v4144, 127.0
        %v4177 = vmin.f32 %v4145, 127.0
        %v4178 = vmin.f32 %v4146, 127.0
        %v4179 = vmin.f32 %v4147, 127.0
        %v4180 = vmin.f32 %v4148, 127.0
        %v4181 = vmin.f32 %v4149, 127.0
        %v4182 = vtrunc.f32 %v4150
        %v4183 = vtrunc.f32 %v4151
        %v4184 = vtrunc.f32 %v4152
        %v4185 = vtrunc.f32 %v4153
        %v4186 = vtrunc.f32 %v4154
        %v4187 = vtrunc.f32 %v4155
        %v4188 = vtrunc.f32 %v4156
        %v4189 = vtrunc.f32 %v4157
        %v4190 = vtrunc.f32 %v4158
        %v4191 = vtrunc.f32 %v4159
        %v4192 = vtrunc.f32 %v4160
        %v4193 = vtrunc.f32 %v4161
        %v4194 = vtrunc.f32 %v4162
        %v4195 = vtrunc.f32 %v4163
        %v4196 = vtrunc.f32 %v4164
        %v4197 = vtrunc.f32 %v4165
        %v4198 = vtrunc.f32 %v4166
        %v4199 = vtrunc.f32 %v4167
        %v4200 = vtrunc.f32 %v4168
        %v4201 = vtrunc.f32 %v4169
        %v4202 = vtrunc.f32 %v4170
        %v4203 = vtrunc.f32 %v4171
        %v4204 = vtrunc.f32 %v4172
        %v4205 = vtrunc.f32 %v4173
        %v4206 = vtrunc.f32 %v4174
        %v4207 = vtrunc.f32 %v4175
        %v4208 = vtrunc.f32 %v4176
        %v4209 = vtrunc.f32 %v4177
        %v4210 = vtrunc.f32 %v4178
        %v4211 = vtrunc.f32 %v4179
        %v4212 = vtrunc.f32 %v4180
        %v4213 = vtrunc.f32 %v4181
        %v4214 = vpack.c.f32.eXmY %v4182, %v4183, 312
        %v4218 = vpack.c.f32.eXmY %v4184, %v4185, 312
        %v4222 = vpack.c.b8 %v4218, %v4214
        %v4224 = vpack.c.f32.eXmY %v4186, %v4187, 312
        %v4228 = vpack.c.f32.eXmY %v4188, %v4189, 312
        %v4232 = vpack.c.b8 %v4228, %v4224
        %v4234 = vpack.c.f32.eXmY %v4190, %v4191, 312
        %v4238 = vpack.c.f32.eXmY %v4192, %v4193, 312
        %v4242 = vpack.c.b8 %v4238, %v4234
        %v4244 = vpack.c.f32.eXmY %v4194, %v4195, 312
        %v4248 = vpack.c.f32.eXmY %v4196, %v4197, 312
        %v4252 = vpack.c.b8 %v4248, %v4244
        %v4254 = vpack.c.f32.eXmY %v4198, %v4199, 312
        %v4258 = vpack.c.f32.eXmY %v4200, %v4201, 312
        %v4262 = vpack.c.b8 %v4258, %v4254
        %v4264 = vpack.c.f32.eXmY %v4202, %v4203, 312
        %v4268 = vpack.c.f32.eXmY %v4204, %v4205, 312
        %v4272 = vpack.c.b8 %v4268, %v4264
        %v4274 = vpack.c.f32.eXmY %v4206, %v4207, 312
        %v4278 = vpack.c.f32.eXmY %v4208, %v4209, 312
        %v4282 = vpack.c.b8 %v4278, %v4274
        %v4284 = vpack.c.f32.eXmY %v4210, %v4211, 312
        %v4288 = vpack.c.f32.eXmY %v4212, %v4213, 312
        %v4292 = vpack.c.b8 %v4288, %v4284
        %v4294 = vunpack.c.0.s8 %v4222
        %v4295 = vunpack.c.1.s8 %v4222
        %v4296 = vunpack.c.2.s8 %v4222
        %v4297 = vunpack.c.3.s8 %v4222
        %v4298 = vunpack.c.0.s8 %v4232
        %v4299 = vunpack.c.1.s8 %v4232
        %v4300 = vunpack.c.2.s8 %v4232
        %v4301 = vunpack.c.3.s8 %v4232
        %v4302 = vunpack.c.0.s8 %v4242
        %v4303 = vunpack.c.1.s8 %v4242
        %v4304 = vunpack.c.2.s8 %v4242
        %v4305 = vunpack.c.3.s8 %v4242
        %v4306 = vunpack.c.0.s8 %v4252
        %v4307 = vunpack.c.1.s8 %v4252
        %v4308 = vunpack.c.2.s8 %v4252
        %v4309 = vunpack.c.3.s8 %v4252
        %v4310 = vunpack.c.0.s8 %v4262
        %v4311 = vunpack.c.1.s8 %v4262
        %v4312 = vunpack.c.2.s8 %v4262
        %v4313 = vunpack.c.3.s8 %v4262
        %v4314 = vunpack.c.0.s8 %v4272
        %v4315 = vunpack.c.1.s8 %v4272
        %v4316 = vunpack.c.2.s8 %v4272
        %v4317 = vunpack.c.3.s8 %v4272
        %v4318 = vunpack.c.0.s8 %v4282
        %v4319 = vunpack.c.1.s8 %v4282
        %v4320 = vunpack.c.2.s8 %v4282
        %v4321 = vunpack.c.3.s8 %v4282
        %v4322 = vunpack.c.0.s8 %v4292
        %v4323 = vunpack.c.1.s8 %v4292
        %v4324 = vunpack.c.2.s8 %v4292
        %v4325 = vunpack.c.3.s8 %v4292
        %v4326 = vpack.c.b16 %v4294, %v4294
        %v4327 = vpack.c.b8 %v4326, %v4326
        %v4328 = vpack.c.b16 %v4295, %v4295
        %v4329 = vpack.c.b8 %v4328, %v4328
        %v4330 = vpack.c.b16 %v4296, %v4296
        %v4331 = vpack.c.b8 %v4330, %v4330
        %v4332 = vpack.c.b16 %v4297, %v4297
        %v4333 = vpack.c.b8 %v4332, %v4332
        %v4334 = vpack.c.b16 %v4298, %v4298
        %v4335 = vpack.c.b8 %v4334, %v4334
        %v4336 = vpack.c.b16 %v4299, %v4299
        %v4337 = vpack.c.b8 %v4336, %v4336
        %v4338 = vpack.c.b16 %v4300, %v4300
        %v4339 = vpack.c.b8 %v4338, %v4338
        %v4340 = vpack.c.b16 %v4301, %v4301
        %v4341 = vpack.c.b8 %v4340, %v4340
        %v4342 = vpack.c.b16 %v4302, %v4302
        %v4343 = vpack.c.b8 %v4342, %v4342
        %v4344 = vpack.c.b16 %v4303, %v4303
        %v4345 = vpack.c.b8 %v4344, %v4344
        %v4346 = vpack.c.b16 %v4304, %v4304
        %v4347 = vpack.c.b8 %v4346, %v4346
        %v4348 = vpack.c.b16 %v4305, %v4305
        %v4349 = vpack.c.b8 %v4348, %v4348
        %v4350 = vpack.c.b16 %v4306, %v4306
        %v4351 = vpack.c.b8 %v4350, %v4350
        %v4352 = vpack.c.b16 %v4307, %v4307
        %v4353 = vpack.c.b8 %v4352, %v4352
        %v4354 = vpack.c.b16 %v4308, %v4308
        %v4355 = vpack.c.b8 %v4354, %v4354
        %v4356 = vpack.c.b16 %v4309, %v4309
        %v4357 = vpack.c.b8 %v4356, %v4356
        %v4358 = vpack.c.b16 %v4310, %v4310
        %v4359 = vpack.c.b8 %v4358, %v4358
        %v4360 = vpack.c.b16 %v4311, %v4311
        %v4361 = vpack.c.b8 %v4360, %v4360
        %v4362 = vpack.c.b16 %v4312, %v4312
        %v4363 = vpack.c.b8 %v4362, %v4362
        %v4364 = vpack.c.b16 %v4313, %v4313
        %v4365 = vpack.c.b8 %v4364, %v4364
        %v4366 = vpack.c.b16 %v4314, %v4314
        %v4367 = vpack.c.b8 %v4366, %v4366
        %v4368 = vpack.c.b16 %v4315, %v4315
        %v4369 = vpack.c.b8 %v4368, %v4368
        %v4370 = vpack.c.b16 %v4316, %v4316
        %v4371 = vpack.c.b8 %v4370, %v4370
        %v4372 = vpack.c.b16 %v4317, %v4317
        %v4373 = vpack.c.b8 %v4372, %v4372
        %v4374 = vpack.c.b16 %v4318, %v4318
        %v4375 = vpack.c.b8 %v4374, %v4374
        %v4376 = vpack.c.b16 %v4319, %v4319
        %v4377 = vpack.c.b8 %v4376, %v4376
        %v4378 = vpack.c.b16 %v4320, %v4320
        %v4379 = vpack.c.b8 %v4378, %v4378
        %v4380 = vpack.c.b16 %v4321, %v4321
        %v4381 = vpack.c.b8 %v4380, %v4380
        %v4382 = vpack.c.b16 %v4322, %v4322
        %v4383 = vpack.c.b8 %v4382, %v4382
        %v4384 = vpack.c.b16 %v4323, %v4323
        %v4385 = vpack.c.b8 %v4384, %v4384
        %v4386 = vpack.c.b16 %v4324, %v4324
        %v4387 = vpack.c.b8 %v4386, %v4386
        %v4388 = vpack.c.b16 %v4325, %v4325
        %v4389 = vpack.c.b8 %v4388, %v4388
        %4390 = vst [vmem:[%s204] sm:$0x3] %v4327
        %4391 = vst [vmem:[%s204 + $0x2] sm:$0x3] %v4329
        %4392 = vst [vmem:[%s204 + $0x4] sm:$0x3] %v4331
        %4393 = vst [vmem:[%s204 + $0x6] sm:$0x3] %v4333
        %4394 = vst [vmem:[%s204 + $0x8] sm:$0x3] %v4335
        %4395 = vst [vmem:[%s204 + $0xa] sm:$0x3] %v4337
        %4396 = vst [vmem:[%s204 + $0xc] sm:$0x3] %v4339
        %4397 = vst [vmem:[%s204 + $0xe] sm:$0x3] %v4341
        %4398 = vst [vmem:[%s204 + $0x10] sm:$0x3] %v4343
        %4399 = vst [vmem:[%s204 + $0x12] sm:$0x3] %v4345
        %4400 = vst [vmem:[%s204 + $0x14] sm:$0x3] %v4347
        %4401 = vst [vmem:[%s204 + $0x16] sm:$0x3] %v4349
        %4402 = vst [vmem:[%s204 + $0x18] sm:$0x3] %v4351
        %4403 = vst [vmem:[%s204 + $0x1a] sm:$0x3] %v4353
        %4404 = vst [vmem:[%s204 + $0x1c] sm:$0x3] %v4355
        %4405 = vst [vmem:[%s204 + $0x1e] sm:$0x3] %v4357
        %4406 = vst [vmem:[%s204 + $0x20] sm:$0x3] %v4359
        %4407 = vst [vmem:[%s204 + $0x22] sm:$0x3] %v4361
        %4408 = vst [vmem:[%s204 + $0x24] sm:$0x3] %v4363
        %4409 = vst [vmem:[%s204 + $0x26] sm:$0x3] %v4365
        %4410 = vst [vmem:[%s204 + $0x28] sm:$0x3] %v4367
        %4411 = vst [vmem:[%s204 + $0x2a] sm:$0x3] %v4369
        %4412 = vst [vmem:[%s204 + $0x2c] sm:$0x3] %v4371
        %4413 = vst [vmem:[%s204 + $0x2e] sm:$0x3] %v4373
        %4414 = vst [vmem:[%s204 + $0x30] sm:$0x3] %v4375
        %4415 = vst [vmem:[%s204 + $0x32] sm:$0x3] %v4377
        %4416 = vst [vmem:[%s204 + $0x34] sm:$0x3] %v4379
        %4417 = vst [vmem:[%s204 + $0x36] sm:$0x3] %v4381
        %4418 = vst [vmem:[%s204 + $0x38] sm:$0x3] %v4383
        %4419 = vst [vmem:[%s204 + $0x3a] sm:$0x3] %v4385
        %4420 = vst [vmem:[%s204 + $0x3c] sm:$0x3] %v4387
        %4421 = vst [vmem:[%s204 + $0x3e] sm:$0x3] %v4389
        %p4422 = scmp.lt.s32.totalorder %s19, 1
        %s4423 = scalar_select %p4422, %s19, 1
        %p4424 = scmp.lt.s32.totalorder %s20, 0
        %s4425 = scalar_select %p4424, %s20, 0
        %s4426 = smul.addr %s4423, 32
        %s4427 = sadd.s32 %s4425, %s4426
        %s4428 = smul.addr %s4427, 2
        %s4429 = scalar_lea.vmem %s3, %s4428
        // Predicated region
        $region41: #{qconv2d_forward.1} parent=31 // pred_check
          %p4430 = pneg %p115
        $region42: #{qconv2d_forward.1} parent=31 // pred_check_branch
          %4432 = sbr.rel (%p4430) target = $region44
        $region43: #{qconv2d_forward.1} parent=31 // pred_region
          _
        $region44: #{qconv2d_forward.1} parent=31 // pred_fallthru
          _
      $region32: #{qconv2d_forward.1} parent=5 // pred_fallthru
        _
      %p4433 = scmp.le.s32.totalorder 2, %s10
      // Predicated region
      $region45: #{qconv2d_forward.1} parent=5 // pred_check
        %p4434 = pneg %p4433
      $region46: #{qconv2d_forward.1} parent=5 // pred_check_branch
        %4436 = sbr.rel (%p4434) target = $region48
      $region47: #{qconv2d_forward.1} parent=5 // pred_region
        %s4437 = ssub.s32 %s10, 2
        // Predicated region
        $region49: #{qconv2d_forward.1} parent=47 // pred_check
          %p4438 = pneg %p121
        $region50: #{qconv2d_forward.1} parent=47 // pred_check_branch
          %4440 = sbr.rel (%p4438) target = $region52
        $region51: #{qconv2d_forward.1} parent=47 // pred_region
          %p4441 = scmp.lt.s32.totalorder %s21, 1
          %s4442 = scalar_select %p4441, %s21, 1
          %p4443 = scmp.lt.s32.totalorder %s22, 0
          %s4444 = scalar_select %p4443, %s22, 0
          %s4445 = smul.addr %s4442, 32
          %s4446 = sadd.s32 %s4444, %s4445
          %s4447 = smul.addr %s4446, 2
          %s4448 = scalar_lea.vmem %s3, %s4447
        $region52: #{qconv2d_forward.1} parent=47 // pred_fallthru
          _
      $region48: #{qconv2d_forward.1} parent=5 // pred_fallthru
        _
    $region6: #{qconv2d_forward.1} parent=1 // loop_footer
      %s14 = sadd.s32 1, %s10
    $region7: #{qconv2d_forward.1} parent=1 // loop_footer_branch
      %9 = sbr.rel target = $region3
    $region8: #{qconv2d_forward.1} parent=1 // loop_exit
      _
    %4449 = vsyncpa [#allocation5], 1
    %s4450 = scalar_lea.sflag [#allocation5], 1
    %4451 = vsyncpa %s4450, 1

</llo_original>
